<compile_context>
chip_gen: v6e
topology: v6e:2x2x1
jax: 0.10.0
libtpu: 0.0.40
codegen_flags: <defaults>
</compile_context>

<pallas_src>
import jax
import jax.numpy as jnp
from jax.experimental import pallas as pl
from jax.experimental.pallas import tpu as pltpu

C_IN = 51        # fixed by the module (state channels)
HID = 300        # conv_1 output channels
ALIVE_CH = 25    # `delta[:, 25:, :, :] *= 0.0`
THRESH = 0.1     # dead-cell threshold


# ----------------------------------------------------------------------------
# Fused kernel: conv_x/conv_y + conv_1 + ReLU + conv_2 + gating + residual
#               + 3x3 max-pool alive mask.  One grid step = one batch element.
# ----------------------------------------------------------------------------
def _automata_kernel(xp_ref, m_ref, wxy_ref, w1xy_ref, w1in_ref, w2_ref,
                     out_ref, pool_ref):
    _, Hp2, Wp2, Cp = xp_ref.shape          # (1, H+2, W+2, 64), static
    H, W = Hp2 - 2, Wp2 - 2
    Cxy = wxy_ref.shape[2]                  # 128 (= padded conv_x|conv_y outputs)
    HIDP = w1xy_ref.shape[1]                # 384 (padded hidden)
    HC = 128                                # lane-aligned hidden chunk

    xp = xp_ref[0]                          # (H+2, W+2, Cp) f32, halo-padded
    xpb = xp.astype(jnp.bfloat16)           # single cast reused by all 9 windows
    x_c = xp[1:1 + H, 1:1 + W, :]           # centre pixels, f32 (residual path)
    x_flat_b = xpb[1:1 + H, 1:1 + W, :].reshape(H * W, Cp)

    # --- conv_x & conv_y (3x3, pad=1) fused: 9 shifted bf16 matmuls, f32 acc.
    acc = jnp.zeros((H * W, Cxy), jnp.float32)
    for t in range(9):
        dy, dx = divmod(t, 3)
        win = xpb[dy:dy + H, dx:dx + W, :].reshape(H * W, Cp)
        acc = acc + jnp.dot(win, wxy_ref[t], preferred_element_type=jnp.float32)
    acc_b = acc.astype(jnp.bfloat16)        # cols [0,51)=conv_x, [64,115)=conv_y

    # --- conv_1 (1x1, 153->300) + ReLU + conv_2 (1x1, 300->51), chunked over
    #     the padded hidden dim so only one 128-wide hidden slab is live.
    #     (conv_2 columns >= 25 are pre-zeroed => delta[:, 25:] == 0.)
    c2 = jnp.zeros((H * W, Cp), jnp.float32)
    for k in range(HIDP // HC):
        lo = k * HC
        pre = (jnp.dot(acc_b, w1xy_ref[:, lo:lo + HC],
                       preferred_element_type=jnp.float32)
               + jnp.dot(x_flat_b, w1in_ref[:, lo:lo + HC],
                         preferred_element_type=jnp.float32))
        hid = jnp.maximum(pre, 0.0).astype(jnp.bfloat16)
        c2 = c2 + jnp.dot(hid, w2_ref[lo:lo + HC, :],
                          preferred_element_type=jnp.float32)

    # --- delta = conv_2(...) * mask * update_mask ; residual add.
    out3 = x_c + c2.reshape(H, W, Cp) * m_ref[0]     # (H, W, Cp)

    # --- dead-cell mask: 3x3 / stride-1 / pad-1 max-pool of channel 0 > 0.1.
    pool_ref[...] = jnp.full((Hp2, Wp2, 1), -jnp.inf, jnp.float32)
    pool_ref[1:1 + H, 1:1 + W, :] = out3[:, :, 0:1]
    pooled = pool_ref[0:H, 0:W, :]
    for t in range(1, 9):
        dy, dx = divmod(t, 3)
        pooled = jnp.maximum(pooled, pool_ref[dy:dy + H, dx:dx + W, :])
    alive = (pooled > THRESH).astype(jnp.float32)    # (H, W, 1)

    out_ref[0] = out3 * alive


# ----------------------------------------------------------------------------
# Weight preparation (trace-time layout glue; folds the channel-zeroing).
# ----------------------------------------------------------------------------
def _prep_weights(params, C, Cp, hid_pad, dtype=jnp.bfloat16):
    wx, wy = params["wx"], params["wy"]                     # (C, C, 3, 3) OIHW
    w1 = params["w1"].reshape(HID, 3 * C)                   # (300, 153)
    w2 = params["w2"].reshape(C, HID)                       # (51, 300)
    cxy = 2 * Cp

    def taps(w):                                            # OIHW -> (9, in, out)
        return jnp.transpose(w, (2, 3, 1, 0)).reshape(9, C, C)

    wxy = jnp.zeros((9, Cp, cxy), jnp.float32)
    wxy = wxy.at[:, :C, :C].set(taps(wx))                   # conv_x -> cols [0, C)
    wxy = wxy.at[:, :C, Cp:Cp + C].set(taps(wy))            # conv_y -> cols [Cp, Cp+C)

    # perception channel order in the module: [conv_x | conv_y | inp]
    w1xy = jnp.zeros((cxy, hid_pad), jnp.float32)
    w1xy = w1xy.at[:C, :HID].set(w1[:, 0:C].T)              # x part
    w1xy = w1xy.at[Cp:Cp + C, :HID].set(w1[:, C:2 * C].T)   # y part
    w1in = jnp.zeros((Cp, hid_pad), jnp.float32)
    w1in = w1in.at[:C, :HID].set(w1[:, 2 * C:3 * C].T)      # inp part

    # fold `delta[:, 25:, :, :] *= 0.0` into conv_2: keep only out-chan < 25.
    w2k = jnp.zeros((hid_pad, Cp), jnp.float32)
    w2k = w2k.at[:HID, :ALIVE_CH].set(w2[:ALIVE_CH, :].T)

    return (wxy.astype(dtype), w1xy.astype(dtype),
            w1in.astype(dtype), w2k.astype(dtype))


# ----------------------------------------------------------------------------
# Forward pass (mirrors DiffAutomata.forward).  inp: (B, 51, H, W) NCHW;
# mask / update_mask: (B, 1, H, W) (broadcast over channels, as in typical
# NCA usage of this module).
# ----------------------------------------------------------------------------
def automata_forward(params, inp, mask, update_mask):
    B, C, H, W = inp.shape
    Cp = 64                                     # padded channel width
    hid_pad = ((HID + 127) // 128) * 128        # 384
    cxy = 2 * Cp

    x = jnp.transpose(inp, (0, 2, 3, 1))                         # NCHW -> NHWC
    x = jnp.pad(x, ((0, 0), (1, 1), (1, 1), (0, Cp - C)))        # halo + chan pad
    m = jnp.transpose(mask * update_mask, (0, 2, 3, 1))          # (B, H, W, 1)
    wxy, w1xy, w1in, w2k = _prep_weights(params, C, Cp, hid_pad)

    out = pl.pallas_call(
        _automata_kernel,
        out_shape=jax.ShapeDtypeStruct((B, H, W, Cp), jnp.float32),
        grid=(B,),
        in_specs=[
            pl.BlockSpec((1, H + 2, W + 2, Cp), lambda b: (b, 0, 0, 0)),
            pl.BlockSpec((1, H, W, 1), lambda b: (b, 0, 0, 0)),
            pl.BlockSpec((9, Cp, cxy), lambda b: (0, 0, 0)),
            pl.BlockSpec((cxy, hid_pad), lambda b: (0, 0)),
            pl.BlockSpec((Cp, hid_pad), lambda b: (0, 0)),
            pl.BlockSpec((hid_pad, Cp), lambda b: (0, 0)),
        ],
        out_specs=pl.BlockSpec((1, H, W, Cp), lambda b: (b, 0, 0, 0)),
        scratch_shapes=[pltpu.VMEM((H + 2, W + 2, 1), jnp.float32)],
        compiler_params=pltpu.CompilerParams(
            dimension_semantics=("parallel",)),
    )(x, m, wxy, w1xy, w1in, w2k)

    return jnp.transpose(out, (0, 3, 1, 2))[:, :C]               # NCHW, drop pad


# ----------------------------------------------------------------------------
# Parameters.  NOTE: the reference module uses frozen "sobel" buffers (literal
# zeros in the spec) and zero-initialised conv_2; we use small random weights
# so the numerical check is non-trivial — forward semantics are identical for
# any weight values.
# ----------------------------------------------------------------------------
def init_params(key):
    ks = jax.random.split(key, 4)

    def u(k, shape, fan_in):
        b = fan_in ** -0.5
        return jax.random.uniform(k, shape, jnp.float32, -b, b)

    return {
        "wx": u(ks[0], (C_IN, C_IN, 3, 3), C_IN * 9),
        "wy": u(ks[1], (C_IN, C_IN, 3, 3), C_IN * 9),
        "w1": u(ks[2], (HID, 3 * C_IN, 1, 1), 3 * C_IN),
        "w2": u(ks[3], (C_IN, HID, 1, 1), HID),
    }


# ----------------------------------------------------------------------------
# Pure-JAX reference (matmul operands cast to bf16 to match kernel precision).
# ----------------------------------------------------------------------------
def ref_forward(params, inp, mask, update_mask):
    bf = lambda a: a.astype(jnp.bfloat16)

    def conv(x, w, pad):
        return jax.lax.conv_general_dilated(
            bf(x), bf(w), window_strides=(1, 1),
            padding=[(pad, pad), (pad, pad)],
            dimension_numbers=("NCHW", "OIHW", "NCHW"),
            preferred_element_type=jnp.float32)

    x = conv(inp, params["wx"], 1)
    y = conv(inp, params["wy"], 1)
    perception = jnp.concatenate([x, y, inp], axis=1)
    c1 = jnp.maximum(conv(perception, params["w1"], 0), 0.0)
    c2 = conv(c1, params["w2"], 0)
    delta = c2 * mask * update_mask
    delta = delta.at[:, ALIVE_CH:, :, :].set(0.0)
    out = inp + delta
    pooled = jax.lax.reduce_window(
        out[:, 0:1, :, :], -jnp.inf, jax.lax.max,
        (1, 1, 3, 3), (1, 1, 1, 1),
        [(0, 0), (0, 0), (1, 1), (1, 1)])
    return out * (pooled > THRESH).astype(out.dtype)


if __name__ == "__main__":
    key = jax.random.PRNGKey(0)
    k = jax.random.split(key, 4)

    B, H, W = 2, 16, 16
    inp = jax.random.normal(k[0], (B, C_IN, H, W), jnp.float32)
    mask = jax.random.uniform(k[1], (B, 1, H, W), jnp.float32)
    update_mask = (jax.random.uniform(k[2], (B, 1, H, W)) < 0.5).astype(jnp.float32)
    params = init_params(k[3])

    out = jax.jit(automata_forward)(params, inp, mask, update_mask)
    jax.block_until_ready(out)
    assert out.shape == (B, C_IN, H, W)

    ref = jax.jit(ref_forward)(params, inp, mask, update_mask)
    err = float(jnp.max(jnp.abs(out - ref)))
    assert jnp.allclose(out, ref, rtol=1e-2, atol=1e-2), f"max abs err = {err}"

    print("KERNEL_OK")
</pallas_src>

<mosaic_0001>
module attributes {stable_mosaic.version = 11 : i64} {
  func.func @_automata_kernel(%arg0: i32, %arg1: memref<1x18x18x64xf32, #tpu.memory_space<vmem>>, %arg2: memref<1x16x16x1xf32, #tpu.memory_space<vmem>>, %arg3: memref<9x64x128xbf16, #tpu.memory_space<vmem>>, %arg4: memref<128x384xbf16, #tpu.memory_space<vmem>>, %arg5: memref<64x384xbf16, #tpu.memory_space<vmem>>, %arg6: memref<384x64xbf16, #tpu.memory_space<vmem>>, %arg7: memref<1x16x16x64xf32, #tpu.memory_space<vmem>>, %arg8: memref<18x18x1xf32, #tpu.memory_space<vmem>>) attributes {dimension_semantics = [#tpu.dimension_semantics<parallel>], iteration_bounds = array<i64: 2>, scalar_prefetch = 0 : i64, scratch_operands = 1 : i64, tpu.core_type = #tpu.core_type<tc>, window_params = [{transform_indices = @transform_0, window_bounds = array<i64: 1, 18, 18, 64>}, {transform_indices = @transform_1, window_bounds = array<i64: 1, 16, 16, 1>}, {pipeline_mode = #tpu.pipeline_mode<synchronous>, transform_indices = @transform_2, window_bounds = array<i64: 9, 64, 128>}, {pipeline_mode = #tpu.pipeline_mode<synchronous>, transform_indices = @transform_3, window_bounds = array<i64: 128, 384>}, {pipeline_mode = #tpu.pipeline_mode<synchronous>, transform_indices = @transform_4, window_bounds = array<i64: 64, 384>}, {pipeline_mode = #tpu.pipeline_mode<synchronous>, transform_indices = @transform_5, window_bounds = array<i64: 384, 64>}, {transform_indices = @transform_6, window_bounds = array<i64: 1, 16, 16, 64>}]} {
    %c0 = arith.constant 0 : index
    %c0_0 = arith.constant 0 : index
    %c0_1 = arith.constant 0 : index
    %c0_2 = arith.constant 0 : index
    %0 = vector.load %arg1[%c0, %c0_0, %c0_1, %c0_2] : memref<1x18x18x64xf32, #tpu.memory_space<vmem>>, vector<1x18x18x64xf32>
    %1 = vector.shape_cast %0 : vector<1x18x18x64xf32> to vector<18x18x64xf32>
    %2 = arith.truncf %1 : vector<18x18x64xf32> to vector<18x18x64xbf16>
    %3 = vector.extract_strided_slice %1 {offsets = [1, 1, 0], sizes = [16, 16, 64], strides = [1, 1, 1]} : vector<18x18x64xf32> to vector<16x16x64xf32>
    %4 = vector.extract_strided_slice %2 {offsets = [1, 1, 0], sizes = [16, 16, 64], strides = [1, 1, 1]} : vector<18x18x64xbf16> to vector<16x16x64xbf16>
    %5 = vector.shape_cast %4 : vector<16x16x64xbf16> to vector<256x64xbf16>
    %cst = arith.constant 0.000000e+00 : f32
    %6 = vector.broadcast %cst : f32 to vector<256x128xf32>
    %7 = vector.extract_strided_slice %2 {offsets = [0, 0, 0], sizes = [16, 16, 64], strides = [1, 1, 1]} : vector<18x18x64xbf16> to vector<16x16x64xbf16>
    %8 = vector.shape_cast %7 : vector<16x16x64xbf16> to vector<256x64xbf16>
    %c0_3 = arith.constant 0 : index
    %c0_4 = arith.constant 0 : index
    %c0_5 = arith.constant 0 : index
    %9 = vector.load %arg3[%c0_3, %c0_4, %c0_5] : memref<9x64x128xbf16, #tpu.memory_space<vmem>>, vector<1x64x128xbf16>
    %10 = vector.shape_cast %9 : vector<1x64x128xbf16> to vector<64x128xbf16>
    %cst_6 = arith.constant dense<0.000000e+00> : vector<256x128xf32>
    %11 = tpu.matmul %8, %10, %cst_6 {dimension_numbers = #tpu.dot_dimension_numbers<[1], [0], [0], [1], [0, 0, 1, 1], [], []>} : vector<256x64xbf16>, vector<64x128xbf16>, vector<256x128xf32> -> vector<256x128xf32>
    %12 = arith.addf %6, %11 : vector<256x128xf32>
    %13 = vector.extract_strided_slice %2 {offsets = [0, 1, 0], sizes = [16, 16, 64], strides = [1, 1, 1]} : vector<18x18x64xbf16> to vector<16x16x64xbf16>
    %14 = vector.shape_cast %13 : vector<16x16x64xbf16> to vector<256x64xbf16>
    %c1 = arith.constant 1 : index
    %c0_7 = arith.constant 0 : index
    %c0_8 = arith.constant 0 : index
    %15 = vector.load %arg3[%c1, %c0_7, %c0_8] : memref<9x64x128xbf16, #tpu.memory_space<vmem>>, vector<1x64x128xbf16>
    %16 = vector.shape_cast %15 : vector<1x64x128xbf16> to vector<64x128xbf16>
    %cst_9 = arith.constant dense<0.000000e+00> : vector<256x128xf32>
    %17 = tpu.matmul %14, %16, %cst_9 {dimension_numbers = #tpu.dot_dimension_numbers<[1], [0], [0], [1], [0, 0, 1, 1], [], []>} : vector<256x64xbf16>, vector<64x128xbf16>, vector<256x128xf32> -> vector<256x128xf32>
    %18 = arith.addf %12, %17 : vector<256x128xf32>
    %19 = vector.extract_strided_slice %2 {offsets = [0, 2, 0], sizes = [16, 16, 64], strides = [1, 1, 1]} : vector<18x18x64xbf16> to vector<16x16x64xbf16>
    %20 = vector.shape_cast %19 : vector<16x16x64xbf16> to vector<256x64xbf16>
    %c2 = arith.constant 2 : index
    %c0_10 = arith.constant 0 : index
    %c0_11 = arith.constant 0 : index
    %21 = vector.load %arg3[%c2, %c0_10, %c0_11] : memref<9x64x128xbf16, #tpu.memory_space<vmem>>, vector<1x64x128xbf16>
    %22 = vector.shape_cast %21 : vector<1x64x128xbf16> to vector<64x128xbf16>
    %cst_12 = arith.constant dense<0.000000e+00> : vector<256x128xf32>
    %23 = tpu.matmul %20, %22, %cst_12 {dimension_numbers = #tpu.dot_dimension_numbers<[1], [0], [0], [1], [0, 0, 1, 1], [], []>} : vector<256x64xbf16>, vector<64x128xbf16>, vector<256x128xf32> -> vector<256x128xf32>
    %24 = arith.addf %18, %23 : vector<256x128xf32>
    %25 = vector.extract_strided_slice %2 {offsets = [1, 0, 0], sizes = [16, 16, 64], strides = [1, 1, 1]} : vector<18x18x64xbf16> to vector<16x16x64xbf16>
    %26 = vector.shape_cast %25 : vector<16x16x64xbf16> to vector<256x64xbf16>
    %c3 = arith.constant 3 : index
    %c0_13 = arith.constant 0 : index
    %c0_14 = arith.constant 0 : index
    %27 = vector.load %arg3[%c3, %c0_13, %c0_14] : memref<9x64x128xbf16, #tpu.memory_space<vmem>>, vector<1x64x128xbf16>
    %28 = vector.shape_cast %27 : vector<1x64x128xbf16> to vector<64x128xbf16>
    %cst_15 = arith.constant dense<0.000000e+00> : vector<256x128xf32>
    %29 = tpu.matmul %26, %28, %cst_15 {dimension_numbers = #tpu.dot_dimension_numbers<[1], [0], [0], [1], [0, 0, 1, 1], [], []>} : vector<256x64xbf16>, vector<64x128xbf16>, vector<256x128xf32> -> vector<256x128xf32>
    %30 = arith.addf %24, %29 : vector<256x128xf32>
    %31 = vector.extract_strided_slice %2 {offsets = [1, 1, 0], sizes = [16, 16, 64], strides = [1, 1, 1]} : vector<18x18x64xbf16> to vector<16x16x64xbf16>
    %32 = vector.shape_cast %31 : vector<16x16x64xbf16> to vector<256x64xbf16>
    %c4 = arith.constant 4 : index
    %c0_16 = arith.constant 0 : index
    %c0_17 = arith.constant 0 : index
    %33 = vector.load %arg3[%c4, %c0_16, %c0_17] : memref<9x64x128xbf16, #tpu.memory_space<vmem>>, vector<1x64x128xbf16>
    %34 = vector.shape_cast %33 : vector<1x64x128xbf16> to vector<64x128xbf16>
    %cst_18 = arith.constant dense<0.000000e+00> : vector<256x128xf32>
    %35 = tpu.matmul %32, %34, %cst_18 {dimension_numbers = #tpu.dot_dimension_numbers<[1], [0], [0], [1], [0, 0, 1, 1], [], []>} : vector<256x64xbf16>, vector<64x128xbf16>, vector<256x128xf32> -> vector<256x128xf32>
    %36 = arith.addf %30, %35 : vector<256x128xf32>
    %37 = vector.extract_strided_slice %2 {offsets = [1, 2, 0], sizes = [16, 16, 64], strides = [1, 1, 1]} : vector<18x18x64xbf16> to vector<16x16x64xbf16>
    %38 = vector.shape_cast %37 : vector<16x16x64xbf16> to vector<256x64xbf16>
    %c5 = arith.constant 5 : index
    %c0_19 = arith.constant 0 : index
    %c0_20 = arith.constant 0 : index
    %39 = vector.load %arg3[%c5, %c0_19, %c0_20] : memref<9x64x128xbf16, #tpu.memory_space<vmem>>, vector<1x64x128xbf16>
    %40 = vector.shape_cast %39 : vector<1x64x128xbf16> to vector<64x128xbf16>
    %cst_21 = arith.constant dense<0.000000e+00> : vector<256x128xf32>
    %41 = tpu.matmul %38, %40, %cst_21 {dimension_numbers = #tpu.dot_dimension_numbers<[1], [0], [0], [1], [0, 0, 1, 1], [], []>} : vector<256x64xbf16>, vector<64x128xbf16>, vector<256x128xf32> -> vector<256x128xf32>
    %42 = arith.addf %36, %41 : vector<256x128xf32>
    %43 = vector.extract_strided_slice %2 {offsets = [2, 0, 0], sizes = [16, 16, 64], strides = [1, 1, 1]} : vector<18x18x64xbf16> to vector<16x16x64xbf16>
    %44 = vector.shape_cast %43 : vector<16x16x64xbf16> to vector<256x64xbf16>
    %c6 = arith.constant 6 : index
    %c0_22 = arith.constant 0 : index
    %c0_23 = arith.constant 0 : index
    %45 = vector.load %arg3[%c6, %c0_22, %c0_23] : memref<9x64x128xbf16, #tpu.memory_space<vmem>>, vector<1x64x128xbf16>
    %46 = vector.shape_cast %45 : vector<1x64x128xbf16> to vector<64x128xbf16>
    %cst_24 = arith.constant dense<0.000000e+00> : vector<256x128xf32>
    %47 = tpu.matmul %44, %46, %cst_24 {dimension_numbers = #tpu.dot_dimension_numbers<[1], [0], [0], [1], [0, 0, 1, 1], [], []>} : vector<256x64xbf16>, vector<64x128xbf16>, vector<256x128xf32> -> vector<256x128xf32>
    %48 = arith.addf %42, %47 : vector<256x128xf32>
    %49 = vector.extract_strided_slice %2 {offsets = [2, 1, 0], sizes = [16, 16, 64], strides = [1, 1, 1]} : vector<18x18x64xbf16> to vector<16x16x64xbf16>
    %50 = vector.shape_cast %49 : vector<16x16x64xbf16> to vector<256x64xbf16>
    %c7 = arith.constant 7 : index
    %c0_25 = arith.constant 0 : index
    %c0_26 = arith.constant 0 : index
    %51 = vector.load %arg3[%c7, %c0_25, %c0_26] : memref<9x64x128xbf16, #tpu.memory_space<vmem>>, vector<1x64x128xbf16>
    %52 = vector.shape_cast %51 : vector<1x64x128xbf16> to vector<64x128xbf16>
    %cst_27 = arith.constant dense<0.000000e+00> : vector<256x128xf32>
    %53 = tpu.matmul %50, %52, %cst_27 {dimension_numbers = #tpu.dot_dimension_numbers<[1], [0], [0], [1], [0, 0, 1, 1], [], []>} : vector<256x64xbf16>, vector<64x128xbf16>, vector<256x128xf32> -> vector<256x128xf32>
    %54 = arith.addf %48, %53 : vector<256x128xf32>
    %55 = vector.extract_strided_slice %2 {offsets = [2, 2, 0], sizes = [16, 16, 64], strides = [1, 1, 1]} : vector<18x18x64xbf16> to vector<16x16x64xbf16>
    %56 = vector.shape_cast %55 : vector<16x16x64xbf16> to vector<256x64xbf16>
    %c8 = arith.constant 8 : index
    %c0_28 = arith.constant 0 : index
    %c0_29 = arith.constant 0 : index
    %57 = vector.load %arg3[%c8, %c0_28, %c0_29] : memref<9x64x128xbf16, #tpu.memory_space<vmem>>, vector<1x64x128xbf16>
    %58 = vector.shape_cast %57 : vector<1x64x128xbf16> to vector<64x128xbf16>
    %cst_30 = arith.constant dense<0.000000e+00> : vector<256x128xf32>
    %59 = tpu.matmul %56, %58, %cst_30 {dimension_numbers = #tpu.dot_dimension_numbers<[1], [0], [0], [1], [0, 0, 1, 1], [], []>} : vector<256x64xbf16>, vector<64x128xbf16>, vector<256x128xf32> -> vector<256x128xf32>
    %60 = arith.addf %54, %59 : vector<256x128xf32>
    %61 = arith.truncf %60 : vector<256x128xf32> to vector<256x128xbf16>
    %cst_31 = arith.constant 0.000000e+00 : f32
    %62 = vector.broadcast %cst_31 : f32 to vector<256x64xf32>
    %c0_32 = arith.constant 0 : index
    %c0_33 = arith.constant 0 : index
    %63 = vector.load %arg4[%c0_32, %c0_33] : memref<128x384xbf16, #tpu.memory_space<vmem>>, vector<128x128xbf16>
    %cst_34 = arith.constant dense<0.000000e+00> : vector<256x128xf32>
    %64 = tpu.matmul %61, %63, %cst_34 {dimension_numbers = #tpu.dot_dimension_numbers<[1], [0], [0], [1], [0, 0, 1, 1], [], []>} : vector<256x128xbf16>, vector<128x128xbf16>, vector<256x128xf32> -> vector<256x128xf32>
    %c0_35 = arith.constant 0 : index
    %c0_36 = arith.constant 0 : index
    %65 = vector.load %arg5[%c0_35, %c0_36] : memref<64x384xbf16, #tpu.memory_space<vmem>>, vector<64x128xbf16>
    %cst_37 = arith.constant dense<0.000000e+00> : vector<256x128xf32>
    %66 = tpu.matmul %5, %65, %cst_37 {dimension_numbers = #tpu.dot_dimension_numbers<[1], [0], [0], [1], [0, 0, 1, 1], [], []>} : vector<256x64xbf16>, vector<64x128xbf16>, vector<256x128xf32> -> vector<256x128xf32>
    %67 = arith.addf %64, %66 : vector<256x128xf32>
    %cst_38 = arith.constant 0.000000e+00 : f32
    %68 = vector.broadcast %cst_38 : f32 to vector<256x128xf32>
    %69 = arith.maximumf %67, %68 : vector<256x128xf32>
    %70 = arith.truncf %69 : vector<256x128xf32> to vector<256x128xbf16>
    %c0_39 = arith.constant 0 : index
    %c0_40 = arith.constant 0 : index
    %71 = vector.load %arg6[%c0_39, %c0_40] : memref<384x64xbf16, #tpu.memory_space<vmem>>, vector<128x64xbf16>
    %cst_41 = arith.constant dense<0.000000e+00> : vector<256x64xf32>
    %72 = tpu.matmul %70, %71, %cst_41 {dimension_numbers = #tpu.dot_dimension_numbers<[1], [0], [0], [1], [0, 0, 1, 1], [], []>} : vector<256x128xbf16>, vector<128x64xbf16>, vector<256x64xf32> -> vector<256x64xf32>
    %73 = arith.addf %62, %72 : vector<256x64xf32>
    %c0_42 = arith.constant 0 : index
    %c128 = arith.constant 128 : index
    %74 = vector.load %arg4[%c0_42, %c128] : memref<128x384xbf16, #tpu.memory_space<vmem>>, vector<128x128xbf16>
    %cst_43 = arith.constant dense<0.000000e+00> : vector<256x128xf32>
    %75 = tpu.matmul %61, %74, %cst_43 {dimension_numbers = #tpu.dot_dimension_numbers<[1], [0], [0], [1], [0, 0, 1, 1], [], []>} : vector<256x128xbf16>, vector<128x128xbf16>, vector<256x128xf32> -> vector<256x128xf32>
    %c0_44 = arith.constant 0 : index
    %c128_45 = arith.constant 128 : index
    %76 = vector.load %arg5[%c0_44, %c128_45] : memref<64x384xbf16, #tpu.memory_space<vmem>>, vector<64x128xbf16>
    %cst_46 = arith.constant dense<0.000000e+00> : vector<256x128xf32>
    %77 = tpu.matmul %5, %76, %cst_46 {dimension_numbers = #tpu.dot_dimension_numbers<[1], [0], [0], [1], [0, 0, 1, 1], [], []>} : vector<256x64xbf16>, vector<64x128xbf16>, vector<256x128xf32> -> vector<256x128xf32>
    %78 = arith.addf %75, %77 : vector<256x128xf32>
    %cst_47 = arith.constant 0.000000e+00 : f32
    %79 = vector.broadcast %cst_47 : f32 to vector<256x128xf32>
    %80 = arith.maximumf %78, %79 : vector<256x128xf32>
    %81 = arith.truncf %80 : vector<256x128xf32> to vector<256x128xbf16>
    %c128_48 = arith.constant 128 : index
    %c0_49 = arith.constant 0 : index
    %82 = vector.load %arg6[%c128_48, %c0_49] : memref<384x64xbf16, #tpu.memory_space<vmem>>, vector<128x64xbf16>
    %cst_50 = arith.constant dense<0.000000e+00> : vector<256x64xf32>
    %83 = tpu.matmul %81, %82, %cst_50 {dimension_numbers = #tpu.dot_dimension_numbers<[1], [0], [0], [1], [0, 0, 1, 1], [], []>} : vector<256x128xbf16>, vector<128x64xbf16>, vector<256x64xf32> -> vector<256x64xf32>
    %84 = arith.addf %73, %83 : vector<256x64xf32>
    %c0_51 = arith.constant 0 : index
    %c256 = arith.constant 256 : index
    %85 = vector.load %arg4[%c0_51, %c256] : memref<128x384xbf16, #tpu.memory_space<vmem>>, vector<128x128xbf16>
    %cst_52 = arith.constant dense<0.000000e+00> : vector<256x128xf32>
    %86 = tpu.matmul %61, %85, %cst_52 {dimension_numbers = #tpu.dot_dimension_numbers<[1], [0], [0], [1], [0, 0, 1, 1], [], []>} : vector<256x128xbf16>, vector<128x128xbf16>, vector<256x128xf32> -> vector<256x128xf32>
    %c0_53 = arith.constant 0 : index
    %c256_54 = arith.constant 256 : index
    %87 = vector.load %arg5[%c0_53, %c256_54] : memref<64x384xbf16, #tpu.memory_space<vmem>>, vector<64x128xbf16>
    %cst_55 = arith.constant dense<0.000000e+00> : vector<256x128xf32>
    %88 = tpu.matmul %5, %87, %cst_55 {dimension_numbers = #tpu.dot_dimension_numbers<[1], [0], [0], [1], [0, 0, 1, 1], [], []>} : vector<256x64xbf16>, vector<64x128xbf16>, vector<256x128xf32> -> vector<256x128xf32>
    %89 = arith.addf %86, %88 : vector<256x128xf32>
    %cst_56 = arith.constant 0.000000e+00 : f32
    %90 = vector.broadcast %cst_56 : f32 to vector<256x128xf32>
    %91 = arith.maximumf %89, %90 : vector<256x128xf32>
    %92 = arith.truncf %91 : vector<256x128xf32> to vector<256x128xbf16>
    %c256_57 = arith.constant 256 : index
    %c0_58 = arith.constant 0 : index
    %93 = vector.load %arg6[%c256_57, %c0_58] : memref<384x64xbf16, #tpu.memory_space<vmem>>, vector<128x64xbf16>
    %cst_59 = arith.constant dense<0.000000e+00> : vector<256x64xf32>
    %94 = tpu.matmul %92, %93, %cst_59 {dimension_numbers = #tpu.dot_dimension_numbers<[1], [0], [0], [1], [0, 0, 1, 1], [], []>} : vector<256x128xbf16>, vector<128x64xbf16>, vector<256x64xf32> -> vector<256x64xf32>
    %95 = arith.addf %84, %94 : vector<256x64xf32>
    %96 = vector.shape_cast %95 : vector<256x64xf32> to vector<16x16x64xf32>
    %c0_60 = arith.constant 0 : index
    %c0_61 = arith.constant 0 : index
    %c0_62 = arith.constant 0 : index
    %c0_63 = arith.constant 0 : index
    %97 = vector.load %arg2[%c0_60, %c0_61, %c0_62, %c0_63] : memref<1x16x16x1xf32, #tpu.memory_space<vmem>>, vector<1x16x16x1xf32>
    %98 = vector.shape_cast %97 : vector<1x16x16x1xf32> to vector<16x16x1xf32>
    %99 = vector.broadcast %98 : vector<16x16x1xf32> to vector<16x16x64xf32>
    %100 = arith.mulf %96, %99 : vector<16x16x64xf32>
    %101 = arith.addf %3, %100 : vector<16x16x64xf32>
    %cst_64 = arith.constant 0xFF800000 : f32
    %102 = vector.broadcast %cst_64 : f32 to vector<18x18x1xf32>
    %c0_65 = arith.constant 0 : index
    %c0_66 = arith.constant 0 : index
    %c0_67 = arith.constant 0 : index
    %103 = vector.load %arg8[%c0_65, %c0_66, %c0_67] : memref<18x18x1xf32, #tpu.memory_space<vmem>>, vector<18x18x1xf32>
    tpu.vector_store %arg8[%c0_65, %c0_66, %c0_67], %102 {strides = array<i32>} : memref<18x18x1xf32, #tpu.memory_space<vmem>>, vector<18x18x1xf32>,
    %104 = vector.extract_strided_slice %101 {offsets = [0, 0, 0], sizes = [16, 16, 1], strides = [1, 1, 1]} : vector<16x16x64xf32> to vector<16x16x1xf32>
    %c1_68 = arith.constant 1 : index
    %c1_69 = arith.constant 1 : index
    %c0_70 = arith.constant 0 : index
    %105 = vector.load %arg8[%c1_68, %c1_69, %c0_70] : memref<18x18x1xf32, #tpu.memory_space<vmem>>, vector<16x16x1xf32>
    tpu.vector_store %arg8[%c1_68, %c1_69, %c0_70], %104 {strides = array<i32>} : memref<18x18x1xf32, #tpu.memory_space<vmem>>, vector<16x16x1xf32>,
    %c0_71 = arith.constant 0 : index
    %c0_72 = arith.constant 0 : index
    %c0_73 = arith.constant 0 : index
    %106 = vector.load %arg8[%c0_71, %c0_72, %c0_73] : memref<18x18x1xf32, #tpu.memory_space<vmem>>, vector<16x16x1xf32>
    %c0_74 = arith.constant 0 : index
    %c1_75 = arith.constant 1 : index
    %c0_76 = arith.constant 0 : index
    %107 = vector.load %arg8[%c0_74, %c1_75, %c0_76] : memref<18x18x1xf32, #tpu.memory_space<vmem>>, vector<16x16x1xf32>
    %108 = arith.maximumf %106, %107 : vector<16x16x1xf32>
    %c0_77 = arith.constant 0 : index
    %c2_78 = arith.constant 2 : index
    %c0_79 = arith.constant 0 : index
    %109 = vector.load %arg8[%c0_77, %c2_78, %c0_79] : memref<18x18x1xf32, #tpu.memory_space<vmem>>, vector<16x16x1xf32>
    %110 = arith.maximumf %108, %109 : vector<16x16x1xf32>
    %c1_80 = arith.constant 1 : index
    %c0_81 = arith.constant 0 : index
    %c0_82 = arith.constant 0 : index
    %111 = vector.load %arg8[%c1_80, %c0_81, %c0_82] : memref<18x18x1xf32, #tpu.memory_space<vmem>>, vector<16x16x1xf32>
    %112 = arith.maximumf %110, %111 : vector<16x16x1xf32>
    %c1_83 = arith.constant 1 : index
    %c1_84 = arith.constant 1 : index
    %c0_85 = arith.constant 0 : index
    %113 = vector.load %arg8[%c1_83, %c1_84, %c0_85] : memref<18x18x1xf32, #tpu.memory_space<vmem>>, vector<16x16x1xf32>
    %114 = arith.maximumf %112, %113 : vector<16x16x1xf32>
    %c1_86 = arith.constant 1 : index
    %c2_87 = arith.constant 2 : index
    %c0_88 = arith.constant 0 : index
    %115 = vector.load %arg8[%c1_86, %c2_87, %c0_88] : memref<18x18x1xf32, #tpu.memory_space<vmem>>, vector<16x16x1xf32>
    %116 = arith.maximumf %114, %115 : vector<16x16x1xf32>
    %c2_89 = arith.constant 2 : index
    %c0_90 = arith.constant 0 : index
    %c0_91 = arith.constant 0 : index
    %117 = vector.load %arg8[%c2_89, %c0_90, %c0_91] : memref<18x18x1xf32, #tpu.memory_space<vmem>>, vector<16x16x1xf32>
    %118 = arith.maximumf %116, %117 : vector<16x16x1xf32>
    %c2_92 = arith.constant 2 : index
    %c1_93 = arith.constant 1 : index
    %c0_94 = arith.constant 0 : index
    %119 = vector.load %arg8[%c2_92, %c1_93, %c0_94] : memref<18x18x1xf32, #tpu.memory_space<vmem>>, vector<16x16x1xf32>
    %120 = arith.maximumf %118, %119 : vector<16x16x1xf32>
    %c2_95 = arith.constant 2 : index
    %c2_96 = arith.constant 2 : index
    %c0_97 = arith.constant 0 : index
    %121 = vector.load %arg8[%c2_95, %c2_96, %c0_97] : memref<18x18x1xf32, #tpu.memory_space<vmem>>, vector<16x16x1xf32>
    %122 = arith.maximumf %120, %121 : vector<16x16x1xf32>
    %cst_98 = arith.constant 1.000000e-01 : f32
    %123 = vector.broadcast %cst_98 : f32 to vector<16x16x1xf32>
    %124 = arith.cmpf ogt, %122, %123 : vector<16x16x1xf32>
    %125 = arith.extui %124 : vector<16x16x1xi1> to vector<16x16x1xi32>
    %126 = arith.sitofp %125 : vector<16x16x1xi32> to vector<16x16x1xf32>
    %127 = vector.broadcast %126 : vector<16x16x1xf32> to vector<16x16x64xf32>
    %128 = arith.mulf %101, %127 : vector<16x16x64xf32>
    %c0_99 = arith.constant 0 : index
    %c0_100 = arith.constant 0 : index
    %c0_101 = arith.constant 0 : index
    %c0_102 = arith.constant 0 : index
    %129 = vector.load %arg7[%c0_99, %c0_100, %c0_101, %c0_102] : memref<1x16x16x64xf32, #tpu.memory_space<vmem>>, vector<1x16x16x64xf32>
    %130 = vector.shape_cast %129 : vector<1x16x16x64xf32> to vector<16x16x64xf32>
    %131 = vector.shape_cast %128 : vector<16x16x64xf32> to vector<1x16x16x64xf32>
    tpu.vector_store %arg7[%c0_99, %c0_100, %c0_101, %c0_102], %131 {strides = array<i32>} : memref<1x16x16x64xf32, #tpu.memory_space<vmem>>, vector<1x16x16x64xf32>,
    return
  }
  func.func @transform_0(%arg0: i32) -> (i32, i32, i32, i32) {
    %c0_i32 = arith.constant 0 : i32
    %c0_i32_0 = arith.constant 0 : i32
    %c0_i32_1 = arith.constant 0 : i32
    %c0_i32_2 = arith.constant 0 : i32
    return %arg0, %c0_i32, %c0_i32_0, %c0_i32_1 : i32, i32, i32, i32
  }
  func.func @transform_1(%arg0: i32) -> (i32, i32, i32, i32) {
    %c0_i32 = arith.constant 0 : i32
    %c0_i32_0 = arith.constant 0 : i32
    %c0_i32_1 = arith.constant 0 : i32
    %c0_i32_2 = arith.constant 0 : i32
    return %arg0, %c0_i32, %c0_i32_0, %c0_i32_1 : i32, i32, i32, i32
  }
  func.func @transform_2(%arg0: i32) -> (i32, i32, i32) {
    %c0_i32 = arith.constant 0 : i32
    %c0_i32_0 = arith.constant 0 : i32
    %c0_i32_1 = arith.constant 0 : i32
    %c0_i32_2 = arith.constant 0 : i32
    return %c0_i32, %c0_i32_0, %c0_i32_1 : i32, i32, i32
  }
  func.func @transform_3(%arg0: i32) -> (i32, i32) {
    %c0_i32 = arith.constant 0 : i32
    %c0_i32_0 = arith.constant 0 : i32
    %c0_i32_1 = arith.constant 0 : i32
    return %c0_i32, %c0_i32_0 : i32, i32
  }
  func.func @transform_4(%arg0: i32) -> (i32, i32) {
    %c0_i32 = arith.constant 0 : i32
    %c0_i32_0 = arith.constant 0 : i32
    %c0_i32_1 = arith.constant 0 : i32
    return %c0_i32, %c0_i32_0 : i32, i32
  }
  func.func @transform_5(%arg0: i32) -> (i32, i32) {
    %c0_i32 = arith.constant 0 : i32
    %c0_i32_0 = arith.constant 0 : i32
    %c0_i32_1 = arith.constant 0 : i32
    return %c0_i32, %c0_i32_0 : i32, i32
  }
  func.func @transform_6(%arg0: i32) -> (i32, i32, i32, i32) {
    %c0_i32 = arith.constant 0 : i32
    %c0_i32_0 = arith.constant 0 : i32
    %c0_i32_1 = arith.constant 0 : i32
    %c0_i32_2 = arith.constant 0 : i32
    return %arg0, %c0_i32, %c0_i32_0, %c0_i32_1 : i32, i32, i32, i32
  }
}

</mosaic_0001>

<llo_original>
// kernel: automata_forward.1
$region0: #{automata_forward.1}
  #allocation0 [shape = 'u32[]', space=smem, size = 0x4, offset = 0x4, fixed_abs, tag = 'smem constant byte address 0x4 - core index']
  #allocation1 [shape = 'u32[144,128]{1,0:T(1,128)}', space=vmem, size = 0x12000, scoped, tag = 'internal scratch']
  #allocation2 [shape = 'f32[18,18,1]{2,1,0:T(8,128)}', space=vmem, size = 0x36000, scoped, tag = 'scratch operand']
  %s0 = inlined_call_operand.vmem [shape: f32[2,18,18,64], index: 0, kind: input, shape index: {}]
  %s1 = inlined_call_operand.vmem [shape: f32[2,16,16,1], index: 1, kind: input, shape index: {}]
  %s2 = inlined_call_operand.vmem [shape: bf16[9,64,128], index: 2, kind: input, shape index: {}]
  %s3 = inlined_call_operand.vmem [shape: bf16[128,384], index: 3, kind: input, shape index: {}]
  %s4 = inlined_call_operand.vmem [shape: bf16[64,384], index: 4, kind: input, shape index: {}]
  %s5 = inlined_call_operand.vmem [shape: bf16[384,64], index: 5, kind: input, shape index: {}]
  %s6 = inlined_call_operand.hbm [shape: f32[2,16,16,64], index: 6, kind: output, shape index: {}]
  %s7 = sld [smem:[#allocation0]]
  $region57: #{automata_forward.1} parent=0
    _
  %s9 = ssub.s32 1, %s7
  %s10 = scalar_select 0, %s9, %s7
  $region1: #{automata_forward.1} parent=0
    #allocation3 [shape = 'u8[262144]{0}', space=vmem, size = 0x40000, scoped, tag = 'output window, operand 0']
    #allocation4 [shape = 's32[2]{0}', space=sflag, size = 0x8, scoped, tag = 'scoped memory for automata_forward.1']
    %11 = vsyncpa [#allocation4], 0
    %s12 = scalar_lea.sflag [#allocation4], 1
    %13 = vsyncpa %s12, 0
    loop: start=0, step=1, limit=4
    $region2: #{automata_forward.1} parent=1 // loop_pre_header
      _
    $region3: #{automata_forward.1} parent=1 // loop_header
      %s15 = sphi 0, %s19
      %p16 = scmp.ge.s32.totalorder %s15, 4
      %s25 = sphi 0, %s27
      %s28 = sphi 0, %s25
      %s29 = sphi 0, %s28
      %s45 = sphi 0, %s29
      %s51 = sphi 0, %s53
      %s54 = sphi 0, %s51
      %s55 = sphi 0, %s54
      %s71 = sphi 0, %s55
      %s75 = sphi 0, %s75
      %s77 = sphi 0, %s75
      %s78 = sphi 0, %s77
      %s92 = sphi 0, %s78
      %s96 = sphi 0, %s96
      %s98 = sphi 0, %s96
      %s99 = sphi 0, %s98
      %s113 = sphi 0, %s99
      %s117 = sphi 0, %s117
      %s119 = sphi 0, %s117
      %s120 = sphi 0, %s119
      %s134 = sphi 0, %s120
      %s138 = sphi 0, %s138
      %s140 = sphi 0, %s138
      %s141 = sphi 0, %s140
      %s155 = sphi 0, %s141
      %s161 = sphi 0, %s163
      %s164 = sphi 0, %s161
      %s165 = sphi 0, %s164
      %s181 = sphi 0, %s165
    $region4: #{automata_forward.1} parent=1 // loop_header_branch
      %18 = sbr.rel (%p16) target = $region8
    $region5: #{automata_forward.1} parent=1 // loop_body
      %s20 = ssub.s32 %s15, 1
      %s21 = ssub.s32 %s15, 2
      %s22 = sadd.s32 %s15, 1
      %s23 = ssub.s32 %s15, %s22
      %p24 = scmp.eq.s32.totalorder %s23, 0
      %s26 = sadd.s32 %s25, 1
      %s27 = scalar_select %p24, %s25, %s26
      %p30 = pneg %p24
      %p31 = scmp.eq.s32.totalorder %s15, 1
      %p32 = por %p30, %p31
      %p33 = scmp.ne.s32.totalorder %s25, %s28
      %p34 = scmp.eq.s32.totalorder %s15, 0
      %p35 = por %p33, %p34
      %p36 = scmp.ne.s32.totalorder %s25, %s28
      %p37 = scmp.eq.s32.totalorder %s20, 1
      %p38 = por %p36, %p37
      %p39 = scmp.ne.s32.totalorder %s28, %s29
      %p40 = scmp.eq.s32.totalorder %s20, 0
      %p41 = por %p39, %p40
      %p42 = scmp.ne.s32.totalorder %s28, %s29
      %p43 = scmp.eq.s32.totalorder %s21, 1
      %p44 = por %p42, %p43
      %p46 = scmp.ne.s32.totalorder %s29, %s45
      %p47 = scmp.eq.s32.totalorder %s21, 0
      %p48 = por %p46, %p47
      %s49 = ssub.s32 %s15, %s22
      %p50 = scmp.eq.s32.totalorder %s49, 0
      %s52 = sadd.s32 %s51, 1
      %s53 = scalar_select %p50, %s51, %s52
      %p56 = pneg %p50
      %p57 = scmp.eq.s32.totalorder %s15, 1
      %p58 = por %p56, %p57
      %p59 = scmp.ne.s32.totalorder %s51, %s54
      %p60 = scmp.eq.s32.totalorder %s15, 0
      %p61 = por %p59, %p60
      %p62 = scmp.ne.s32.totalorder %s51, %s54
      %p63 = scmp.eq.s32.totalorder %s20, 1
      %p64 = por %p62, %p63
      %p65 = scmp.ne.s32.totalorder %s54, %s55
      %p66 = scmp.eq.s32.totalorder %s20, 0
      %p67 = por %p65, %p66
      %p68 = scmp.ne.s32.totalorder %s54, %s55
      %p69 = scmp.eq.s32.totalorder %s21, 1
      %p70 = por %p68, %p69
      %p72 = scmp.ne.s32.totalorder %s55, %s71
      %p73 = scmp.eq.s32.totalorder %s21, 0
      %p74 = por %p72, %p73
      %s76 = sadd.s32 %s75, 1
      %p79 = scmp.eq.s32.totalorder %s15, 1
      %p80 = scmp.ne.s32.totalorder %s75, %s77
      %p81 = scmp.eq.s32.totalorder %s15, 0
      %p82 = por %p80, %p81
      %p83 = scmp.ne.s32.totalorder %s75, %s77
      %p84 = scmp.eq.s32.totalorder %s20, 1
      %p85 = por %p83, %p84
      %p86 = scmp.ne.s32.totalorder %s77, %s78
      %p87 = scmp.eq.s32.totalorder %s20, 0
      %p88 = por %p86, %p87
      %p89 = scmp.ne.s32.totalorder %s77, %s78
      %p90 = scmp.eq.s32.totalorder %s21, 1
      %p91 = por %p89, %p90
      %p93 = scmp.ne.s32.totalorder %s78, %s92
      %p94 = scmp.eq.s32.totalorder %s21, 0
      %p95 = por %p93, %p94
      %s97 = sadd.s32 %s96, 1
      %p100 = scmp.eq.s32.totalorder %s15, 1
      %p101 = scmp.ne.s32.totalorder %s96, %s98
      %p102 = scmp.eq.s32.totalorder %s15, 0
      %p103 = por %p101, %p102
      %p104 = scmp.ne.s32.totalorder %s96, %s98
      %p105 = scmp.eq.s32.totalorder %s20, 1
      %p106 = por %p104, %p105
      %p107 = scmp.ne.s32.totalorder %s98, %s99
      %p108 = scmp.eq.s32.totalorder %s20, 0
      %p109 = por %p107, %p108
      %p110 = scmp.ne.s32.totalorder %s98, %s99
      %p111 = scmp.eq.s32.totalorder %s21, 1
      %p112 = por %p110, %p111
      %p114 = scmp.ne.s32.totalorder %s99, %s113
      %p115 = scmp.eq.s32.totalorder %s21, 0
      %p116 = por %p114, %p115
      %s118 = sadd.s32 %s117, 1
      %p121 = scmp.eq.s32.totalorder %s15, 1
      %p122 = scmp.ne.s32.totalorder %s117, %s119
      %p123 = scmp.eq.s32.totalorder %s15, 0
      %p124 = por %p122, %p123
      %p125 = scmp.ne.s32.totalorder %s117, %s119
      %p126 = scmp.eq.s32.totalorder %s20, 1
      %p127 = por %p125, %p126
      %p128 = scmp.ne.s32.totalorder %s119, %s120
      %p129 = scmp.eq.s32.totalorder %s20, 0
      %p130 = por %p128, %p129
      %p131 = scmp.ne.s32.totalorder %s119, %s120
      %p132 = scmp.eq.s32.totalorder %s21, 1
      %p133 = por %p131, %p132
      %p135 = scmp.ne.s32.totalorder %s120, %s134
      %p136 = scmp.eq.s32.totalorder %s21, 0
      %p137 = por %p135, %p136
      %s139 = sadd.s32 %s138, 1
      %p142 = scmp.eq.s32.totalorder %s15, 1
      %p143 = scmp.ne.s32.totalorder %s138, %s140
      %p144 = scmp.eq.s32.totalorder %s15, 0
      %p145 = por %p143, %p144
      %p146 = scmp.ne.s32.totalorder %s138, %s140
      %p147 = scmp.eq.s32.totalorder %s20, 1
      %p148 = por %p146, %p147
      %p149 = scmp.ne.s32.totalorder %s140, %s141
      %p150 = scmp.eq.s32.totalorder %s20, 0
      %p151 = por %p149, %p150
      %p152 = scmp.ne.s32.totalorder %s140, %s141
      %p153 = scmp.eq.s32.totalorder %s21, 1
      %p154 = por %p152, %p153
      %p156 = scmp.ne.s32.totalorder %s141, %s155
      %p157 = scmp.eq.s32.totalorder %s21, 0
      %p158 = por %p156, %p157
      %s159 = ssub.s32 %s15, %s22
      %p160 = scmp.eq.s32.totalorder %s159, 0
      %s162 = sadd.s32 %s161, 1
      %s163 = scalar_select %p160, %s161, %s162
      %p166 = pneg %p160
      %p167 = scmp.eq.s32.totalorder %s15, 1
      %p168 = por %p166, %p167
      %p169 = scmp.ne.s32.totalorder %s161, %s164
      %p170 = scmp.eq.s32.totalorder %s15, 0
      %p171 = por %p169, %p170
      %p172 = scmp.ne.s32.totalorder %s161, %s164
      %p173 = scmp.eq.s32.totalorder %s20, 1
      %p174 = por %p172, %p173
      %p175 = scmp.ne.s32.totalorder %s164, %s165
      %p176 = scmp.eq.s32.totalorder %s20, 0
      %p177 = por %p175, %p176
      %p178 = scmp.ne.s32.totalorder %s164, %s165
      %p179 = scmp.eq.s32.totalorder %s21, 1
      %p180 = por %p178, %p179
      %p182 = scmp.ne.s32.totalorder %s165, %s181
      %p183 = scmp.eq.s32.totalorder %s21, 0
      %p184 = por %p182, %p183
      %p185 = scmp.le.s32.totalorder 1, %s15
      %p186 = scmp.lt.s32.totalorder %s15, 3
      %p187 = pnand %p185, %p186
      %p188 = pneg %p187
      // Predicated region
      $region9: #{automata_forward.1} parent=5 // pred_check
        _
      $region10: #{automata_forward.1} parent=5 // pred_check_branch
        %190 = sbr.rel (%p187) target = $region12
      $region11: #{automata_forward.1} parent=5 // pred_region
        %s191 = ssub.s32 %s15, 1
        // Predicated region
        $region13: #{automata_forward.1} parent=11 // pred_check
          %p192 = pneg %p88
        $region14: #{automata_forward.1} parent=11 // pred_check_branch
          %194 = sbr.rel (%p192) target = $region16
        $region15: #{automata_forward.1} parent=11 // pred_region
          _
        $region16: #{automata_forward.1} parent=11 // pred_fallthru
          _
        // Predicated region
        $region17: #{automata_forward.1} parent=11 // pred_check
          %p195 = pneg %p109
        $region18: #{automata_forward.1} parent=11 // pred_check_branch
          %197 = sbr.rel (%p195) target = $region20
        $region19: #{automata_forward.1} parent=11 // pred_region
          _
        $region20: #{automata_forward.1} parent=11 // pred_fallthru
          _
        // Predicated region
        $region21: #{automata_forward.1} parent=11 // pred_check
          %p198 = pneg %p130
        $region22: #{automata_forward.1} parent=11 // pred_check_branch
          %200 = sbr.rel (%p198) target = $region24
        $region23: #{automata_forward.1} parent=11 // pred_region
          _
        $region24: #{automata_forward.1} parent=11 // pred_fallthru
          _
        // Predicated region
        $region25: #{automata_forward.1} parent=11 // pred_check
          %p201 = pneg %p151
        $region26: #{automata_forward.1} parent=11 // pred_check_branch
          %203 = sbr.rel (%p201) target = $region28
        $region27: #{automata_forward.1} parent=11 // pred_region
          _
        $region28: #{automata_forward.1} parent=11 // pred_fallthru
          _
      $region12: #{automata_forward.1} parent=5 // pred_fallthru
        _
      %p204 = scmp.lt.s32.totalorder %s15, 2
      // Predicated region
      $region29: #{automata_forward.1} parent=5 // pred_check
        %p205 = pneg %p204
      $region30: #{automata_forward.1} parent=5 // pred_check_branch
        %207 = sbr.rel (%p205) target = $region32
      $region31: #{automata_forward.1} parent=5 // pred_region
        // Predicated region
        $region33: #{automata_forward.1} parent=31 // pred_check
          %p208 = pneg %p35
        $region34: #{automata_forward.1} parent=31 // pred_check_branch
          %210 = sbr.rel (%p208) target = $region36
        $region35: #{automata_forward.1} parent=31 // pred_region
          %p211 = scmp.lt.s32.totalorder %s15, 1
          %s212 = scalar_select %p211, %s15, 1
          %s213 = smul.addr %s212, 54
          %s214 = smul.addr %s213, 8
          %s215 = scalar_lea.vmem %s0, %s214
        $region36: #{automata_forward.1} parent=31 // pred_fallthru
          _
        // Predicated region
        $region37: #{automata_forward.1} parent=31 // pred_check
          %p216 = pneg %p61
        $region38: #{automata_forward.1} parent=31 // pred_check_branch
          %218 = sbr.rel (%p216) target = $region40
        $region39: #{automata_forward.1} parent=31 // pred_region
          %p219 = scmp.lt.s32.totalorder %s15, 1
          %s220 = scalar_select %p219, %s15, 1
          %s221 = smul.addr %s220, 32
          %s222 = smul.addr %s221, 8
          %s223 = scalar_lea.vmem %s1, %s222
        $region40: #{automata_forward.1} parent=31 // pred_fallthru
          _
      $region32: #{automata_forward.1} parent=5 // pred_fallthru
        _
      %p224 = scmp.le.s32.totalorder 1, %s15
      %p225 = scmp.lt.s32.totalorder %s15, 3
      %p226 = pnand %p224, %p225
      %p227 = pneg %p226
      // Predicated region
      $region41: #{automata_forward.1} parent=5 // pred_check
        _
      $region42: #{automata_forward.1} parent=5 // pred_check_branch
        %229 = sbr.rel (%p226) target = $region44
      $region43: #{automata_forward.1} parent=5 // pred_region
        %s230 = ssub.s32 %s15, 1
        %p231 = scmp.lt.s32.totalorder %s20, 1
        %s232 = scalar_select %p231, %s20, 1
        %s233 = smul.addr %s232, 54
        %s234 = smul.addr %s233, 8
        %s235 = scalar_lea.vmem %s0, %s234
        %p236 = pneg %p41
        %p237 = pneg %p38
        %p238 = scmp.lt.s32.totalorder %s20, 1
        %s239 = scalar_select %p238, %s20, 1
        %s240 = smul.addr %s239, 32
        %s241 = smul.addr %s240, 8
        %s242 = scalar_lea.vmem %s1, %s241
        %p243 = pneg %p67
        %p244 = pneg %p64
        %p245 = pneg %p88
        %p246 = pneg %p85
        %p247 = pneg %p109
        %p248 = pneg %p106
        %p249 = pneg %p130
        %p250 = pneg %p127
        %p251 = pneg %p151
        %p252 = pneg %p148
        %p253 = pneg %p177
        %p254 = pneg %p174
        %s255 = sand.u32 %s164, 1
        %s256 = scalar_lea.sflag [#allocation4], %s255
        %s257 = sand.u32 %s164, 1
        %s258 = smul.addr %s257, 256
        %s259 = scalar_lea.vmem [#allocation3], %s258
        %p260 = scmp.lt.s32.totalorder %s20, 1
        %s261 = scalar_select %p260, %s20, 1
        %s262 = smul.addr %s261, 54
        %s263 = smul.addr %s262, 8
        %s264 = scalar_lea.vmem %s0, %s263
        %p265 = scmp.lt.s32.totalorder %s20, 1
        %s266 = scalar_select %p265, %s20, 1
        %s267 = smul.addr %s266, 32
        %s268 = smul.addr %s267, 8
        %s269 = scalar_lea.vmem %s1, %s268
        %v271 = vld [vmem:[%s264] sm:$0xff]
        %v272 = vld [vmem:[%s264 + $0x8] sm:$0xff]
        %v273 = vld [vmem:[%s264 + $0x10] sm:$0x3]
        %v274 = vld [vmem:[%s264 + $0x18] sm:$0xff]
        %v275 = vld [vmem:[%s264 + $0x20] sm:$0xff]
        %v276 = vld [vmem:[%s264 + $0x28] sm:$0x3]
        %v277 = vld [vmem:[%s264 + $0x30] sm:$0xff]
        %v278 = vld [vmem:[%s264 + $0x38] sm:$0xff]
        %v279 = vld [vmem:[%s264 + $0x40] sm:$0x3]
        %v280 = vld [vmem:[%s264 + $0x48] sm:$0xff]
        %v281 = vld [vmem:[%s264 + $0x50] sm:$0xff]
        %v282 = vld [vmem:[%s264 + $0x58] sm:$0x3]
        %v283 = vld [vmem:[%s264 + $0x60] sm:$0xff]
        %v284 = vld [vmem:[%s264 + $0x68] sm:$0xff]
        %v285 = vld [vmem:[%s264 + $0x70] sm:$0x3]
        %v286 = vld [vmem:[%s264 + $0x78] sm:$0xff]
        %v287 = vld [vmem:[%s264 + $0x80] sm:$0xff]
        %v288 = vld [vmem:[%s264 + $0x88] sm:$0x3]
        %v289 = vld [vmem:[%s264 + $0x90] sm:$0xff]
        %v290 = vld [vmem:[%s264 + $0x98] sm:$0xff]
        %v291 = vld [vmem:[%s264 + $0xa0] sm:$0x3]
        %v292 = vld [vmem:[%s264 + $0xa8] sm:$0xff]
        %v293 = vld [vmem:[%s264 + $0xb0] sm:$0xff]
        %v294 = vld [vmem:[%s264 + $0xb8] sm:$0x3]
        %v295 = vld [vmem:[%s264 + $0xc0] sm:$0xff]
        %v296 = vld [vmem:[%s264 + $0xc8] sm:$0xff]
        %v297 = vld [vmem:[%s264 + $0xd0] sm:$0x3]
        %v298 = vld [vmem:[%s264 + $0xd8] sm:$0xff]
        %v299 = vld [vmem:[%s264 + $0xe0] sm:$0xff]
        %v300 = vld [vmem:[%s264 + $0xe8] sm:$0x3]
        %v301 = vld [vmem:[%s264 + $0xf0] sm:$0xff]
        %v302 = vld [vmem:[%s264 + $0xf8] sm:$0xff]
        %v303 = vld [vmem:[%s264 + $0x100] sm:$0x3]
        %v304 = vld [vmem:[%s264 + $0x108] sm:$0xff]
        %v305 = vld [vmem:[%s264 + $0x110] sm:$0xff]
        %v306 = vld [vmem:[%s264 + $0x118] sm:$0x3]
        %v307 = vld [vmem:[%s264 + $0x120] sm:$0xff]
        %v308 = vld [vmem:[%s264 + $0x128] sm:$0xff]
        %v309 = vld [vmem:[%s264 + $0x130] sm:$0x3]
        %v310 = vld [vmem:[%s264 + $0x138] sm:$0xff]
        %v311 = vld [vmem:[%s264 + $0x140] sm:$0xff]
        %v312 = vld [vmem:[%s264 + $0x148] sm:$0x3]
        %v313 = vld [vmem:[%s264 + $0x150] sm:$0xff]
        %v314 = vld [vmem:[%s264 + $0x158] sm:$0xff]
        %v315 = vld [vmem:[%s264 + $0x160] sm:$0x3]
        %v316 = vld [vmem:[%s264 + $0x168] sm:$0xff]
        %v317 = vld [vmem:[%s264 + $0x170] sm:$0xff]
        %v318 = vld [vmem:[%s264 + $0x178] sm:$0x3]
        %v319 = vld [vmem:[%s264 + $0x180] sm:$0xff]
        %v320 = vld [vmem:[%s264 + $0x188] sm:$0xff]
        %v321 = vld [vmem:[%s264 + $0x190] sm:$0x3]
        %v322 = vld [vmem:[%s264 + $0x198] sm:$0xff]
        %v323 = vld [vmem:[%s264 + $0x1a0] sm:$0xff]
        %v324 = vld [vmem:[%s264 + $0x1a8] sm:$0x3]
        %v325 = vpack.c.bf16 %v272, %v271
        %v326 = vpack.c.bf16 %v273, %v273
        %v327 = vpack.c.bf16 %v275, %v274
        %v328 = vpack.c.bf16 %v276, %v276
        %v329 = vpack.c.bf16 %v278, %v277
        %v330 = vpack.c.bf16 %v279, %v279
        %v331 = vpack.c.bf16 %v281, %v280
        %v332 = vpack.c.bf16 %v282, %v282
        %v333 = vpack.c.bf16 %v284, %v283
        %v334 = vpack.c.bf16 %v285, %v285
        %v335 = vpack.c.bf16 %v287, %v286
        %v336 = vpack.c.bf16 %v288, %v288
        %v337 = vpack.c.bf16 %v290, %v289
        %v338 = vpack.c.bf16 %v291, %v291
        %v339 = vpack.c.bf16 %v293, %v292
        %v340 = vpack.c.bf16 %v294, %v294
        %v341 = vpack.c.bf16 %v296, %v295
        %v342 = vpack.c.bf16 %v297, %v297
        %v343 = vpack.c.bf16 %v299, %v298
        %v344 = vpack.c.bf16 %v300, %v300
        %v345 = vpack.c.bf16 %v302, %v301
        %v346 = vpack.c.bf16 %v303, %v303
        %v347 = vpack.c.bf16 %v305, %v304
        %v348 = vpack.c.bf16 %v306, %v306
        %v349 = vpack.c.bf16 %v308, %v307
        %v350 = vpack.c.bf16 %v309, %v309
        %v351 = vpack.c.bf16 %v311, %v310
        %v352 = vpack.c.bf16 %v312, %v312
        %v353 = vpack.c.bf16 %v314, %v313
        %v354 = vpack.c.bf16 %v315, %v315
        %v355 = vpack.c.bf16 %v317, %v316
        %v356 = vpack.c.bf16 %v318, %v318
        %v357 = vpack.c.bf16 %v320, %v319
        %v358 = vpack.c.bf16 %v321, %v321
        %v359 = vpack.c.bf16 %v323, %v322
        %v360 = vpack.c.bf16 %v324, %v324
        %vm361 = vsmask.f32 7424
        %v363 = vshrl.u32 %v327, 16
        %v365 = vshll.u32 %v327, 16
        %v367 = vrot.slane %v365, 1
        %v368 = vor.u32 %v363, %v367
        %v370 = vshll.u32 %v328, 16
        %v372 = vrot.slane %v370, 1
        %v373 = vsel %vm361, %v368, %v372
        %v375 = vshrl.u32 %v329, 16
        %v377 = vshll.u32 %v329, 16
        %v379 = vrot.slane %v377, 1
        %v380 = vor.u32 %v375, %v379
        %v382 = vshll.u32 %v330, 16
        %v384 = vrot.slane %v382, 1
        %v385 = vsel %vm361, %v380, %v384
        %v387 = vshrl.u32 %v331, 16
        %v389 = vshll.u32 %v331, 16
        %v391 = vrot.slane %v389, 1
        %v392 = vor.u32 %v387, %v391
        %v394 = vshll.u32 %v332, 16
        %v396 = vrot.slane %v394, 1
        %v397 = vsel %vm361, %v392, %v396
        %v399 = vshrl.u32 %v333, 16
        %v401 = vshll.u32 %v333, 16
        %v403 = vrot.slane %v401, 1
        %v404 = vor.u32 %v399, %v403
        %v406 = vshll.u32 %v334, 16
        %v408 = vrot.slane %v406, 1
        %v409 = vsel %vm361, %v404, %v408
        %v411 = vshrl.u32 %v335, 16
        %v413 = vshll.u32 %v335, 16
        %v415 = vrot.slane %v413, 1
        %v416 = vor.u32 %v411, %v415
        %v418 = vshll.u32 %v336, 16
        %v420 = vrot.slane %v418, 1
        %v421 = vsel %vm361, %v416, %v420
        %v423 = vshrl.u32 %v337, 16
        %v425 = vshll.u32 %v337, 16
        %v427 = vrot.slane %v425, 1
        %v428 = vor.u32 %v423, %v427
        %v430 = vshll.u32 %v338, 16
        %v432 = vrot.slane %v430, 1
        %v433 = vsel %vm361, %v428, %v432
        %v435 = vshrl.u32 %v339, 16
        %v437 = vshll.u32 %v339, 16
        %v439 = vrot.slane %v437, 1
        %v440 = vor.u32 %v435, %v439
        %v442 = vshll.u32 %v340, 16
        %v444 = vrot.slane %v442, 1
        %v445 = vsel %vm361, %v440, %v444
        %v447 = vshrl.u32 %v341, 16
        %v449 = vshll.u32 %v341, 16
        %v451 = vrot.slane %v449, 1
        %v452 = vor.u32 %v447, %v451
        %v454 = vshll.u32 %v342, 16
        %v456 = vrot.slane %v454, 1
        %v457 = vsel %vm361, %v452, %v456
        %v459 = vshrl.u32 %v343, 16
        %v461 = vshll.u32 %v343, 16
        %v463 = vrot.slane %v461, 1
        %v464 = vor.u32 %v459, %v463
        %v466 = vshll.u32 %v344, 16
        %v468 = vrot.slane %v466, 1
        %v469 = vsel %vm361, %v464, %v468
        %v471 = vshrl.u32 %v345, 16
        %v473 = vshll.u32 %v345, 16
        %v475 = vrot.slane %v473, 1
        %v476 = vor.u32 %v471, %v475
        %v478 = vshll.u32 %v346, 16
        %v480 = vrot.slane %v478, 1
        %v481 = vsel %vm361, %v476, %v480
        %v483 = vshrl.u32 %v347, 16
        %v485 = vshll.u32 %v347, 16
        %v487 = vrot.slane %v485, 1
        %v488 = vor.u32 %v483, %v487
        %v490 = vshll.u32 %v348, 16
        %v492 = vrot.slane %v490, 1
        %v493 = vsel %vm361, %v488, %v492
        %v495 = vshrl.u32 %v349, 16
        %v497 = vshll.u32 %v349, 16
        %v499 = vrot.slane %v497, 1
        %v500 = vor.u32 %v495, %v499
        %v502 = vshll.u32 %v350, 16
        %v504 = vrot.slane %v502, 1
        %v505 = vsel %vm361, %v500, %v504
        %v507 = vshrl.u32 %v351, 16
        %v509 = vshll.u32 %v351, 16
        %v511 = vrot.slane %v509, 1
        %v512 = vor.u32 %v507, %v511
        %v514 = vshll.u32 %v352, 16
        %v516 = vrot.slane %v514, 1
        %v517 = vsel %vm361, %v512, %v516
        %v519 = vshrl.u32 %v353, 16
        %v521 = vshll.u32 %v353, 16
        %v523 = vrot.slane %v521, 1
        %v524 = vor.u32 %v519, %v523
        %v526 = vshll.u32 %v354, 16
        %v528 = vrot.slane %v526, 1
        %v529 = vsel %vm361, %v524, %v528
        %v531 = vshrl.u32 %v355, 16
        %v533 = vshll.u32 %v355, 16
        %v535 = vrot.slane %v533, 1
        %v536 = vor.u32 %v531, %v535
        %v538 = vshll.u32 %v356, 16
        %v540 = vrot.slane %v538, 1
        %v541 = vsel %vm361, %v536, %v540
        %v543 = vshrl.u32 %v357, 16
        %v545 = vshll.u32 %v357, 16
        %v547 = vrot.slane %v545, 1
        %v548 = vor.u32 %v543, %v547
        %v550 = vshll.u32 %v358, 16
        %v552 = vrot.slane %v550, 1
        %v553 = vsel %vm361, %v548, %v552
        %v554 = vld [vmem:[%s2] sm:$0xf]
        %v555 = vld [vmem:[%s2 + $0x4] sm:$0xf]
        %v556 = vld [vmem:[%s2 + $0x8] sm:$0xf]
        %v557 = vld [vmem:[%s2 + $0xc] sm:$0xf]
        %v558 = vld [vmem:[%s2 + $0x10] sm:$0xf]
        %v559 = vld [vmem:[%s2 + $0x14] sm:$0xf]
        %v560 = vld [vmem:[%s2 + $0x18] sm:$0xf]
        %v561 = vld [vmem:[%s2 + $0x1c] sm:$0xf]
        %v563 = vshrl.u32 %v325, 16
        %v565 = vshll.u32 %v325, 16
        %v567 = vrot.slane %v565, 1
        %v568 = vor.u32 %v563, %v567
        %v570 = vshll.u32 %v326, 16
        %v572 = vrot.slane %v570, 1
        %v573 = vsel %vm361, %v568, %v572
        %s574 = scalar_lea.vmem %s2, 32
        %v575 = vld [vmem:[%s574] sm:$0xf]
        %v576 = vld [vmem:[%s574 + $0x4] sm:$0xf]
        %v577 = vld [vmem:[%s574 + $0x8] sm:$0xf]
        %v578 = vld [vmem:[%s574 + $0xc] sm:$0xf]
        %v579 = vld [vmem:[%s574 + $0x10] sm:$0xf]
        %v580 = vld [vmem:[%s574 + $0x14] sm:$0xf]
        %v581 = vld [vmem:[%s574 + $0x18] sm:$0xf]
        %v582 = vld [vmem:[%s574 + $0x1c] sm:$0xf]
        %v591 = vunpack.c.l.b16 %v575
        %v592 = vunpack.c.l.b16 %v576
        %v593 = vunpack.c.l.b16 %v577
        %v594 = vunpack.c.l.b16 %v578
        %v595 = vunpack.c.l.b16 %v579
        %v596 = vunpack.c.l.b16 %v580
        %v597 = vunpack.c.l.b16 %v581
        %v598 = vunpack.c.l.b16 %v582
        %v599 = vpack.c.b16 %v592, %v591
        %v600 = vpack.c.b16 %v594, %v593
        %v601 = vpack.c.b16 %v596, %v595
        %v602 = vpack.c.b16 %v598, %v597
        %vm607 = vcmask 523264
        %v609 = vsel %vm607, %v573, 0
        %v612 = vsel %vm607, %v373, 0
        %v615 = vsel %vm607, %v385, 0
        %v618 = vsel %vm607, %v397, 0
        %v621 = vsel %vm607, %v409, 0
        %v624 = vsel %vm607, %v421, 0
        %v627 = vsel %vm607, %v433, 0
        %v630 = vsel %vm607, %v445, 0
        %v633 = vsel %vm607, %v457, 0
        %v636 = vsel %vm607, %v469, 0
        %v639 = vsel %vm607, %v481, 0
        %v642 = vsel %vm607, %v493, 0
        %v645 = vsel %vm607, %v505, 0
        %v648 = vsel %vm607, %v517, 0
        %v651 = vsel %vm607, %v529, 0
        %v654 = vsel %vm607, %v541, 0
        %656 = vmatprep.subr.bf16.mxu0 0
        %657 = vmatpush1.bf16.msra.mxu0 0
        %658 = vmatprep.subr.bf16.mxu0 0
        %659 = vmatpush1.bf16.msra.mxu0 0
        %660 = vmatprep.subr.bf16.mxu0 0
        %661 = vmatpush1.bf16.msra.mxu0 0
        %662 = vmatprep.subr.bf16.mxu0 0
        %663 = vmatpush1.bf16.msra.mxu0 0
        %664 = vmatprep.subr.bf16.mxu0 0
        %665 = vmatpush1.bf16.msra.mxu0 %v602
        %666 = vmatprep.subr.bf16.mxu0 0
        %667 = vmatpush1.bf16.msra.mxu0 %v601
        %668 = vmatprep.subr.bf16.mxu0 0
        %669 = vmatpush1.bf16.msra.mxu0 %v600
        %670 = vmatprep.subr.bf16.mxu0 0
        %671 = vmatpush1.bf16.msra.mxu0 %v599
        %672 = vmatprep.subr.bf16.mxu0 0
        %673 = vmatpush2.bf16.msra.mxu0 0
        %674 = vmatprep.subr.bf16.mxu0 0
        %675 = vmatpush2.bf16.msra.mxu0 0
        %676 = vmatprep.subr.bf16.mxu0 0
        %677 = vmatpush2.bf16.msra.mxu0 0
        %678 = vmatprep.subr.bf16.mxu0 0
        %679 = vmatpush2.bf16.msra.mxu0 0
        %680 = vmatprep.subr.bf16.mxu0 0
        %681 = vmatpush2.bf16.msra.mxu0 0
        %682 = vmatprep.subr.bf16.mxu0 0
        %683 = vmatpush2.bf16.msra.mxu0 0
        %684 = vmatprep.subr.bf16.mxu0 0
        %685 = vmatpush2.bf16.msra.mxu0 0
        %686 = vmatprep.subr.bf16.mxu0 0
        %687 = vmatpush2.bf16.msra.mxu0 0
        %688 = vmatprep.mubr.bf16.mxu0 0
        %689 = vmatmul.mubr.bf16.gmra.mxu0 %v609
        %v690 = vpop.f32.mrf.mxu0
        %v691 = vadd.f32 0.0, %v690
        %v692 = vpop.f32.mrf.mxu0
        %v693 = vpop.f32.mrf.mxu0
        %v694 = vadd.f32 0.0, %v693
        %v695 = vpop.f32.mrf.mxu0
        %696 = vmatprep.mubr.bf16.mxu0 0
        %697 = vmatmul.mubr.bf16.gmra.mxu0 %v612
        %v698 = vpop.f32.mrf.mxu0
        %v699 = vadd.f32 0.0, %v698
        %v700 = vpop.f32.mrf.mxu0
        %v701 = vpop.f32.mrf.mxu0
        %v702 = vadd.f32 0.0, %v701
        %v703 = vpop.f32.mrf.mxu0
        %704 = vmatprep.mubr.bf16.mxu0 0
        %705 = vmatmul.mubr.bf16.gmra.mxu0 %v615
        %v706 = vpop.f32.mrf.mxu0
        %v707 = vadd.f32 0.0, %v706
        %v708 = vpop.f32.mrf.mxu0
        %v709 = vpop.f32.mrf.mxu0
        %v710 = vadd.f32 0.0, %v709
        %v711 = vpop.f32.mrf.mxu0
        %712 = vmatprep.mubr.bf16.mxu0 0
        %713 = vmatmul.mubr.bf16.gmra.mxu0 %v618
        %v714 = vpop.f32.mrf.mxu0
        %v715 = vadd.f32 0.0, %v714
        %v716 = vpop.f32.mrf.mxu0
        %v717 = vpop.f32.mrf.mxu0
        %v718 = vadd.f32 0.0, %v717
        %v719 = vpop.f32.mrf.mxu0
        %720 = vmatprep.mubr.bf16.mxu0 0
        %721 = vmatmul.mubr.bf16.gmra.mxu0 %v621
        %v722 = vpop.f32.mrf.mxu0
        %v723 = vadd.f32 0.0, %v722
        %v724 = vpop.f32.mrf.mxu0
        %v725 = vpop.f32.mrf.mxu0
        %v726 = vadd.f32 0.0, %v725
        %v727 = vpop.f32.mrf.mxu0
        %728 = vmatprep.mubr.bf16.mxu0 0
        %729 = vmatmul.mubr.bf16.gmra.mxu0 %v624
        %v730 = vpop.f32.mrf.mxu0
        %v731 = vadd.f32 0.0, %v730
        %v732 = vpop.f32.mrf.mxu0
        %v733 = vpop.f32.mrf.mxu0
        %v734 = vadd.f32 0.0, %v733
        %v735 = vpop.f32.mrf.mxu0
        %736 = vmatprep.mubr.bf16.mxu0 0
        %737 = vmatmul.mubr.bf16.gmra.mxu0 %v627
        %v738 = vpop.f32.mrf.mxu0
        %v739 = vadd.f32 0.0, %v738
        %v740 = vpop.f32.mrf.mxu0
        %v741 = vpop.f32.mrf.mxu0
        %v742 = vadd.f32 0.0, %v741
        %v743 = vpop.f32.mrf.mxu0
        %744 = vmatprep.mubr.bf16.mxu0 0
        %745 = vmatmul.mubr.bf16.gmra.mxu0 %v630
        %v746 = vpop.f32.mrf.mxu0
        %v747 = vadd.f32 0.0, %v746
        %v748 = vpop.f32.mrf.mxu0
        %v749 = vpop.f32.mrf.mxu0
        %v750 = vadd.f32 0.0, %v749
        %v751 = vpop.f32.mrf.mxu0
        %752 = vmatprep.mubr.bf16.mxu0 0
        %753 = vmatmul.mubr.bf16.gmra.mxu0 %v633
        %v754 = vpop.f32.mrf.mxu0
        %v755 = vadd.f32 0.0, %v754
        %v756 = vpop.f32.mrf.mxu0
        %v757 = vpop.f32.mrf.mxu0
        %v758 = vadd.f32 0.0, %v757
        %v759 = vpop.f32.mrf.mxu0
        %760 = vmatprep.mubr.bf16.mxu0 0
        %761 = vmatmul.mubr.bf16.gmra.mxu0 %v636
        %v762 = vpop.f32.mrf.mxu0
        %v763 = vadd.f32 0.0, %v762
        %v764 = vpop.f32.mrf.mxu0
        %v765 = vpop.f32.mrf.mxu0
        %v766 = vadd.f32 0.0, %v765
        %v767 = vpop.f32.mrf.mxu0
        %768 = vmatprep.mubr.bf16.mxu0 0
        %769 = vmatmul.mubr.bf16.gmra.mxu0 %v639
        %v770 = vpop.f32.mrf.mxu0
        %v771 = vadd.f32 0.0, %v770
        %v772 = vpop.f32.mrf.mxu0
        %v773 = vpop.f32.mrf.mxu0
        %v774 = vadd.f32 0.0, %v773
        %v775 = vpop.f32.mrf.mxu0
        %776 = vmatprep.mubr.bf16.mxu0 0
        %777 = vmatmul.mubr.bf16.gmra.mxu0 %v642
        %v778 = vpop.f32.mrf.mxu0
        %v779 = vadd.f32 0.0, %v778
        %v780 = vpop.f32.mrf.mxu0
        %v781 = vpop.f32.mrf.mxu0
        %v782 = vadd.f32 0.0, %v781
        %v783 = vpop.f32.mrf.mxu0
        %784 = vmatprep.mubr.bf16.mxu0 0
        %785 = vmatmul.mubr.bf16.gmra.mxu0 %v645
        %v786 = vpop.f32.mrf.mxu0
        %v787 = vadd.f32 0.0, %v786
        %v788 = vpop.f32.mrf.mxu0
        %v789 = vpop.f32.mrf.mxu0
        %v790 = vadd.f32 0.0, %v789
        %v791 = vpop.f32.mrf.mxu0
        %792 = vmatprep.mubr.bf16.mxu0 0
        %793 = vmatmul.mubr.bf16.gmra.mxu0 %v648
        %v794 = vpop.f32.mrf.mxu0
        %v795 = vadd.f32 0.0, %v794
        %v796 = vpop.f32.mrf.mxu0
        %v797 = vpop.f32.mrf.mxu0
        %v798 = vadd.f32 0.0, %v797
        %v799 = vpop.f32.mrf.mxu0
        %800 = vmatprep.mubr.bf16.mxu0 0
        %801 = vmatmul.mubr.bf16.gmra.mxu0 %v651
        %v802 = vpop.f32.mrf.mxu0
        %v803 = vadd.f32 0.0, %v802
        %v804 = vpop.f32.mrf.mxu0
        %v805 = vpop.f32.mrf.mxu0
        %v806 = vadd.f32 0.0, %v805
        %v807 = vpop.f32.mrf.mxu0
        %808 = vmatprep.mubr.bf16.mxu0 0
        %809 = vmatmul.mubr.bf16.gmra.mxu0 %v654
        %v810 = vpop.f32.mrf.mxu0
        %v811 = vadd.f32 0.0, %v810
        %v812 = vpop.f32.mrf.mxu0
        %v813 = vpop.f32.mrf.mxu0
        %v814 = vadd.f32 0.0, %v813
        %v815 = vpop.f32.mrf.mxu0
        %816 = vdwg.mxu0
        %v825 = vunpack.c.l.b16 %v554
        %v826 = vunpack.c.l.b16 %v555
        %v827 = vunpack.c.l.b16 %v556
        %v828 = vunpack.c.l.b16 %v557
        %v829 = vunpack.c.l.b16 %v558
        %v830 = vunpack.c.l.b16 %v559
        %v831 = vunpack.c.l.b16 %v560
        %v832 = vunpack.c.l.b16 %v561
        %v833 = vpack.c.b16 %v826, %v825
        %v834 = vpack.c.b16 %v828, %v827
        %v835 = vpack.c.b16 %v830, %v829
        %v836 = vpack.c.b16 %v832, %v831
        %v841 = vsel %vm607, %v325, 0
        %v843 = vsel %vm607, %v327, 0
        %v845 = vsel %vm607, %v329, 0
        %v847 = vsel %vm607, %v331, 0
        %v849 = vsel %vm607, %v333, 0
        %v851 = vsel %vm607, %v335, 0
        %v853 = vsel %vm607, %v337, 0
        %v855 = vsel %vm607, %v339, 0
        %v857 = vsel %vm607, %v341, 0
        %v859 = vsel %vm607, %v343, 0
        %v861 = vsel %vm607, %v345, 0
        %v863 = vsel %vm607, %v347, 0
        %v865 = vsel %vm607, %v349, 0
        %v867 = vsel %vm607, %v351, 0
        %v869 = vsel %vm607, %v353, 0
        %v871 = vsel %vm607, %v355, 0
        %873 = vmatprep.subr.bf16.mxu0 0
        %874 = vmatpush1.bf16.msra.mxu0 0
        %875 = vmatprep.subr.bf16.mxu0 0
        %876 = vmatpush1.bf16.msra.mxu0 0
        %877 = vmatprep.subr.bf16.mxu0 0
        %878 = vmatpush1.bf16.msra.mxu0 0
        %879 = vmatprep.subr.bf16.mxu0 0
        %880 = vmatpush1.bf16.msra.mxu0 0
        %881 = vmatprep.subr.bf16.mxu0 0
        %882 = vmatpush1.bf16.msra.mxu0 %v836
        %883 = vmatprep.subr.bf16.mxu0 0
        %884 = vmatpush1.bf16.msra.mxu0 %v835
        %885 = vmatprep.subr.bf16.mxu0 0
        %886 = vmatpush1.bf16.msra.mxu0 %v834
        %887 = vmatprep.subr.bf16.mxu0 0
        %888 = vmatpush1.bf16.msra.mxu0 %v833
        %889 = vmatprep.subr.bf16.mxu0 0
        %890 = vmatpush2.bf16.msra.mxu0 0
        %891 = vmatprep.subr.bf16.mxu0 0
        %892 = vmatpush2.bf16.msra.mxu0 0
        %893 = vmatprep.subr.bf16.mxu0 0
        %894 = vmatpush2.bf16.msra.mxu0 0
        %895 = vmatprep.subr.bf16.mxu0 0
        %896 = vmatpush2.bf16.msra.mxu0 0
        %897 = vmatprep.subr.bf16.mxu0 0
        %898 = vmatpush2.bf16.msra.mxu0 0
        %899 = vmatprep.subr.bf16.mxu0 0
        %900 = vmatpush2.bf16.msra.mxu0 0
        %901 = vmatprep.subr.bf16.mxu0 0
        %902 = vmatpush2.bf16.msra.mxu0 0
        %903 = vmatprep.subr.bf16.mxu0 0
        %904 = vmatpush2.bf16.msra.mxu0 0
        %905 = vmatprep.mubr.bf16.mxu0 0
        %906 = vmatmul.mubr.bf16.gmra.mxu0 %v841
        %v907 = vpop.f32.mrf.mxu0
        %v908 = vadd.f32 %v691, %v907
        %v909 = vpop.f32.mrf.mxu0
        %v910 = vpop.f32.mrf.mxu0
        %v911 = vadd.f32 %v694, %v910
        %v912 = vpop.f32.mrf.mxu0
        %913 = vmatprep.mubr.bf16.mxu0 0
        %914 = vmatmul.mubr.bf16.gmra.mxu0 %v843
        %v915 = vpop.f32.mrf.mxu0
        %v916 = vadd.f32 %v699, %v915
        %v917 = vpop.f32.mrf.mxu0
        %v918 = vpop.f32.mrf.mxu0
        %v919 = vadd.f32 %v702, %v918
        %v920 = vpop.f32.mrf.mxu0
        %921 = vmatprep.mubr.bf16.mxu0 0
        %922 = vmatmul.mubr.bf16.gmra.mxu0 %v845
        %v923 = vpop.f32.mrf.mxu0
        %v924 = vadd.f32 %v707, %v923
        %v925 = vpop.f32.mrf.mxu0
        %v926 = vpop.f32.mrf.mxu0
        %v927 = vadd.f32 %v710, %v926
        %v928 = vpop.f32.mrf.mxu0
        %929 = vmatprep.mubr.bf16.mxu0 0
        %930 = vmatmul.mubr.bf16.gmra.mxu0 %v847
        %v931 = vpop.f32.mrf.mxu0
        %v932 = vadd.f32 %v715, %v931
        %v933 = vpop.f32.mrf.mxu0
        %v934 = vpop.f32.mrf.mxu0
        %v935 = vadd.f32 %v718, %v934
        %v936 = vpop.f32.mrf.mxu0
        %937 = vmatprep.mubr.bf16.mxu0 0
        %938 = vmatmul.mubr.bf16.gmra.mxu0 %v849
        %v939 = vpop.f32.mrf.mxu0
        %v940 = vadd.f32 %v723, %v939
        %v941 = vpop.f32.mrf.mxu0
        %v942 = vpop.f32.mrf.mxu0
        %v943 = vadd.f32 %v726, %v942
        %v944 = vpop.f32.mrf.mxu0
        %945 = vmatprep.mubr.bf16.mxu0 0
        %946 = vmatmul.mubr.bf16.gmra.mxu0 %v851
        %v947 = vpop.f32.mrf.mxu0
        %v948 = vadd.f32 %v731, %v947
        %v949 = vpop.f32.mrf.mxu0
        %v950 = vpop.f32.mrf.mxu0
        %v951 = vadd.f32 %v734, %v950
        %v952 = vpop.f32.mrf.mxu0
        %953 = vmatprep.mubr.bf16.mxu0 0
        %954 = vmatmul.mubr.bf16.gmra.mxu0 %v853
        %v955 = vpop.f32.mrf.mxu0
        %v956 = vadd.f32 %v739, %v955
        %v957 = vpop.f32.mrf.mxu0
        %v958 = vpop.f32.mrf.mxu0
        %v959 = vadd.f32 %v742, %v958
        %v960 = vpop.f32.mrf.mxu0
        %961 = vmatprep.mubr.bf16.mxu0 0
        %962 = vmatmul.mubr.bf16.gmra.mxu0 %v855
        %v963 = vpop.f32.mrf.mxu0
        %v964 = vadd.f32 %v747, %v963
        %v965 = vpop.f32.mrf.mxu0
        %v966 = vpop.f32.mrf.mxu0
        %v967 = vadd.f32 %v750, %v966
        %v968 = vpop.f32.mrf.mxu0
        %969 = vmatprep.mubr.bf16.mxu0 0
        %970 = vmatmul.mubr.bf16.gmra.mxu0 %v857
        %v971 = vpop.f32.mrf.mxu0
        %v972 = vadd.f32 %v755, %v971
        %v973 = vpop.f32.mrf.mxu0
        %v974 = vpop.f32.mrf.mxu0
        %v975 = vadd.f32 %v758, %v974
        %v976 = vpop.f32.mrf.mxu0
        %977 = vmatprep.mubr.bf16.mxu0 0
        %978 = vmatmul.mubr.bf16.gmra.mxu0 %v859
        %v979 = vpop.f32.mrf.mxu0
        %v980 = vadd.f32 %v763, %v979
        %v981 = vpop.f32.mrf.mxu0
        %v982 = vpop.f32.mrf.mxu0
        %v983 = vadd.f32 %v766, %v982
        %v984 = vpop.f32.mrf.mxu0
        %985 = vmatprep.mubr.bf16.mxu0 0
        %986 = vmatmul.mubr.bf16.gmra.mxu0 %v861
        %v987 = vpop.f32.mrf.mxu0
        %v988 = vadd.f32 %v771, %v987
        %v989 = vpop.f32.mrf.mxu0
        %v990 = vpop.f32.mrf.mxu0
        %v991 = vadd.f32 %v774, %v990
        %v992 = vpop.f32.mrf.mxu0
        %993 = vmatprep.mubr.bf16.mxu0 0
        %994 = vmatmul.mubr.bf16.gmra.mxu0 %v863
        %v995 = vpop.f32.mrf.mxu0
        %v996 = vadd.f32 %v779, %v995
        %v997 = vpop.f32.mrf.mxu0
        %v998 = vpop.f32.mrf.mxu0
        %v999 = vadd.f32 %v782, %v998
        %v1000 = vpop.f32.mrf.mxu0
        %1001 = vmatprep.mubr.bf16.mxu0 0
        %1002 = vmatmul.mubr.bf16.gmra.mxu0 %v865
        %v1003 = vpop.f32.mrf.mxu0
        %v1004 = vadd.f32 %v787, %v1003
        %v1005 = vpop.f32.mrf.mxu0
        %v1006 = vpop.f32.mrf.mxu0
        %v1007 = vadd.f32 %v790, %v1006
        %v1008 = vpop.f32.mrf.mxu0
        %1009 = vmatprep.mubr.bf16.mxu0 0
        %1010 = vmatmul.mubr.bf16.gmra.mxu0 %v867
        %v1011 = vpop.f32.mrf.mxu0
        %v1012 = vadd.f32 %v795, %v1011
        %v1013 = vpop.f32.mrf.mxu0
        %v1014 = vpop.f32.mrf.mxu0
        %v1015 = vadd.f32 %v798, %v1014
        %v1016 = vpop.f32.mrf.mxu0
        %1017 = vmatprep.mubr.bf16.mxu0 0
        %1018 = vmatmul.mubr.bf16.gmra.mxu0 %v869
        %v1019 = vpop.f32.mrf.mxu0
        %v1020 = vadd.f32 %v803, %v1019
        %v1021 = vpop.f32.mrf.mxu0
        %v1022 = vpop.f32.mrf.mxu0
        %v1023 = vadd.f32 %v806, %v1022
        %v1024 = vpop.f32.mrf.mxu0
        %1025 = vmatprep.mubr.bf16.mxu0 0
        %1026 = vmatmul.mubr.bf16.gmra.mxu0 %v871
        %v1027 = vpop.f32.mrf.mxu0
        %v1028 = vadd.f32 %v811, %v1027
        %v1029 = vpop.f32.mrf.mxu0
        %v1030 = vpop.f32.mrf.mxu0
        %v1031 = vadd.f32 %v814, %v1030
        %v1032 = vpop.f32.mrf.mxu0
        %1033 = vdwg.mxu0
        %vm1066 = vcmask 1046528
        %v1067 = vrot.slane %v325, 1
        %v1068 = vrot.slane %v326, 1
        %v1069 = vsel %vm1066, %v1067, %v1068
        %v1070 = vrot.slane %v327, 1
        %v1071 = vrot.slane %v328, 1
        %v1072 = vsel %vm1066, %v1070, %v1071
        %v1073 = vrot.slane %v329, 1
        %v1074 = vrot.slane %v330, 1
        %v1075 = vsel %vm1066, %v1073, %v1074
        %v1076 = vrot.slane %v331, 1
        %v1077 = vrot.slane %v332, 1
        %v1078 = vsel %vm1066, %v1076, %v1077
        %v1079 = vrot.slane %v333, 1
        %v1080 = vrot.slane %v334, 1
        %v1081 = vsel %vm1066, %v1079, %v1080
        %v1082 = vrot.slane %v335, 1
        %v1083 = vrot.slane %v336, 1
        %v1084 = vsel %vm1066, %v1082, %v1083
        %v1085 = vrot.slane %v337, 1
        %v1086 = vrot.slane %v338, 1
        %v1087 = vsel %vm1066, %v1085, %v1086
        %v1088 = vrot.slane %v339, 1
        %v1089 = vrot.slane %v340, 1
        %v1090 = vsel %vm1066, %v1088, %v1089
        %v1091 = vrot.slane %v341, 1
        %v1092 = vrot.slane %v342, 1
        %v1093 = vsel %vm1066, %v1091, %v1092
        %v1094 = vrot.slane %v343, 1
        %v1095 = vrot.slane %v344, 1
        %v1096 = vsel %vm1066, %v1094, %v1095
        %v1097 = vrot.slane %v345, 1
        %v1098 = vrot.slane %v346, 1
        %v1099 = vsel %vm1066, %v1097, %v1098
        %v1100 = vrot.slane %v347, 1
        %v1101 = vrot.slane %v348, 1
        %v1102 = vsel %vm1066, %v1100, %v1101
        %v1103 = vrot.slane %v349, 1
        %v1104 = vrot.slane %v350, 1
        %v1105 = vsel %vm1066, %v1103, %v1104
        %v1106 = vrot.slane %v351, 1
        %v1107 = vrot.slane %v352, 1
        %v1108 = vsel %vm1066, %v1106, %v1107
        %v1109 = vrot.slane %v353, 1
        %v1110 = vrot.slane %v354, 1
        %v1111 = vsel %vm1066, %v1109, %v1110
        %v1112 = vrot.slane %v355, 1
        %v1113 = vrot.slane %v356, 1
        %v1114 = vsel %vm1066, %v1112, %v1113
        %s1115 = scalar_lea.vmem %s2, 64
        %v1116 = vld [vmem:[%s1115] sm:$0xf]
        %v1117 = vld [vmem:[%s1115 + $0x4] sm:$0xf]
        %v1118 = vld [vmem:[%s1115 + $0x8] sm:$0xf]
        %v1119 = vld [vmem:[%s1115 + $0xc] sm:$0xf]
        %v1120 = vld [vmem:[%s1115 + $0x10] sm:$0xf]
        %v1121 = vld [vmem:[%s1115 + $0x14] sm:$0xf]
        %v1122 = vld [vmem:[%s1115 + $0x18] sm:$0xf]
        %v1123 = vld [vmem:[%s1115 + $0x1c] sm:$0xf]
        %v1132 = vunpack.c.l.b16 %v1116
        %v1133 = vunpack.c.l.b16 %v1117
        %v1134 = vunpack.c.l.b16 %v1118
        %v1135 = vunpack.c.l.b16 %v1119
        %v1136 = vunpack.c.l.b16 %v1120
        %v1137 = vunpack.c.l.b16 %v1121
        %v1138 = vunpack.c.l.b16 %v1122
        %v1139 = vunpack.c.l.b16 %v1123
        %v1140 = vpack.c.b16 %v1133, %v1132
        %v1141 = vpack.c.b16 %v1135, %v1134
        %v1142 = vpack.c.b16 %v1137, %v1136
        %v1143 = vpack.c.b16 %v1139, %v1138
        %v1149 = vsel %vm607, %v1069, 0
        %v1152 = vsel %vm607, %v1072, 0
        %v1155 = vsel %vm607, %v1075, 0
        %v1158 = vsel %vm607, %v1078, 0
        %v1161 = vsel %vm607, %v1081, 0
        %v1164 = vsel %vm607, %v1084, 0
        %v1167 = vsel %vm607, %v1087, 0
        %v1170 = vsel %vm607, %v1090, 0
        %v1173 = vsel %vm607, %v1093, 0
        %v1176 = vsel %vm607, %v1096, 0
        %v1179 = vsel %vm607, %v1099, 0
        %v1182 = vsel %vm607, %v1102, 0
        %v1185 = vsel %vm607, %v1105, 0
        %v1188 = vsel %vm607, %v1108, 0
        %v1191 = vsel %vm607, %v1111, 0
        %v1194 = vsel %vm607, %v1114, 0
        %1196 = vmatprep.subr.bf16.mxu0 0
        %1197 = vmatpush1.bf16.msra.mxu0 0
        %1198 = vmatprep.subr.bf16.mxu0 0
        %1199 = vmatpush1.bf16.msra.mxu0 0
        %1200 = vmatprep.subr.bf16.mxu0 0
        %1201 = vmatpush1.bf16.msra.mxu0 0
        %1202 = vmatprep.subr.bf16.mxu0 0
        %1203 = vmatpush1.bf16.msra.mxu0 0
        %1204 = vmatprep.subr.bf16.mxu0 0
        %1205 = vmatpush1.bf16.msra.mxu0 %v1143
        %1206 = vmatprep.subr.bf16.mxu0 0
        %1207 = vmatpush1.bf16.msra.mxu0 %v1142
        %1208 = vmatprep.subr.bf16.mxu0 0
        %1209 = vmatpush1.bf16.msra.mxu0 %v1141
        %1210 = vmatprep.subr.bf16.mxu0 0
        %1211 = vmatpush1.bf16.msra.mxu0 %v1140
        %1212 = vmatprep.subr.bf16.mxu0 0
        %1213 = vmatpush2.bf16.msra.mxu0 0
        %1214 = vmatprep.subr.bf16.mxu0 0
        %1215 = vmatpush2.bf16.msra.mxu0 0
        %1216 = vmatprep.subr.bf16.mxu0 0
        %1217 = vmatpush2.bf16.msra.mxu0 0
        %1218 = vmatprep.subr.bf16.mxu0 0
        %1219 = vmatpush2.bf16.msra.mxu0 0
        %1220 = vmatprep.subr.bf16.mxu0 0
        %1221 = vmatpush2.bf16.msra.mxu0 0
        %1222 = vmatprep.subr.bf16.mxu0 0
        %1223 = vmatpush2.bf16.msra.mxu0 0
        %1224 = vmatprep.subr.bf16.mxu0 0
        %1225 = vmatpush2.bf16.msra.mxu0 0
        %1226 = vmatprep.subr.bf16.mxu0 0
        %1227 = vmatpush2.bf16.msra.mxu0 0
        %1228 = vmatprep.mubr.bf16.mxu0 0
        %1229 = vmatmul.mubr.bf16.gmra.mxu0 %v1149
        %v1230 = vpop.f32.mrf.mxu0
        %v1231 = vadd.f32 0.0, %v1230
        %v1232 = vpop.f32.mrf.mxu0
        %v1233 = vpop.f32.mrf.mxu0
        %v1234 = vadd.f32 0.0, %v1233
        %v1235 = vpop.f32.mrf.mxu0
        %1236 = vmatprep.mubr.bf16.mxu0 0
        %1237 = vmatmul.mubr.bf16.gmra.mxu0 %v1152
        %v1238 = vpop.f32.mrf.mxu0
        %v1239 = vadd.f32 0.0, %v1238
        %v1240 = vpop.f32.mrf.mxu0
        %v1241 = vpop.f32.mrf.mxu0
        %v1242 = vadd.f32 0.0, %v1241
        %v1243 = vpop.f32.mrf.mxu0
        %1244 = vmatprep.mubr.bf16.mxu0 0
        %1245 = vmatmul.mubr.bf16.gmra.mxu0 %v1155
        %v1246 = vpop.f32.mrf.mxu0
        %v1247 = vadd.f32 0.0, %v1246
        %v1248 = vpop.f32.mrf.mxu0
        %v1249 = vpop.f32.mrf.mxu0
        %v1250 = vadd.f32 0.0, %v1249
        %v1251 = vpop.f32.mrf.mxu0
        %1252 = vmatprep.mubr.bf16.mxu0 0
        %1253 = vmatmul.mubr.bf16.gmra.mxu0 %v1158
        %v1254 = vpop.f32.mrf.mxu0
        %v1255 = vadd.f32 0.0, %v1254
        %v1256 = vpop.f32.mrf.mxu0
        %v1257 = vpop.f32.mrf.mxu0
        %v1258 = vadd.f32 0.0, %v1257
        %v1259 = vpop.f32.mrf.mxu0
        %1260 = vmatprep.mubr.bf16.mxu0 0
        %1261 = vmatmul.mubr.bf16.gmra.mxu0 %v1161
        %v1262 = vpop.f32.mrf.mxu0
        %v1263 = vadd.f32 0.0, %v1262
        %v1264 = vpop.f32.mrf.mxu0
        %v1265 = vpop.f32.mrf.mxu0
        %v1266 = vadd.f32 0.0, %v1265
        %v1267 = vpop.f32.mrf.mxu0
        %1268 = vmatprep.mubr.bf16.mxu0 0
        %1269 = vmatmul.mubr.bf16.gmra.mxu0 %v1164
        %v1270 = vpop.f32.mrf.mxu0
        %v1271 = vadd.f32 0.0, %v1270
        %v1272 = vpop.f32.mrf.mxu0
        %v1273 = vpop.f32.mrf.mxu0
        %v1274 = vadd.f32 0.0, %v1273
        %v1275 = vpop.f32.mrf.mxu0
        %1276 = vmatprep.mubr.bf16.mxu0 0
        %1277 = vmatmul.mubr.bf16.gmra.mxu0 %v1167
        %v1278 = vpop.f32.mrf.mxu0
        %v1279 = vadd.f32 0.0, %v1278
        %v1280 = vpop.f32.mrf.mxu0
        %v1281 = vpop.f32.mrf.mxu0
        %v1282 = vadd.f32 0.0, %v1281
        %v1283 = vpop.f32.mrf.mxu0
        %1284 = vmatprep.mubr.bf16.mxu0 0
        %1285 = vmatmul.mubr.bf16.gmra.mxu0 %v1170
        %v1286 = vpop.f32.mrf.mxu0
        %v1287 = vadd.f32 0.0, %v1286
        %v1288 = vpop.f32.mrf.mxu0
        %v1289 = vpop.f32.mrf.mxu0
        %v1290 = vadd.f32 0.0, %v1289
        %v1291 = vpop.f32.mrf.mxu0
        %1292 = vmatprep.mubr.bf16.mxu0 0
        %1293 = vmatmul.mubr.bf16.gmra.mxu0 %v1173
        %v1294 = vpop.f32.mrf.mxu0
        %v1295 = vadd.f32 0.0, %v1294
        %v1296 = vpop.f32.mrf.mxu0
        %v1297 = vpop.f32.mrf.mxu0
        %v1298 = vadd.f32 0.0, %v1297
        %v1299 = vpop.f32.mrf.mxu0
        %1300 = vmatprep.mubr.bf16.mxu0 0
        %1301 = vmatmul.mubr.bf16.gmra.mxu0 %v1176
        %v1302 = vpop.f32.mrf.mxu0
        %v1303 = vadd.f32 0.0, %v1302
        %v1304 = vpop.f32.mrf.mxu0
        %v1305 = vpop.f32.mrf.mxu0
        %v1306 = vadd.f32 0.0, %v1305
        %v1307 = vpop.f32.mrf.mxu0
        %1308 = vmatprep.mubr.bf16.mxu0 0
        %1309 = vmatmul.mubr.bf16.gmra.mxu0 %v1179
        %v1310 = vpop.f32.mrf.mxu0
        %v1311 = vadd.f32 0.0, %v1310
        %v1312 = vpop.f32.mrf.mxu0
        %v1313 = vpop.f32.mrf.mxu0
        %v1314 = vadd.f32 0.0, %v1313
        %v1315 = vpop.f32.mrf.mxu0
        %1316 = vmatprep.mubr.bf16.mxu0 0
        %1317 = vmatmul.mubr.bf16.gmra.mxu0 %v1182
        %v1318 = vpop.f32.mrf.mxu0
        %v1319 = vadd.f32 0.0, %v1318
        %v1320 = vpop.f32.mrf.mxu0
        %v1321 = vpop.f32.mrf.mxu0
        %v1322 = vadd.f32 0.0, %v1321
        %v1323 = vpop.f32.mrf.mxu0
        %1324 = vmatprep.mubr.bf16.mxu0 0
        %1325 = vmatmul.mubr.bf16.gmra.mxu0 %v1185
        %v1326 = vpop.f32.mrf.mxu0
        %v1327 = vadd.f32 0.0, %v1326
        %v1328 = vpop.f32.mrf.mxu0
        %v1329 = vpop.f32.mrf.mxu0
        %v1330 = vadd.f32 0.0, %v1329
        %v1331 = vpop.f32.mrf.mxu0
        %1332 = vmatprep.mubr.bf16.mxu0 0
        %1333 = vmatmul.mubr.bf16.gmra.mxu0 %v1188
        %v1334 = vpop.f32.mrf.mxu0
        %v1335 = vadd.f32 0.0, %v1334
        %v1336 = vpop.f32.mrf.mxu0
        %v1337 = vpop.f32.mrf.mxu0
        %v1338 = vadd.f32 0.0, %v1337
        %v1339 = vpop.f32.mrf.mxu0
        %1340 = vmatprep.mubr.bf16.mxu0 0
        %1341 = vmatmul.mubr.bf16.gmra.mxu0 %v1191
        %v1342 = vpop.f32.mrf.mxu0
        %v1343 = vadd.f32 0.0, %v1342
        %v1344 = vpop.f32.mrf.mxu0
        %v1345 = vpop.f32.mrf.mxu0
        %v1346 = vadd.f32 0.0, %v1345
        %v1347 = vpop.f32.mrf.mxu0
        %1348 = vmatprep.mubr.bf16.mxu0 0
        %1349 = vmatmul.mubr.bf16.gmra.mxu0 %v1194
        %v1350 = vpop.f32.mrf.mxu0
        %v1351 = vadd.f32 0.0, %v1350
        %v1352 = vpop.f32.mrf.mxu0
        %v1353 = vpop.f32.mrf.mxu0
        %v1354 = vadd.f32 0.0, %v1353
        %v1355 = vpop.f32.mrf.mxu0
        %1356 = vdwg.mxu0
        %v1357 = vadd.f32 %v908, %v1231
        %v1358 = vadd.f32 %v911, %v1234
        %v1359 = vadd.f32 %v916, %v1239
        %v1360 = vadd.f32 %v919, %v1242
        %v1361 = vadd.f32 %v924, %v1247
        %v1362 = vadd.f32 %v927, %v1250
        %v1363 = vadd.f32 %v932, %v1255
        %v1364 = vadd.f32 %v935, %v1258
        %v1365 = vadd.f32 %v940, %v1263
        %v1366 = vadd.f32 %v943, %v1266
        %v1367 = vadd.f32 %v948, %v1271
        %v1368 = vadd.f32 %v951, %v1274
        %v1369 = vadd.f32 %v956, %v1279
        %v1370 = vadd.f32 %v959, %v1282
        %v1371 = vadd.f32 %v964, %v1287
        %v1372 = vadd.f32 %v967, %v1290
        %v1373 = vadd.f32 %v972, %v1295
        %v1374 = vadd.f32 %v975, %v1298
        %v1375 = vadd.f32 %v980, %v1303
        %v1376 = vadd.f32 %v983, %v1306
        %v1377 = vadd.f32 %v988, %v1311
        %v1378 = vadd.f32 %v991, %v1314
        %v1379 = vadd.f32 %v996, %v1319
        %v1380 = vadd.f32 %v999, %v1322
        %v1381 = vadd.f32 %v1004, %v1327
        %v1382 = vadd.f32 %v1007, %v1330
        %v1383 = vadd.f32 %v1012, %v1335
        %v1384 = vadd.f32 %v1015, %v1338
        %v1385 = vadd.f32 %v1020, %v1343
        %v1386 = vadd.f32 %v1023, %v1346
        %v1387 = vadd.f32 %v1028, %v1351
        %v1388 = vadd.f32 %v1031, %v1354
        %s1389 = scalar_lea.vmem %s2, 96
        %v1390 = vld [vmem:[%s1389] sm:$0xf]
        %v1391 = vld [vmem:[%s1389 + $0x4] sm:$0xf]
        %v1392 = vld [vmem:[%s1389 + $0x8] sm:$0xf]
        %v1393 = vld [vmem:[%s1389 + $0xc] sm:$0xf]
        %v1394 = vld [vmem:[%s1389 + $0x10] sm:$0xf]
        %v1395 = vld [vmem:[%s1389 + $0x14] sm:$0xf]
        %v1396 = vld [vmem:[%s1389 + $0x18] sm:$0xf]
        %v1397 = vld [vmem:[%s1389 + $0x1c] sm:$0xf]
        %v1406 = vunpack.c.l.b16 %v1390
        %v1407 = vunpack.c.l.b16 %v1391
        %v1408 = vunpack.c.l.b16 %v1392
        %v1409 = vunpack.c.l.b16 %v1393
        %v1410 = vunpack.c.l.b16 %v1394
        %v1411 = vunpack.c.l.b16 %v1395
        %v1412 = vunpack.c.l.b16 %v1396
        %v1413 = vunpack.c.l.b16 %v1397
        %v1414 = vpack.c.b16 %v1407, %v1406
        %v1415 = vpack.c.b16 %v1409, %v1408
        %v1416 = vpack.c.b16 %v1411, %v1410
        %v1417 = vpack.c.b16 %v1413, %v1412
        %v1422 = vsel %vm607, %v357, 0
        %1424 = vmatprep.subr.bf16.mxu0 0
        %1425 = vmatpush1.bf16.msra.mxu0 0
        %1426 = vmatprep.subr.bf16.mxu0 0
        %1427 = vmatpush1.bf16.msra.mxu0 0
        %1428 = vmatprep.subr.bf16.mxu0 0
        %1429 = vmatpush1.bf16.msra.mxu0 0
        %1430 = vmatprep.subr.bf16.mxu0 0
        %1431 = vmatpush1.bf16.msra.mxu0 0
        %1432 = vmatprep.subr.bf16.mxu0 0
        %1433 = vmatpush1.bf16.msra.mxu0 %v1417
        %1434 = vmatprep.subr.bf16.mxu0 0
        %1435 = vmatpush1.bf16.msra.mxu0 %v1416
        %1436 = vmatprep.subr.bf16.mxu0 0
        %1437 = vmatpush1.bf16.msra.mxu0 %v1415
        %1438 = vmatprep.subr.bf16.mxu0 0
        %1439 = vmatpush1.bf16.msra.mxu0 %v1414
        %1440 = vmatprep.subr.bf16.mxu0 0
        %1441 = vmatpush2.bf16.msra.mxu0 0
        %1442 = vmatprep.subr.bf16.mxu0 0
        %1443 = vmatpush2.bf16.msra.mxu0 0
        %1444 = vmatprep.subr.bf16.mxu0 0
        %1445 = vmatpush2.bf16.msra.mxu0 0
        %1446 = vmatprep.subr.bf16.mxu0 0
        %1447 = vmatpush2.bf16.msra.mxu0 0
        %1448 = vmatprep.subr.bf16.mxu0 0
        %1449 = vmatpush2.bf16.msra.mxu0 0
        %1450 = vmatprep.subr.bf16.mxu0 0
        %1451 = vmatpush2.bf16.msra.mxu0 0
        %1452 = vmatprep.subr.bf16.mxu0 0
        %1453 = vmatpush2.bf16.msra.mxu0 0
        %1454 = vmatprep.subr.bf16.mxu0 0
        %1455 = vmatpush2.bf16.msra.mxu0 0
        %1456 = vmatprep.mubr.bf16.mxu0 0
        %1457 = vmatmul.mubr.bf16.gmra.mxu0 %v843
        %v1458 = vpop.f32.mrf.mxu0
        %v1459 = vadd.f32 0.0, %v1458
        %v1460 = vpop.f32.mrf.mxu0
        %v1461 = vpop.f32.mrf.mxu0
        %v1462 = vadd.f32 0.0, %v1461
        %v1463 = vpop.f32.mrf.mxu0
        %1464 = vmatprep.mubr.bf16.mxu0 0
        %1465 = vmatmul.mubr.bf16.gmra.mxu0 %v845
        %v1466 = vpop.f32.mrf.mxu0
        %v1467 = vadd.f32 0.0, %v1466
        %v1468 = vpop.f32.mrf.mxu0
        %v1469 = vpop.f32.mrf.mxu0
        %v1470 = vadd.f32 0.0, %v1469
        %v1471 = vpop.f32.mrf.mxu0
        %1472 = vmatprep.mubr.bf16.mxu0 0
        %1473 = vmatmul.mubr.bf16.gmra.mxu0 %v847
        %v1474 = vpop.f32.mrf.mxu0
        %v1475 = vadd.f32 0.0, %v1474
        %v1476 = vpop.f32.mrf.mxu0
        %v1477 = vpop.f32.mrf.mxu0
        %v1478 = vadd.f32 0.0, %v1477
        %v1479 = vpop.f32.mrf.mxu0
        %1480 = vmatprep.mubr.bf16.mxu0 0
        %1481 = vmatmul.mubr.bf16.gmra.mxu0 %v849
        %v1482 = vpop.f32.mrf.mxu0
        %v1483 = vadd.f32 0.0, %v1482
        %v1484 = vpop.f32.mrf.mxu0
        %v1485 = vpop.f32.mrf.mxu0
        %v1486 = vadd.f32 0.0, %v1485
        %v1487 = vpop.f32.mrf.mxu0
        %1488 = vmatprep.mubr.bf16.mxu0 0
        %1489 = vmatmul.mubr.bf16.gmra.mxu0 %v851
        %v1490 = vpop.f32.mrf.mxu0
        %v1491 = vadd.f32 0.0, %v1490
        %v1492 = vpop.f32.mrf.mxu0
        %v1493 = vpop.f32.mrf.mxu0
        %v1494 = vadd.f32 0.0, %v1493
        %v1495 = vpop.f32.mrf.mxu0
        %1496 = vmatprep.mubr.bf16.mxu0 0
        %1497 = vmatmul.mubr.bf16.gmra.mxu0 %v853
        %v1498 = vpop.f32.mrf.mxu0
        %v1499 = vadd.f32 0.0, %v1498
        %v1500 = vpop.f32.mrf.mxu0
        %v1501 = vpop.f32.mrf.mxu0
        %v1502 = vadd.f32 0.0, %v1501
        %v1503 = vpop.f32.mrf.mxu0
        %1504 = vmatprep.mubr.bf16.mxu0 0
        %1505 = vmatmul.mubr.bf16.gmra.mxu0 %v855
        %v1506 = vpop.f32.mrf.mxu0
        %v1507 = vadd.f32 0.0, %v1506
        %v1508 = vpop.f32.mrf.mxu0
        %v1509 = vpop.f32.mrf.mxu0
        %v1510 = vadd.f32 0.0, %v1509
        %v1511 = vpop.f32.mrf.mxu0
        %1512 = vmatprep.mubr.bf16.mxu0 0
        %1513 = vmatmul.mubr.bf16.gmra.mxu0 %v857
        %v1514 = vpop.f32.mrf.mxu0
        %v1515 = vadd.f32 0.0, %v1514
        %v1516 = vpop.f32.mrf.mxu0
        %v1517 = vpop.f32.mrf.mxu0
        %v1518 = vadd.f32 0.0, %v1517
        %v1519 = vpop.f32.mrf.mxu0
        %1520 = vmatprep.mubr.bf16.mxu0 0
        %1521 = vmatmul.mubr.bf16.gmra.mxu0 %v859
        %v1522 = vpop.f32.mrf.mxu0
        %v1523 = vadd.f32 0.0, %v1522
        %v1524 = vpop.f32.mrf.mxu0
        %v1525 = vpop.f32.mrf.mxu0
        %v1526 = vadd.f32 0.0, %v1525
        %v1527 = vpop.f32.mrf.mxu0
        %1528 = vmatprep.mubr.bf16.mxu0 0
        %1529 = vmatmul.mubr.bf16.gmra.mxu0 %v861
        %v1530 = vpop.f32.mrf.mxu0
        %v1531 = vadd.f32 0.0, %v1530
        %v1532 = vpop.f32.mrf.mxu0
        %v1533 = vpop.f32.mrf.mxu0
        %v1534 = vadd.f32 0.0, %v1533
        %v1535 = vpop.f32.mrf.mxu0
        %1536 = vmatprep.mubr.bf16.mxu0 0
        %1537 = vmatmul.mubr.bf16.gmra.mxu0 %v863
        %v1538 = vpop.f32.mrf.mxu0
        %v1539 = vadd.f32 0.0, %v1538
        %v1540 = vpop.f32.mrf.mxu0
        %v1541 = vpop.f32.mrf.mxu0
        %v1542 = vadd.f32 0.0, %v1541
        %v1543 = vpop.f32.mrf.mxu0
        %1544 = vmatprep.mubr.bf16.mxu0 0
        %1545 = vmatmul.mubr.bf16.gmra.mxu0 %v865
        %v1546 = vpop.f32.mrf.mxu0
        %v1547 = vadd.f32 0.0, %v1546
        %v1548 = vpop.f32.mrf.mxu0
        %v1549 = vpop.f32.mrf.mxu0
        %v1550 = vadd.f32 0.0, %v1549
        %v1551 = vpop.f32.mrf.mxu0
        %1552 = vmatprep.mubr.bf16.mxu0 0
        %1553 = vmatmul.mubr.bf16.gmra.mxu0 %v867
        %v1554 = vpop.f32.mrf.mxu0
        %v1555 = vadd.f32 0.0, %v1554
        %v1556 = vpop.f32.mrf.mxu0
        %v1557 = vpop.f32.mrf.mxu0
        %v1558 = vadd.f32 0.0, %v1557
        %v1559 = vpop.f32.mrf.mxu0
        %1560 = vmatprep.mubr.bf16.mxu0 0
        %1561 = vmatmul.mubr.bf16.gmra.mxu0 %v869
        %v1562 = vpop.f32.mrf.mxu0
        %v1563 = vadd.f32 0.0, %v1562
        %v1564 = vpop.f32.mrf.mxu0
        %v1565 = vpop.f32.mrf.mxu0
        %v1566 = vadd.f32 0.0, %v1565
        %v1567 = vpop.f32.mrf.mxu0
        %1568 = vmatprep.mubr.bf16.mxu0 0
        %1569 = vmatmul.mubr.bf16.gmra.mxu0 %v871
        %v1570 = vpop.f32.mrf.mxu0
        %v1571 = vadd.f32 0.0, %v1570
        %v1572 = vpop.f32.mrf.mxu0
        %v1573 = vpop.f32.mrf.mxu0
        %v1574 = vadd.f32 0.0, %v1573
        %v1575 = vpop.f32.mrf.mxu0
        %1576 = vmatprep.mubr.bf16.mxu0 0
        %1577 = vmatmul.mubr.bf16.gmra.mxu0 %v1422
        %v1578 = vpop.f32.mrf.mxu0
        %v1579 = vadd.f32 0.0, %v1578
        %v1580 = vpop.f32.mrf.mxu0
        %v1581 = vpop.f32.mrf.mxu0
        %v1582 = vadd.f32 0.0, %v1581
        %v1583 = vpop.f32.mrf.mxu0
        %1584 = vdwg.mxu0
        %v1585 = vadd.f32 %v1357, %v1459
        %v1586 = vadd.f32 %v1358, %v1462
        %v1587 = vadd.f32 %v1359, %v1467
        %v1588 = vadd.f32 %v1360, %v1470
        %v1589 = vadd.f32 %v1361, %v1475
        %v1590 = vadd.f32 %v1362, %v1478
        %v1591 = vadd.f32 %v1363, %v1483
        %v1592 = vadd.f32 %v1364, %v1486
        %v1593 = vadd.f32 %v1365, %v1491
        %v1594 = vadd.f32 %v1366, %v1494
        %v1595 = vadd.f32 %v1367, %v1499
        %v1596 = vadd.f32 %v1368, %v1502
        %v1597 = vadd.f32 %v1369, %v1507
        %v1598 = vadd.f32 %v1370, %v1510
        %v1599 = vadd.f32 %v1371, %v1515
        %v1600 = vadd.f32 %v1372, %v1518
        %v1601 = vadd.f32 %v1373, %v1523
        %v1602 = vadd.f32 %v1374, %v1526
        %v1603 = vadd.f32 %v1375, %v1531
        %v1604 = vadd.f32 %v1376, %v1534
        %v1605 = vadd.f32 %v1377, %v1539
        %v1606 = vadd.f32 %v1378, %v1542
        %v1607 = vadd.f32 %v1379, %v1547
        %v1608 = vadd.f32 %v1380, %v1550
        %v1609 = vadd.f32 %v1381, %v1555
        %v1610 = vadd.f32 %v1382, %v1558
        %v1611 = vadd.f32 %v1383, %v1563
        %v1612 = vadd.f32 %v1384, %v1566
        %v1613 = vadd.f32 %v1385, %v1571
        %v1614 = vadd.f32 %v1386, %v1574
        %v1615 = vadd.f32 %v1387, %v1579
        %v1616 = vadd.f32 %v1388, %v1582
        %s1617 = scalar_lea.vmem %s2, 128
        %v1618 = vld [vmem:[%s1617] sm:$0xf]
        %v1619 = vld [vmem:[%s1617 + $0x4] sm:$0xf]
        %v1620 = vld [vmem:[%s1617 + $0x8] sm:$0xf]
        %v1621 = vld [vmem:[%s1617 + $0xc] sm:$0xf]
        %v1622 = vld [vmem:[%s1617 + $0x10] sm:$0xf]
        %v1623 = vld [vmem:[%s1617 + $0x14] sm:$0xf]
        %v1624 = vld [vmem:[%s1617 + $0x18] sm:$0xf]
        %v1625 = vld [vmem:[%s1617 + $0x1c] sm:$0xf]
        %v1634 = vunpack.c.l.b16 %v1618
        %v1635 = vunpack.c.l.b16 %v1619
        %v1636 = vunpack.c.l.b16 %v1620
        %v1637 = vunpack.c.l.b16 %v1621
        %v1638 = vunpack.c.l.b16 %v1622
        %v1639 = vunpack.c.l.b16 %v1623
        %v1640 = vunpack.c.l.b16 %v1624
        %v1641 = vunpack.c.l.b16 %v1625
        %v1642 = vpack.c.b16 %v1635, %v1634
        %v1643 = vpack.c.b16 %v1637, %v1636
        %v1644 = vpack.c.b16 %v1639, %v1638
        %v1645 = vpack.c.b16 %v1641, %v1640
        %v1651 = vsel %vm607, %v553, 0
        %1653 = vmatprep.subr.bf16.mxu0 0
        %1654 = vmatpush1.bf16.msra.mxu0 0
        %1655 = vmatprep.subr.bf16.mxu0 0
        %1656 = vmatpush1.bf16.msra.mxu0 0
        %1657 = vmatprep.subr.bf16.mxu0 0
        %1658 = vmatpush1.bf16.msra.mxu0 0
        %1659 = vmatprep.subr.bf16.mxu0 0
        %1660 = vmatpush1.bf16.msra.mxu0 0
        %1661 = vmatprep.subr.bf16.mxu0 0
        %1662 = vmatpush1.bf16.msra.mxu0 %v1645
        %1663 = vmatprep.subr.bf16.mxu0 0
        %1664 = vmatpush1.bf16.msra.mxu0 %v1644
        %1665 = vmatprep.subr.bf16.mxu0 0
        %1666 = vmatpush1.bf16.msra.mxu0 %v1643
        %1667 = vmatprep.subr.bf16.mxu0 0
        %1668 = vmatpush1.bf16.msra.mxu0 %v1642
        %1669 = vmatprep.subr.bf16.mxu0 0
        %1670 = vmatpush2.bf16.msra.mxu0 0
        %1671 = vmatprep.subr.bf16.mxu0 0
        %1672 = vmatpush2.bf16.msra.mxu0 0
        %1673 = vmatprep.subr.bf16.mxu0 0
        %1674 = vmatpush2.bf16.msra.mxu0 0
        %1675 = vmatprep.subr.bf16.mxu0 0
        %1676 = vmatpush2.bf16.msra.mxu0 0
        %1677 = vmatprep.subr.bf16.mxu0 0
        %1678 = vmatpush2.bf16.msra.mxu0 0
        %1679 = vmatprep.subr.bf16.mxu0 0
        %1680 = vmatpush2.bf16.msra.mxu0 0
        %1681 = vmatprep.subr.bf16.mxu0 0
        %1682 = vmatpush2.bf16.msra.mxu0 0
        %1683 = vmatprep.subr.bf16.mxu0 0
        %1684 = vmatpush2.bf16.msra.mxu0 0
        %1685 = vmatprep.mubr.bf16.mxu0 0
        %1686 = vmatmul.mubr.bf16.gmra.mxu0 %v612
        %v1687 = vpop.f32.mrf.mxu0
        %v1688 = vadd.f32 0.0, %v1687
        %v1689 = vpop.f32.mrf.mxu0
        %v1690 = vpop.f32.mrf.mxu0
        %v1691 = vadd.f32 0.0, %v1690
        %v1692 = vpop.f32.mrf.mxu0
        %1693 = vmatprep.mubr.bf16.mxu0 0
        %1694 = vmatmul.mubr.bf16.gmra.mxu0 %v615
        %v1695 = vpop.f32.mrf.mxu0
        %v1696 = vadd.f32 0.0, %v1695
        %v1697 = vpop.f32.mrf.mxu0
        %v1698 = vpop.f32.mrf.mxu0
        %v1699 = vadd.f32 0.0, %v1698
        %v1700 = vpop.f32.mrf.mxu0
        %1701 = vmatprep.mubr.bf16.mxu0 0
        %1702 = vmatmul.mubr.bf16.gmra.mxu0 %v618
        %v1703 = vpop.f32.mrf.mxu0
        %v1704 = vadd.f32 0.0, %v1703
        %v1705 = vpop.f32.mrf.mxu0
        %v1706 = vpop.f32.mrf.mxu0
        %v1707 = vadd.f32 0.0, %v1706
        %v1708 = vpop.f32.mrf.mxu0
        %1709 = vmatprep.mubr.bf16.mxu0 0
        %1710 = vmatmul.mubr.bf16.gmra.mxu0 %v621
        %v1711 = vpop.f32.mrf.mxu0
        %v1712 = vadd.f32 0.0, %v1711
        %v1713 = vpop.f32.mrf.mxu0
        %v1714 = vpop.f32.mrf.mxu0
        %v1715 = vadd.f32 0.0, %v1714
        %v1716 = vpop.f32.mrf.mxu0
        %1717 = vmatprep.mubr.bf16.mxu0 0
        %1718 = vmatmul.mubr.bf16.gmra.mxu0 %v624
        %v1719 = vpop.f32.mrf.mxu0
        %v1720 = vadd.f32 0.0, %v1719
        %v1721 = vpop.f32.mrf.mxu0
        %v1722 = vpop.f32.mrf.mxu0
        %v1723 = vadd.f32 0.0, %v1722
        %v1724 = vpop.f32.mrf.mxu0
        %1725 = vmatprep.mubr.bf16.mxu0 0
        %1726 = vmatmul.mubr.bf16.gmra.mxu0 %v627
        %v1727 = vpop.f32.mrf.mxu0
        %v1728 = vadd.f32 0.0, %v1727
        %v1729 = vpop.f32.mrf.mxu0
        %v1730 = vpop.f32.mrf.mxu0
        %v1731 = vadd.f32 0.0, %v1730
        %v1732 = vpop.f32.mrf.mxu0
        %1733 = vmatprep.mubr.bf16.mxu0 0
        %1734 = vmatmul.mubr.bf16.gmra.mxu0 %v630
        %v1735 = vpop.f32.mrf.mxu0
        %v1736 = vadd.f32 0.0, %v1735
        %v1737 = vpop.f32.mrf.mxu0
        %v1738 = vpop.f32.mrf.mxu0
        %v1739 = vadd.f32 0.0, %v1738
        %v1740 = vpop.f32.mrf.mxu0
        %1741 = vmatprep.mubr.bf16.mxu0 0
        %1742 = vmatmul.mubr.bf16.gmra.mxu0 %v633
        %v1743 = vpop.f32.mrf.mxu0
        %v1744 = vadd.f32 0.0, %v1743
        %v1745 = vpop.f32.mrf.mxu0
        %v1746 = vpop.f32.mrf.mxu0
        %v1747 = vadd.f32 0.0, %v1746
        %v1748 = vpop.f32.mrf.mxu0
        %1749 = vmatprep.mubr.bf16.mxu0 0
        %1750 = vmatmul.mubr.bf16.gmra.mxu0 %v636
        %v1751 = vpop.f32.mrf.mxu0
        %v1752 = vadd.f32 0.0, %v1751
        %v1753 = vpop.f32.mrf.mxu0
        %v1754 = vpop.f32.mrf.mxu0
        %v1755 = vadd.f32 0.0, %v1754
        %v1756 = vpop.f32.mrf.mxu0
        %1757 = vmatprep.mubr.bf16.mxu0 0
        %1758 = vmatmul.mubr.bf16.gmra.mxu0 %v639
        %v1759 = vpop.f32.mrf.mxu0
        %v1760 = vadd.f32 0.0, %v1759
        %v1761 = vpop.f32.mrf.mxu0
        %v1762 = vpop.f32.mrf.mxu0
        %v1763 = vadd.f32 0.0, %v1762
        %v1764 = vpop.f32.mrf.mxu0
        %1765 = vmatprep.mubr.bf16.mxu0 0
        %1766 = vmatmul.mubr.bf16.gmra.mxu0 %v642
        %v1767 = vpop.f32.mrf.mxu0
        %v1768 = vadd.f32 0.0, %v1767
        %v1769 = vpop.f32.mrf.mxu0
        %v1770 = vpop.f32.mrf.mxu0
        %v1771 = vadd.f32 0.0, %v1770
        %v1772 = vpop.f32.mrf.mxu0
        %1773 = vmatprep.mubr.bf16.mxu0 0
        %1774 = vmatmul.mubr.bf16.gmra.mxu0 %v645
        %v1775 = vpop.f32.mrf.mxu0
        %v1776 = vadd.f32 0.0, %v1775
        %v1777 = vpop.f32.mrf.mxu0
        %v1778 = vpop.f32.mrf.mxu0
        %v1779 = vadd.f32 0.0, %v1778
        %v1780 = vpop.f32.mrf.mxu0
        %1781 = vmatprep.mubr.bf16.mxu0 0
        %1782 = vmatmul.mubr.bf16.gmra.mxu0 %v648
        %v1783 = vpop.f32.mrf.mxu0
        %v1784 = vadd.f32 0.0, %v1783
        %v1785 = vpop.f32.mrf.mxu0
        %v1786 = vpop.f32.mrf.mxu0
        %v1787 = vadd.f32 0.0, %v1786
        %v1788 = vpop.f32.mrf.mxu0
        %1789 = vmatprep.mubr.bf16.mxu0 0
        %1790 = vmatmul.mubr.bf16.gmra.mxu0 %v651
        %v1791 = vpop.f32.mrf.mxu0
        %v1792 = vadd.f32 0.0, %v1791
        %v1793 = vpop.f32.mrf.mxu0
        %v1794 = vpop.f32.mrf.mxu0
        %v1795 = vadd.f32 0.0, %v1794
        %v1796 = vpop.f32.mrf.mxu0
        %1797 = vmatprep.mubr.bf16.mxu0 0
        %1798 = vmatmul.mubr.bf16.gmra.mxu0 %v654
        %v1799 = vpop.f32.mrf.mxu0
        %v1800 = vadd.f32 0.0, %v1799
        %v1801 = vpop.f32.mrf.mxu0
        %v1802 = vpop.f32.mrf.mxu0
        %v1803 = vadd.f32 0.0, %v1802
        %v1804 = vpop.f32.mrf.mxu0
        %1805 = vmatprep.mubr.bf16.mxu0 0
        %1806 = vmatmul.mubr.bf16.gmra.mxu0 %v1651
        %v1807 = vpop.f32.mrf.mxu0
        %v1808 = vadd.f32 0.0, %v1807
        %v1809 = vpop.f32.mrf.mxu0
        %v1810 = vpop.f32.mrf.mxu0
        %v1811 = vadd.f32 0.0, %v1810
        %v1812 = vpop.f32.mrf.mxu0
        %1813 = vdwg.mxu0
        %v1814 = vadd.f32 %v1585, %v1688
        %v1815 = vadd.f32 %v1586, %v1691
        %v1816 = vadd.f32 %v1587, %v1696
        %v1817 = vadd.f32 %v1588, %v1699
        %v1818 = vadd.f32 %v1589, %v1704
        %v1819 = vadd.f32 %v1590, %v1707
        %v1820 = vadd.f32 %v1591, %v1712
        %v1821 = vadd.f32 %v1592, %v1715
        %v1822 = vadd.f32 %v1593, %v1720
        %v1823 = vadd.f32 %v1594, %v1723
        %v1824 = vadd.f32 %v1595, %v1728
        %v1825 = vadd.f32 %v1596, %v1731
        %v1826 = vadd.f32 %v1597, %v1736
        %v1827 = vadd.f32 %v1598, %v1739
        %v1828 = vadd.f32 %v1599, %v1744
        %v1829 = vadd.f32 %v1600, %v1747
        %v1830 = vadd.f32 %v1601, %v1752
        %v1831 = vadd.f32 %v1602, %v1755
        %v1832 = vadd.f32 %v1603, %v1760
        %v1833 = vadd.f32 %v1604, %v1763
        %v1834 = vadd.f32 %v1605, %v1768
        %v1835 = vadd.f32 %v1606, %v1771
        %v1836 = vadd.f32 %v1607, %v1776
        %v1837 = vadd.f32 %v1608, %v1779
        %v1838 = vadd.f32 %v1609, %v1784
        %v1839 = vadd.f32 %v1610, %v1787
        %v1840 = vadd.f32 %v1611, %v1792
        %v1841 = vadd.f32 %v1612, %v1795
        %v1842 = vadd.f32 %v1613, %v1800
        %v1843 = vadd.f32 %v1614, %v1803
        %v1844 = vadd.f32 %v1615, %v1808
        %v1845 = vadd.f32 %v1616, %v1811
        %v1848 = vrot.slane %v357, 1
        %v1849 = vrot.slane %v358, 1
        %v1850 = vsel %vm1066, %v1848, %v1849
        %s1851 = scalar_lea.vmem %s2, 160
        %v1852 = vld [vmem:[%s1851] sm:$0xf]
        %v1853 = vld [vmem:[%s1851 + $0x4] sm:$0xf]
        %v1854 = vld [vmem:[%s1851 + $0x8] sm:$0xf]
        %v1855 = vld [vmem:[%s1851 + $0xc] sm:$0xf]
        %v1856 = vld [vmem:[%s1851 + $0x10] sm:$0xf]
        %v1857 = vld [vmem:[%s1851 + $0x14] sm:$0xf]
        %v1858 = vld [vmem:[%s1851 + $0x18] sm:$0xf]
        %v1859 = vld [vmem:[%s1851 + $0x1c] sm:$0xf]
        %v1868 = vunpack.c.l.b16 %v1852
        %v1869 = vunpack.c.l.b16 %v1853
        %v1870 = vunpack.c.l.b16 %v1854
        %v1871 = vunpack.c.l.b16 %v1855
        %v1872 = vunpack.c.l.b16 %v1856
        %v1873 = vunpack.c.l.b16 %v1857
        %v1874 = vunpack.c.l.b16 %v1858
        %v1875 = vunpack.c.l.b16 %v1859
        %v1876 = vpack.c.b16 %v1869, %v1868
        %v1877 = vpack.c.b16 %v1871, %v1870
        %v1878 = vpack.c.b16 %v1873, %v1872
        %v1879 = vpack.c.b16 %v1875, %v1874
        %v1885 = vsel %vm607, %v1850, 0
        %1887 = vmatprep.subr.bf16.mxu0 0
        %1888 = vmatpush1.bf16.msra.mxu0 0
        %1889 = vmatprep.subr.bf16.mxu0 0
        %1890 = vmatpush1.bf16.msra.mxu0 0
        %1891 = vmatprep.subr.bf16.mxu0 0
        %1892 = vmatpush1.bf16.msra.mxu0 0
        %1893 = vmatprep.subr.bf16.mxu0 0
        %1894 = vmatpush1.bf16.msra.mxu0 0
        %1895 = vmatprep.subr.bf16.mxu0 0
        %1896 = vmatpush1.bf16.msra.mxu0 %v1879
        %1897 = vmatprep.subr.bf16.mxu0 0
        %1898 = vmatpush1.bf16.msra.mxu0 %v1878
        %1899 = vmatprep.subr.bf16.mxu0 0
        %1900 = vmatpush1.bf16.msra.mxu0 %v1877
        %1901 = vmatprep.subr.bf16.mxu0 0
        %1902 = vmatpush1.bf16.msra.mxu0 %v1876
        %1903 = vmatprep.subr.bf16.mxu0 0
        %1904 = vmatpush2.bf16.msra.mxu0 0
        %1905 = vmatprep.subr.bf16.mxu0 0
        %1906 = vmatpush2.bf16.msra.mxu0 0
        %1907 = vmatprep.subr.bf16.mxu0 0
        %1908 = vmatpush2.bf16.msra.mxu0 0
        %1909 = vmatprep.subr.bf16.mxu0 0
        %1910 = vmatpush2.bf16.msra.mxu0 0
        %1911 = vmatprep.subr.bf16.mxu0 0
        %1912 = vmatpush2.bf16.msra.mxu0 0
        %1913 = vmatprep.subr.bf16.mxu0 0
        %1914 = vmatpush2.bf16.msra.mxu0 0
        %1915 = vmatprep.subr.bf16.mxu0 0
        %1916 = vmatpush2.bf16.msra.mxu0 0
        %1917 = vmatprep.subr.bf16.mxu0 0
        %1918 = vmatpush2.bf16.msra.mxu0 0
        %1919 = vmatprep.mubr.bf16.mxu0 0
        %1920 = vmatmul.mubr.bf16.gmra.mxu0 %v1152
        %v1921 = vpop.f32.mrf.mxu0
        %v1922 = vadd.f32 0.0, %v1921
        %v1923 = vpop.f32.mrf.mxu0
        %v1924 = vpop.f32.mrf.mxu0
        %v1925 = vadd.f32 0.0, %v1924
        %v1926 = vpop.f32.mrf.mxu0
        %1927 = vmatprep.mubr.bf16.mxu0 0
        %1928 = vmatmul.mubr.bf16.gmra.mxu0 %v1155
        %v1929 = vpop.f32.mrf.mxu0
        %v1930 = vadd.f32 0.0, %v1929
        %v1931 = vpop.f32.mrf.mxu0
        %v1932 = vpop.f32.mrf.mxu0
        %v1933 = vadd.f32 0.0, %v1932
        %v1934 = vpop.f32.mrf.mxu0
        %1935 = vmatprep.mubr.bf16.mxu0 0
        %1936 = vmatmul.mubr.bf16.gmra.mxu0 %v1158
        %v1937 = vpop.f32.mrf.mxu0
        %v1938 = vadd.f32 0.0, %v1937
        %v1939 = vpop.f32.mrf.mxu0
        %v1940 = vpop.f32.mrf.mxu0
        %v1941 = vadd.f32 0.0, %v1940
        %v1942 = vpop.f32.mrf.mxu0
        %1943 = vmatprep.mubr.bf16.mxu0 0
        %1944 = vmatmul.mubr.bf16.gmra.mxu0 %v1161
        %v1945 = vpop.f32.mrf.mxu0
        %v1946 = vadd.f32 0.0, %v1945
        %v1947 = vpop.f32.mrf.mxu0
        %v1948 = vpop.f32.mrf.mxu0
        %v1949 = vadd.f32 0.0, %v1948
        %v1950 = vpop.f32.mrf.mxu0
        %1951 = vmatprep.mubr.bf16.mxu0 0
        %1952 = vmatmul.mubr.bf16.gmra.mxu0 %v1164
        %v1953 = vpop.f32.mrf.mxu0
        %v1954 = vadd.f32 0.0, %v1953
        %v1955 = vpop.f32.mrf.mxu0
        %v1956 = vpop.f32.mrf.mxu0
        %v1957 = vadd.f32 0.0, %v1956
        %v1958 = vpop.f32.mrf.mxu0
        %1959 = vmatprep.mubr.bf16.mxu0 0
        %1960 = vmatmul.mubr.bf16.gmra.mxu0 %v1167
        %v1961 = vpop.f32.mrf.mxu0
        %v1962 = vadd.f32 0.0, %v1961
        %v1963 = vpop.f32.mrf.mxu0
        %v1964 = vpop.f32.mrf.mxu0
        %v1965 = vadd.f32 0.0, %v1964
        %v1966 = vpop.f32.mrf.mxu0
        %1967 = vmatprep.mubr.bf16.mxu0 0
        %1968 = vmatmul.mubr.bf16.gmra.mxu0 %v1170
        %v1969 = vpop.f32.mrf.mxu0
        %v1970 = vadd.f32 0.0, %v1969
        %v1971 = vpop.f32.mrf.mxu0
        %v1972 = vpop.f32.mrf.mxu0
        %v1973 = vadd.f32 0.0, %v1972
        %v1974 = vpop.f32.mrf.mxu0
        %1975 = vmatprep.mubr.bf16.mxu0 0
        %1976 = vmatmul.mubr.bf16.gmra.mxu0 %v1173
        %v1977 = vpop.f32.mrf.mxu0
        %v1978 = vadd.f32 0.0, %v1977
        %v1979 = vpop.f32.mrf.mxu0
        %v1980 = vpop.f32.mrf.mxu0
        %v1981 = vadd.f32 0.0, %v1980
        %v1982 = vpop.f32.mrf.mxu0
        %1983 = vmatprep.mubr.bf16.mxu0 0
        %1984 = vmatmul.mubr.bf16.gmra.mxu0 %v1176
        %v1985 = vpop.f32.mrf.mxu0
        %v1986 = vadd.f32 0.0, %v1985
        %v1987 = vpop.f32.mrf.mxu0
        %v1988 = vpop.f32.mrf.mxu0
        %v1989 = vadd.f32 0.0, %v1988
        %v1990 = vpop.f32.mrf.mxu0
        %1991 = vmatprep.mubr.bf16.mxu0 0
        %1992 = vmatmul.mubr.bf16.gmra.mxu0 %v1179
        %v1993 = vpop.f32.mrf.mxu0
        %v1994 = vadd.f32 0.0, %v1993
        %v1995 = vpop.f32.mrf.mxu0
        %v1996 = vpop.f32.mrf.mxu0
        %v1997 = vadd.f32 0.0, %v1996
        %v1998 = vpop.f32.mrf.mxu0
        %1999 = vmatprep.mubr.bf16.mxu0 0
        %2000 = vmatmul.mubr.bf16.gmra.mxu0 %v1182
        %v2001 = vpop.f32.mrf.mxu0
        %v2002 = vadd.f32 0.0, %v2001
        %v2003 = vpop.f32.mrf.mxu0
        %v2004 = vpop.f32.mrf.mxu0
        %v2005 = vadd.f32 0.0, %v2004
        %v2006 = vpop.f32.mrf.mxu0
        %2007 = vmatprep.mubr.bf16.mxu0 0
        %2008 = vmatmul.mubr.bf16.gmra.mxu0 %v1185
        %v2009 = vpop.f32.mrf.mxu0
        %v2010 = vadd.f32 0.0, %v2009
        %v2011 = vpop.f32.mrf.mxu0
        %v2012 = vpop.f32.mrf.mxu0
        %v2013 = vadd.f32 0.0, %v2012
        %v2014 = vpop.f32.mrf.mxu0
        %2015 = vmatprep.mubr.bf16.mxu0 0
        %2016 = vmatmul.mubr.bf16.gmra.mxu0 %v1188
        %v2017 = vpop.f32.mrf.mxu0
        %v2018 = vadd.f32 0.0, %v2017
        %v2019 = vpop.f32.mrf.mxu0
        %v2020 = vpop.f32.mrf.mxu0
        %v2021 = vadd.f32 0.0, %v2020
        %v2022 = vpop.f32.mrf.mxu0
        %2023 = vmatprep.mubr.bf16.mxu0 0
        %2024 = vmatmul.mubr.bf16.gmra.mxu0 %v1191
        %v2025 = vpop.f32.mrf.mxu0
        %v2026 = vadd.f32 0.0, %v2025
        %v2027 = vpop.f32.mrf.mxu0
        %v2028 = vpop.f32.mrf.mxu0
        %v2029 = vadd.f32 0.0, %v2028
        %v2030 = vpop.f32.mrf.mxu0
        %2031 = vmatprep.mubr.bf16.mxu0 0
        %2032 = vmatmul.mubr.bf16.gmra.mxu0 %v1194
        %v2033 = vpop.f32.mrf.mxu0
        %v2034 = vadd.f32 0.0, %v2033
        %v2035 = vpop.f32.mrf.mxu0
        %v2036 = vpop.f32.mrf.mxu0
        %v2037 = vadd.f32 0.0, %v2036
        %v2038 = vpop.f32.mrf.mxu0
        %2039 = vmatprep.mubr.bf16.mxu0 0
        %2040 = vmatmul.mubr.bf16.gmra.mxu0 %v1885
        %v2041 = vpop.f32.mrf.mxu0
        %v2042 = vadd.f32 0.0, %v2041
        %v2043 = vpop.f32.mrf.mxu0
        %v2044 = vpop.f32.mrf.mxu0
        %v2045 = vadd.f32 0.0, %v2044
        %v2046 = vpop.f32.mrf.mxu0
        %2047 = vdwg.mxu0
        %v2048 = vadd.f32 %v1814, %v1922
        %v2049 = vadd.f32 %v1815, %v1925
        %v2050 = vadd.f32 %v1816, %v1930
        %v2051 = vadd.f32 %v1817, %v1933
        %v2052 = vadd.f32 %v1818, %v1938
        %v2053 = vadd.f32 %v1819, %v1941
        %v2054 = vadd.f32 %v1820, %v1946
        %v2055 = vadd.f32 %v1821, %v1949
        %v2056 = vadd.f32 %v1822, %v1954
        %v2057 = vadd.f32 %v1823, %v1957
        %v2058 = vadd.f32 %v1824, %v1962
        %v2059 = vadd.f32 %v1825, %v1965
        %v2060 = vadd.f32 %v1826, %v1970
        %v2061 = vadd.f32 %v1827, %v1973
        %v2062 = vadd.f32 %v1828, %v1978
        %v2063 = vadd.f32 %v1829, %v1981
        %v2064 = vadd.f32 %v1830, %v1986
        %v2065 = vadd.f32 %v1831, %v1989
        %v2066 = vadd.f32 %v1832, %v1994
        %v2067 = vadd.f32 %v1833, %v1997
        %v2068 = vadd.f32 %v1834, %v2002
        %v2069 = vadd.f32 %v1835, %v2005
        %v2070 = vadd.f32 %v1836, %v2010
        %v2071 = vadd.f32 %v1837, %v2013
        %v2072 = vadd.f32 %v1838, %v2018
        %v2073 = vadd.f32 %v1839, %v2021
        %v2074 = vadd.f32 %v1840, %v2026
        %v2075 = vadd.f32 %v1841, %v2029
        %v2076 = vadd.f32 %v1842, %v2034
        %v2077 = vadd.f32 %v1843, %v2037
        %v2078 = vadd.f32 %v1844, %v2042
        %v2079 = vadd.f32 %v1845, %v2045
        %s2080 = scalar_lea.vmem %s2, 192
        %v2081 = vld [vmem:[%s2080] sm:$0xf]
        %v2082 = vld [vmem:[%s2080 + $0x4] sm:$0xf]
        %v2083 = vld [vmem:[%s2080 + $0x8] sm:$0xf]
        %v2084 = vld [vmem:[%s2080 + $0xc] sm:$0xf]
        %v2085 = vld [vmem:[%s2080 + $0x10] sm:$0xf]
        %v2086 = vld [vmem:[%s2080 + $0x14] sm:$0xf]
        %v2087 = vld [vmem:[%s2080 + $0x18] sm:$0xf]
        %v2088 = vld [vmem:[%s2080 + $0x1c] sm:$0xf]
        %v2097 = vunpack.c.l.b16 %v2081
        %v2098 = vunpack.c.l.b16 %v2082
        %v2099 = vunpack.c.l.b16 %v2083
        %v2100 = vunpack.c.l.b16 %v2084
        %v2101 = vunpack.c.l.b16 %v2085
        %v2102 = vunpack.c.l.b16 %v2086
        %v2103 = vunpack.c.l.b16 %v2087
        %v2104 = vunpack.c.l.b16 %v2088
        %v2105 = vpack.c.b16 %v2098, %v2097
        %v2106 = vpack.c.b16 %v2100, %v2099
        %v2107 = vpack.c.b16 %v2102, %v2101
        %v2108 = vpack.c.b16 %v2104, %v2103
        %v2114 = vsel %vm607, %v359, 0
        %2116 = vmatprep.subr.bf16.mxu0 0
        %2117 = vmatpush1.bf16.msra.mxu0 0
        %2118 = vmatprep.subr.bf16.mxu0 0
        %2119 = vmatpush1.bf16.msra.mxu0 0
        %2120 = vmatprep.subr.bf16.mxu0 0
        %2121 = vmatpush1.bf16.msra.mxu0 0
        %2122 = vmatprep.subr.bf16.mxu0 0
        %2123 = vmatpush1.bf16.msra.mxu0 0
        %2124 = vmatprep.subr.bf16.mxu0 0
        %2125 = vmatpush1.bf16.msra.mxu0 %v2108
        %2126 = vmatprep.subr.bf16.mxu0 0
        %2127 = vmatpush1.bf16.msra.mxu0 %v2107
        %2128 = vmatprep.subr.bf16.mxu0 0
        %2129 = vmatpush1.bf16.msra.mxu0 %v2106
        %2130 = vmatprep.subr.bf16.mxu0 0
        %2131 = vmatpush1.bf16.msra.mxu0 %v2105
        %2132 = vmatprep.subr.bf16.mxu0 0
        %2133 = vmatpush2.bf16.msra.mxu0 0
        %2134 = vmatprep.subr.bf16.mxu0 0
        %2135 = vmatpush2.bf16.msra.mxu0 0
        %2136 = vmatprep.subr.bf16.mxu0 0
        %2137 = vmatpush2.bf16.msra.mxu0 0
        %2138 = vmatprep.subr.bf16.mxu0 0
        %2139 = vmatpush2.bf16.msra.mxu0 0
        %2140 = vmatprep.subr.bf16.mxu0 0
        %2141 = vmatpush2.bf16.msra.mxu0 0
        %2142 = vmatprep.subr.bf16.mxu0 0
        %2143 = vmatpush2.bf16.msra.mxu0 0
        %2144 = vmatprep.subr.bf16.mxu0 0
        %2145 = vmatpush2.bf16.msra.mxu0 0
        %2146 = vmatprep.subr.bf16.mxu0 0
        %2147 = vmatpush2.bf16.msra.mxu0 0
        %2148 = vmatprep.mubr.bf16.mxu0 0
        %2149 = vmatmul.mubr.bf16.gmra.mxu0 %v845
        %v2150 = vpop.f32.mrf.mxu0
        %v2151 = vadd.f32 0.0, %v2150
        %v2152 = vpop.f32.mrf.mxu0
        %v2153 = vpop.f32.mrf.mxu0
        %v2154 = vadd.f32 0.0, %v2153
        %v2155 = vpop.f32.mrf.mxu0
        %2156 = vmatprep.mubr.bf16.mxu0 0
        %2157 = vmatmul.mubr.bf16.gmra.mxu0 %v847
        %v2158 = vpop.f32.mrf.mxu0
        %v2159 = vadd.f32 0.0, %v2158
        %v2160 = vpop.f32.mrf.mxu0
        %v2161 = vpop.f32.mrf.mxu0
        %v2162 = vadd.f32 0.0, %v2161
        %v2163 = vpop.f32.mrf.mxu0
        %2164 = vmatprep.mubr.bf16.mxu0 0
        %2165 = vmatmul.mubr.bf16.gmra.mxu0 %v849
        %v2166 = vpop.f32.mrf.mxu0
        %v2167 = vadd.f32 0.0, %v2166
        %v2168 = vpop.f32.mrf.mxu0
        %v2169 = vpop.f32.mrf.mxu0
        %v2170 = vadd.f32 0.0, %v2169
        %v2171 = vpop.f32.mrf.mxu0
        %2172 = vmatprep.mubr.bf16.mxu0 0
        %2173 = vmatmul.mubr.bf16.gmra.mxu0 %v851
        %v2174 = vpop.f32.mrf.mxu0
        %v2175 = vadd.f32 0.0, %v2174
        %v2176 = vpop.f32.mrf.mxu0
        %v2177 = vpop.f32.mrf.mxu0
        %v2178 = vadd.f32 0.0, %v2177
        %v2179 = vpop.f32.mrf.mxu0
        %2180 = vmatprep.mubr.bf16.mxu0 0
        %2181 = vmatmul.mubr.bf16.gmra.mxu0 %v853
        %v2182 = vpop.f32.mrf.mxu0
        %v2183 = vadd.f32 0.0, %v2182
        %v2184 = vpop.f32.mrf.mxu0
        %v2185 = vpop.f32.mrf.mxu0
        %v2186 = vadd.f32 0.0, %v2185
        %v2187 = vpop.f32.mrf.mxu0
        %2188 = vmatprep.mubr.bf16.mxu0 0
        %2189 = vmatmul.mubr.bf16.gmra.mxu0 %v855
        %v2190 = vpop.f32.mrf.mxu0
        %v2191 = vadd.f32 0.0, %v2190
        %v2192 = vpop.f32.mrf.mxu0
        %v2193 = vpop.f32.mrf.mxu0
        %v2194 = vadd.f32 0.0, %v2193
        %v2195 = vpop.f32.mrf.mxu0
        %2196 = vmatprep.mubr.bf16.mxu0 0
        %2197 = vmatmul.mubr.bf16.gmra.mxu0 %v857
        %v2198 = vpop.f32.mrf.mxu0
        %v2199 = vadd.f32 0.0, %v2198
        %v2200 = vpop.f32.mrf.mxu0
        %v2201 = vpop.f32.mrf.mxu0
        %v2202 = vadd.f32 0.0, %v2201
        %v2203 = vpop.f32.mrf.mxu0
        %2204 = vmatprep.mubr.bf16.mxu0 0
        %2205 = vmatmul.mubr.bf16.gmra.mxu0 %v859
        %v2206 = vpop.f32.mrf.mxu0
        %v2207 = vadd.f32 0.0, %v2206
        %v2208 = vpop.f32.mrf.mxu0
        %v2209 = vpop.f32.mrf.mxu0
        %v2210 = vadd.f32 0.0, %v2209
        %v2211 = vpop.f32.mrf.mxu0
        %2212 = vmatprep.mubr.bf16.mxu0 0
        %2213 = vmatmul.mubr.bf16.gmra.mxu0 %v861
        %v2214 = vpop.f32.mrf.mxu0
        %v2215 = vadd.f32 0.0, %v2214
        %v2216 = vpop.f32.mrf.mxu0
        %v2217 = vpop.f32.mrf.mxu0
        %v2218 = vadd.f32 0.0, %v2217
        %v2219 = vpop.f32.mrf.mxu0
        %2220 = vmatprep.mubr.bf16.mxu0 0
        %2221 = vmatmul.mubr.bf16.gmra.mxu0 %v863
        %v2222 = vpop.f32.mrf.mxu0
        %v2223 = vadd.f32 0.0, %v2222
        %v2224 = vpop.f32.mrf.mxu0
        %v2225 = vpop.f32.mrf.mxu0
        %v2226 = vadd.f32 0.0, %v2225
        %v2227 = vpop.f32.mrf.mxu0
        %2228 = vmatprep.mubr.bf16.mxu0 0
        %2229 = vmatmul.mubr.bf16.gmra.mxu0 %v865
        %v2230 = vpop.f32.mrf.mxu0
        %v2231 = vadd.f32 0.0, %v2230
        %v2232 = vpop.f32.mrf.mxu0
        %v2233 = vpop.f32.mrf.mxu0
        %v2234 = vadd.f32 0.0, %v2233
        %v2235 = vpop.f32.mrf.mxu0
        %2236 = vmatprep.mubr.bf16.mxu0 0
        %2237 = vmatmul.mubr.bf16.gmra.mxu0 %v867
        %v2238 = vpop.f32.mrf.mxu0
        %v2239 = vadd.f32 0.0, %v2238
        %v2240 = vpop.f32.mrf.mxu0
        %v2241 = vpop.f32.mrf.mxu0
        %v2242 = vadd.f32 0.0, %v2241
        %v2243 = vpop.f32.mrf.mxu0
        %2244 = vmatprep.mubr.bf16.mxu0 0
        %2245 = vmatmul.mubr.bf16.gmra.mxu0 %v869
        %v2246 = vpop.f32.mrf.mxu0
        %v2247 = vadd.f32 0.0, %v2246
        %v2248 = vpop.f32.mrf.mxu0
        %v2249 = vpop.f32.mrf.mxu0
        %v2250 = vadd.f32 0.0, %v2249
        %v2251 = vpop.f32.mrf.mxu0
        %2252 = vmatprep.mubr.bf16.mxu0 0
        %2253 = vmatmul.mubr.bf16.gmra.mxu0 %v871
        %v2254 = vpop.f32.mrf.mxu0
        %v2255 = vadd.f32 0.0, %v2254
        %v2256 = vpop.f32.mrf.mxu0
        %v2257 = vpop.f32.mrf.mxu0
        %v2258 = vadd.f32 0.0, %v2257
        %v2259 = vpop.f32.mrf.mxu0
        %2260 = vmatprep.mubr.bf16.mxu0 0
        %2261 = vmatmul.mubr.bf16.gmra.mxu0 %v1422
        %v2262 = vpop.f32.mrf.mxu0
        %v2263 = vadd.f32 0.0, %v2262
        %v2264 = vpop.f32.mrf.mxu0
        %v2265 = vpop.f32.mrf.mxu0
        %v2266 = vadd.f32 0.0, %v2265
        %v2267 = vpop.f32.mrf.mxu0
        %2268 = vmatprep.mubr.bf16.mxu0 0
        %2269 = vmatmul.mubr.bf16.gmra.mxu0 %v2114
        %v2270 = vpop.f32.mrf.mxu0
        %v2271 = vadd.f32 0.0, %v2270
        %v2272 = vpop.f32.mrf.mxu0
        %v2273 = vpop.f32.mrf.mxu0
        %v2274 = vadd.f32 0.0, %v2273
        %v2275 = vpop.f32.mrf.mxu0
        %2276 = vdwg.mxu0
        %v2277 = vadd.f32 %v2048, %v2151
        %v2278 = vadd.f32 %v2049, %v2154
        %v2279 = vadd.f32 %v2050, %v2159
        %v2280 = vadd.f32 %v2051, %v2162
        %v2281 = vadd.f32 %v2052, %v2167
        %v2282 = vadd.f32 %v2053, %v2170
        %v2283 = vadd.f32 %v2054, %v2175
        %v2284 = vadd.f32 %v2055, %v2178
        %v2285 = vadd.f32 %v2056, %v2183
        %v2286 = vadd.f32 %v2057, %v2186
        %v2287 = vadd.f32 %v2058, %v2191
        %v2288 = vadd.f32 %v2059, %v2194
        %v2289 = vadd.f32 %v2060, %v2199
        %v2290 = vadd.f32 %v2061, %v2202
        %v2291 = vadd.f32 %v2062, %v2207
        %v2292 = vadd.f32 %v2063, %v2210
        %v2293 = vadd.f32 %v2064, %v2215
        %v2294 = vadd.f32 %v2065, %v2218
        %v2295 = vadd.f32 %v2066, %v2223
        %v2296 = vadd.f32 %v2067, %v2226
        %v2297 = vadd.f32 %v2068, %v2231
        %v2298 = vadd.f32 %v2069, %v2234
        %v2299 = vadd.f32 %v2070, %v2239
        %v2300 = vadd.f32 %v2071, %v2242
        %v2301 = vadd.f32 %v2072, %v2247
        %v2302 = vadd.f32 %v2073, %v2250
        %v2303 = vadd.f32 %v2074, %v2255
        %v2304 = vadd.f32 %v2075, %v2258
        %v2305 = vadd.f32 %v2076, %v2263
        %v2306 = vadd.f32 %v2077, %v2266
        %v2307 = vadd.f32 %v2078, %v2271
        %v2308 = vadd.f32 %v2079, %v2274
        %v2309 = vshrl.u32 %v359, 16
        %v2311 = vshll.u32 %v359, 16
        %v2313 = vrot.slane %v2311, 1
        %v2314 = vor.u32 %v2309, %v2313
        %v2316 = vshll.u32 %v360, 16
        %v2318 = vrot.slane %v2316, 1
        %v2319 = vsel %vm361, %v2314, %v2318
        %s2320 = scalar_lea.vmem %s2, 224
        %v2321 = vld [vmem:[%s2320] sm:$0xf]
        %v2322 = vld [vmem:[%s2320 + $0x4] sm:$0xf]
        %v2323 = vld [vmem:[%s2320 + $0x8] sm:$0xf]
        %v2324 = vld [vmem:[%s2320 + $0xc] sm:$0xf]
        %v2325 = vld [vmem:[%s2320 + $0x10] sm:$0xf]
        %v2326 = vld [vmem:[%s2320 + $0x14] sm:$0xf]
        %v2327 = vld [vmem:[%s2320 + $0x18] sm:$0xf]
        %v2328 = vld [vmem:[%s2320 + $0x1c] sm:$0xf]
        %v2337 = vunpack.c.l.b16 %v2321
        %v2338 = vunpack.c.l.b16 %v2322
        %v2339 = vunpack.c.l.b16 %v2323
        %v2340 = vunpack.c.l.b16 %v2324
        %v2341 = vunpack.c.l.b16 %v2325
        %v2342 = vunpack.c.l.b16 %v2326
        %v2343 = vunpack.c.l.b16 %v2327
        %v2344 = vunpack.c.l.b16 %v2328
        %v2345 = vpack.c.b16 %v2338, %v2337
        %v2346 = vpack.c.b16 %v2340, %v2339
        %v2347 = vpack.c.b16 %v2342, %v2341
        %v2348 = vpack.c.b16 %v2344, %v2343
        %v2354 = vsel %vm607, %v2319, 0
        %2356 = vmatprep.subr.bf16.mxu0 0
        %2357 = vmatpush1.bf16.msra.mxu0 0
        %2358 = vmatprep.subr.bf16.mxu0 0
        %2359 = vmatpush1.bf16.msra.mxu0 0
        %2360 = vmatprep.subr.bf16.mxu0 0
        %2361 = vmatpush1.bf16.msra.mxu0 0
        %2362 = vmatprep.subr.bf16.mxu0 0
        %2363 = vmatpush1.bf16.msra.mxu0 0
        %2364 = vmatprep.subr.bf16.mxu0 0
        %2365 = vmatpush1.bf16.msra.mxu0 %v2348
        %2366 = vmatprep.subr.bf16.mxu0 0
        %2367 = vmatpush1.bf16.msra.mxu0 %v2347
        %2368 = vmatprep.subr.bf16.mxu0 0
        %2369 = vmatpush1.bf16.msra.mxu0 %v2346
        %2370 = vmatprep.subr.bf16.mxu0 0
        %2371 = vmatpush1.bf16.msra.mxu0 %v2345
        %2372 = vmatprep.subr.bf16.mxu0 0
        %2373 = vmatpush2.bf16.msra.mxu0 0
        %2374 = vmatprep.subr.bf16.mxu0 0
        %2375 = vmatpush2.bf16.msra.mxu0 0
        %2376 = vmatprep.subr.bf16.mxu0 0
        %2377 = vmatpush2.bf16.msra.mxu0 0
        %2378 = vmatprep.subr.bf16.mxu0 0
        %2379 = vmatpush2.bf16.msra.mxu0 0
        %2380 = vmatprep.subr.bf16.mxu0 0
        %2381 = vmatpush2.bf16.msra.mxu0 0
        %2382 = vmatprep.subr.bf16.mxu0 0
        %2383 = vmatpush2.bf16.msra.mxu0 0
        %2384 = vmatprep.subr.bf16.mxu0 0
        %2385 = vmatpush2.bf16.msra.mxu0 0
        %2386 = vmatprep.subr.bf16.mxu0 0
        %2387 = vmatpush2.bf16.msra.mxu0 0
        %2388 = vmatprep.mubr.bf16.mxu0 0
        %2389 = vmatmul.mubr.bf16.gmra.mxu0 %v615
        %v2390 = vpop.f32.mrf.mxu0
        %v2391 = vadd.f32 0.0, %v2390
        %v2392 = vpop.f32.mrf.mxu0
        %v2393 = vpop.f32.mrf.mxu0
        %v2394 = vadd.f32 0.0, %v2393
        %v2395 = vpop.f32.mrf.mxu0
        %2396 = vmatprep.mubr.bf16.mxu0 0
        %2397 = vmatmul.mubr.bf16.gmra.mxu0 %v618
        %v2398 = vpop.f32.mrf.mxu0
        %v2399 = vadd.f32 0.0, %v2398
        %v2400 = vpop.f32.mrf.mxu0
        %v2401 = vpop.f32.mrf.mxu0
        %v2402 = vadd.f32 0.0, %v2401
        %v2403 = vpop.f32.mrf.mxu0
        %2404 = vmatprep.mubr.bf16.mxu0 0
        %2405 = vmatmul.mubr.bf16.gmra.mxu0 %v621
        %v2406 = vpop.f32.mrf.mxu0
        %v2407 = vadd.f32 0.0, %v2406
        %v2408 = vpop.f32.mrf.mxu0
        %v2409 = vpop.f32.mrf.mxu0
        %v2410 = vadd.f32 0.0, %v2409
        %v2411 = vpop.f32.mrf.mxu0
        %2412 = vmatprep.mubr.bf16.mxu0 0
        %2413 = vmatmul.mubr.bf16.gmra.mxu0 %v624
        %v2414 = vpop.f32.mrf.mxu0
        %v2415 = vadd.f32 0.0, %v2414
        %v2416 = vpop.f32.mrf.mxu0
        %v2417 = vpop.f32.mrf.mxu0
        %v2418 = vadd.f32 0.0, %v2417
        %v2419 = vpop.f32.mrf.mxu0
        %2420 = vmatprep.mubr.bf16.mxu0 0
        %2421 = vmatmul.mubr.bf16.gmra.mxu0 %v627
        %v2422 = vpop.f32.mrf.mxu0
        %v2423 = vadd.f32 0.0, %v2422
        %v2424 = vpop.f32.mrf.mxu0
        %v2425 = vpop.f32.mrf.mxu0
        %v2426 = vadd.f32 0.0, %v2425
        %v2427 = vpop.f32.mrf.mxu0
        %2428 = vmatprep.mubr.bf16.mxu0 0
        %2429 = vmatmul.mubr.bf16.gmra.mxu0 %v630
        %v2430 = vpop.f32.mrf.mxu0
        %v2431 = vadd.f32 0.0, %v2430
        %v2432 = vpop.f32.mrf.mxu0
        %v2433 = vpop.f32.mrf.mxu0
        %v2434 = vadd.f32 0.0, %v2433
        %v2435 = vpop.f32.mrf.mxu0
        %2436 = vmatprep.mubr.bf16.mxu0 0
        %2437 = vmatmul.mubr.bf16.gmra.mxu0 %v633
        %v2438 = vpop.f32.mrf.mxu0
        %v2439 = vadd.f32 0.0, %v2438
        %v2440 = vpop.f32.mrf.mxu0
        %v2441 = vpop.f32.mrf.mxu0
        %v2442 = vadd.f32 0.0, %v2441
        %v2443 = vpop.f32.mrf.mxu0
        %2444 = vmatprep.mubr.bf16.mxu0 0
        %2445 = vmatmul.mubr.bf16.gmra.mxu0 %v636
        %v2446 = vpop.f32.mrf.mxu0
        %v2447 = vadd.f32 0.0, %v2446
        %v2448 = vpop.f32.mrf.mxu0
        %v2449 = vpop.f32.mrf.mxu0
        %v2450 = vadd.f32 0.0, %v2449
        %v2451 = vpop.f32.mrf.mxu0
        %2452 = vmatprep.mubr.bf16.mxu0 0
        %2453 = vmatmul.mubr.bf16.gmra.mxu0 %v639
        %v2454 = vpop.f32.mrf.mxu0
        %v2455 = vadd.f32 0.0, %v2454
        %v2456 = vpop.f32.mrf.mxu0
        %v2457 = vpop.f32.mrf.mxu0
        %v2458 = vadd.f32 0.0, %v2457
        %v2459 = vpop.f32.mrf.mxu0
        %2460 = vmatprep.mubr.bf16.mxu0 0
        %2461 = vmatmul.mubr.bf16.gmra.mxu0 %v642
        %v2462 = vpop.f32.mrf.mxu0
        %v2463 = vadd.f32 0.0, %v2462
        %v2464 = vpop.f32.mrf.mxu0
        %v2465 = vpop.f32.mrf.mxu0
        %v2466 = vadd.f32 0.0, %v2465
        %v2467 = vpop.f32.mrf.mxu0
        %2468 = vmatprep.mubr.bf16.mxu0 0
        %2469 = vmatmul.mubr.bf16.gmra.mxu0 %v645
        %v2470 = vpop.f32.mrf.mxu0
        %v2471 = vadd.f32 0.0, %v2470
        %v2472 = vpop.f32.mrf.mxu0
        %v2473 = vpop.f32.mrf.mxu0
        %v2474 = vadd.f32 0.0, %v2473
        %v2475 = vpop.f32.mrf.mxu0
        %2476 = vmatprep.mubr.bf16.mxu0 0
        %2477 = vmatmul.mubr.bf16.gmra.mxu0 %v648
        %v2478 = vpop.f32.mrf.mxu0
        %v2479 = vadd.f32 0.0, %v2478
        %v2480 = vpop.f32.mrf.mxu0
        %v2481 = vpop.f32.mrf.mxu0
        %v2482 = vadd.f32 0.0, %v2481
        %v2483 = vpop.f32.mrf.mxu0
        %2484 = vmatprep.mubr.bf16.mxu0 0
        %2485 = vmatmul.mubr.bf16.gmra.mxu0 %v651
        %v2486 = vpop.f32.mrf.mxu0
        %v2487 = vadd.f32 0.0, %v2486
        %v2488 = vpop.f32.mrf.mxu0
        %v2489 = vpop.f32.mrf.mxu0
        %v2490 = vadd.f32 0.0, %v2489
        %v2491 = vpop.f32.mrf.mxu0
        %2492 = vmatprep.mubr.bf16.mxu0 0
        %2493 = vmatmul.mubr.bf16.gmra.mxu0 %v654
        %v2494 = vpop.f32.mrf.mxu0
        %v2495 = vadd.f32 0.0, %v2494
        %v2496 = vpop.f32.mrf.mxu0
        %v2497 = vpop.f32.mrf.mxu0
        %v2498 = vadd.f32 0.0, %v2497
        %v2499 = vpop.f32.mrf.mxu0
        %2500 = vmatprep.mubr.bf16.mxu0 0
        %2501 = vmatmul.mubr.bf16.gmra.mxu0 %v1651
        %v2502 = vpop.f32.mrf.mxu0
        %v2503 = vadd.f32 0.0, %v2502
        %v2504 = vpop.f32.mrf.mxu0
        %v2505 = vpop.f32.mrf.mxu0
        %v2506 = vadd.f32 0.0, %v2505
        %v2507 = vpop.f32.mrf.mxu0
        %2508 = vmatprep.mubr.bf16.mxu0 0
        %2509 = vmatmul.mubr.bf16.gmra.mxu0 %v2354
        %v2510 = vpop.f32.mrf.mxu0
        %v2511 = vadd.f32 0.0, %v2510
        %v2512 = vpop.f32.mrf.mxu0
        %v2513 = vpop.f32.mrf.mxu0
        %v2514 = vadd.f32 0.0, %v2513
        %v2515 = vpop.f32.mrf.mxu0
        %2516 = vdwg.mxu0
        %v2517 = vadd.f32 %v2277, %v2391
        %v2518 = vadd.f32 %v2278, %v2394
        %v2519 = vadd.f32 %v2279, %v2399
        %v2520 = vadd.f32 %v2280, %v2402
        %v2521 = vadd.f32 %v2281, %v2407
        %v2522 = vadd.f32 %v2282, %v2410
        %v2523 = vadd.f32 %v2283, %v2415
        %v2524 = vadd.f32 %v2284, %v2418
        %v2525 = vadd.f32 %v2285, %v2423
        %v2526 = vadd.f32 %v2286, %v2426
        %v2527 = vadd.f32 %v2287, %v2431
        %v2528 = vadd.f32 %v2288, %v2434
        %v2529 = vadd.f32 %v2289, %v2439
        %v2530 = vadd.f32 %v2290, %v2442
        %v2531 = vadd.f32 %v2291, %v2447
        %v2532 = vadd.f32 %v2292, %v2450
        %v2533 = vadd.f32 %v2293, %v2455
        %v2534 = vadd.f32 %v2294, %v2458
        %v2535 = vadd.f32 %v2295, %v2463
        %v2536 = vadd.f32 %v2296, %v2466
        %v2537 = vadd.f32 %v2297, %v2471
        %v2538 = vadd.f32 %v2298, %v2474
        %v2539 = vadd.f32 %v2299, %v2479
        %v2540 = vadd.f32 %v2300, %v2482
        %v2541 = vadd.f32 %v2301, %v2487
        %v2542 = vadd.f32 %v2302, %v2490
        %v2543 = vadd.f32 %v2303, %v2495
        %v2544 = vadd.f32 %v2304, %v2498
        %v2545 = vadd.f32 %v2305, %v2503
        %v2546 = vadd.f32 %v2306, %v2506
        %v2547 = vadd.f32 %v2307, %v2511
        %v2548 = vadd.f32 %v2308, %v2514
        %v2551 = vrot.slane %v359, 1
        %v2552 = vrot.slane %v360, 1
        %v2553 = vsel %vm1066, %v2551, %v2552
        %s2554 = scalar_lea.vmem %s2, 256
        %v2555 = vld [vmem:[%s2554] sm:$0xf]
        %v2556 = vld [vmem:[%s2554 + $0x4] sm:$0xf]
        %v2557 = vld [vmem:[%s2554 + $0x8] sm:$0xf]
        %v2558 = vld [vmem:[%s2554 + $0xc] sm:$0xf]
        %v2559 = vld [vmem:[%s2554 + $0x10] sm:$0xf]
        %v2560 = vld [vmem:[%s2554 + $0x14] sm:$0xf]
        %v2561 = vld [vmem:[%s2554 + $0x18] sm:$0xf]
        %v2562 = vld [vmem:[%s2554 + $0x1c] sm:$0xf]
        %v2571 = vunpack.c.l.b16 %v2555
        %v2572 = vunpack.c.l.b16 %v2556
        %v2573 = vunpack.c.l.b16 %v2557
        %v2574 = vunpack.c.l.b16 %v2558
        %v2575 = vunpack.c.l.b16 %v2559
        %v2576 = vunpack.c.l.b16 %v2560
        %v2577 = vunpack.c.l.b16 %v2561
        %v2578 = vunpack.c.l.b16 %v2562
        %v2579 = vpack.c.b16 %v2572, %v2571
        %v2580 = vpack.c.b16 %v2574, %v2573
        %v2581 = vpack.c.b16 %v2576, %v2575
        %v2582 = vpack.c.b16 %v2578, %v2577
        %v2588 = vsel %vm607, %v2553, 0
        %2590 = vmatprep.subr.bf16.mxu0 0
        %2591 = vmatpush1.bf16.msra.mxu0 0
        %2592 = vmatprep.subr.bf16.mxu0 0
        %2593 = vmatpush1.bf16.msra.mxu0 0
        %2594 = vmatprep.subr.bf16.mxu0 0
        %2595 = vmatpush1.bf16.msra.mxu0 0
        %2596 = vmatprep.subr.bf16.mxu0 0
        %2597 = vmatpush1.bf16.msra.mxu0 0
        %2598 = vmatprep.subr.bf16.mxu0 0
        %2599 = vmatpush1.bf16.msra.mxu0 %v2582
        %2600 = vmatprep.subr.bf16.mxu0 0
        %2601 = vmatpush1.bf16.msra.mxu0 %v2581
        %2602 = vmatprep.subr.bf16.mxu0 0
        %2603 = vmatpush1.bf16.msra.mxu0 %v2580
        %2604 = vmatprep.subr.bf16.mxu0 0
        %2605 = vmatpush1.bf16.msra.mxu0 %v2579
        %2606 = vmatprep.subr.bf16.mxu0 0
        %2607 = vmatpush2.bf16.msra.mxu0 0
        %2608 = vmatprep.subr.bf16.mxu0 0
        %2609 = vmatpush2.bf16.msra.mxu0 0
        %2610 = vmatprep.subr.bf16.mxu0 0
        %2611 = vmatpush2.bf16.msra.mxu0 0
        %2612 = vmatprep.subr.bf16.mxu0 0
        %2613 = vmatpush2.bf16.msra.mxu0 0
        %2614 = vmatprep.subr.bf16.mxu0 0
        %2615 = vmatpush2.bf16.msra.mxu0 0
        %2616 = vmatprep.subr.bf16.mxu0 0
        %2617 = vmatpush2.bf16.msra.mxu0 0
        %2618 = vmatprep.subr.bf16.mxu0 0
        %2619 = vmatpush2.bf16.msra.mxu0 0
        %2620 = vmatprep.subr.bf16.mxu0 0
        %2621 = vmatpush2.bf16.msra.mxu0 0
        %2622 = vmatprep.mubr.bf16.mxu0 0
        %2623 = vmatmul.mubr.bf16.gmra.mxu0 %v1155
        %v2624 = vpop.f32.mrf.mxu0
        %v2625 = vadd.f32 0.0, %v2624
        %v2626 = vpop.f32.mrf.mxu0
        %v2627 = vpop.f32.mrf.mxu0
        %v2628 = vadd.f32 0.0, %v2627
        %v2629 = vpop.f32.mrf.mxu0
        %2630 = vmatprep.mubr.bf16.mxu0 0
        %2631 = vmatmul.mubr.bf16.gmra.mxu0 %v1158
        %v2632 = vpop.f32.mrf.mxu0
        %v2633 = vadd.f32 0.0, %v2632
        %v2634 = vpop.f32.mrf.mxu0
        %v2635 = vpop.f32.mrf.mxu0
        %v2636 = vadd.f32 0.0, %v2635
        %v2637 = vpop.f32.mrf.mxu0
        %2638 = vmatprep.mubr.bf16.mxu0 0
        %2639 = vmatmul.mubr.bf16.gmra.mxu0 %v1161
        %v2640 = vpop.f32.mrf.mxu0
        %v2641 = vadd.f32 0.0, %v2640
        %v2642 = vpop.f32.mrf.mxu0
        %v2643 = vpop.f32.mrf.mxu0
        %v2644 = vadd.f32 0.0, %v2643
        %v2645 = vpop.f32.mrf.mxu0
        %2646 = vmatprep.mubr.bf16.mxu0 0
        %2647 = vmatmul.mubr.bf16.gmra.mxu0 %v1164
        %v2648 = vpop.f32.mrf.mxu0
        %v2649 = vadd.f32 0.0, %v2648
        %v2650 = vpop.f32.mrf.mxu0
        %v2651 = vpop.f32.mrf.mxu0
        %v2652 = vadd.f32 0.0, %v2651
        %v2653 = vpop.f32.mrf.mxu0
        %2654 = vmatprep.mubr.bf16.mxu0 0
        %2655 = vmatmul.mubr.bf16.gmra.mxu0 %v1167
        %v2656 = vpop.f32.mrf.mxu0
        %v2657 = vadd.f32 0.0, %v2656
        %v2658 = vpop.f32.mrf.mxu0
        %v2659 = vpop.f32.mrf.mxu0
        %v2660 = vadd.f32 0.0, %v2659
        %v2661 = vpop.f32.mrf.mxu0
        %2662 = vmatprep.mubr.bf16.mxu0 0
        %2663 = vmatmul.mubr.bf16.gmra.mxu0 %v1170
        %v2664 = vpop.f32.mrf.mxu0
        %v2665 = vadd.f32 0.0, %v2664
        %v2666 = vpop.f32.mrf.mxu0
        %v2667 = vpop.f32.mrf.mxu0
        %v2668 = vadd.f32 0.0, %v2667
        %v2669 = vpop.f32.mrf.mxu0
        %2670 = vmatprep.mubr.bf16.mxu0 0
        %2671 = vmatmul.mubr.bf16.gmra.mxu0 %v1173
        %v2672 = vpop.f32.mrf.mxu0
        %v2673 = vadd.f32 0.0, %v2672
        %v2674 = vpop.f32.mrf.mxu0
        %v2675 = vpop.f32.mrf.mxu0
        %v2676 = vadd.f32 0.0, %v2675
        %v2677 = vpop.f32.mrf.mxu0
        %2678 = vmatprep.mubr.bf16.mxu0 0
        %2679 = vmatmul.mubr.bf16.gmra.mxu0 %v1176
        %v2680 = vpop.f32.mrf.mxu0
        %v2681 = vadd.f32 0.0, %v2680
        %v2682 = vpop.f32.mrf.mxu0
        %v2683 = vpop.f32.mrf.mxu0
        %v2684 = vadd.f32 0.0, %v2683
        %v2685 = vpop.f32.mrf.mxu0
        %2686 = vmatprep.mubr.bf16.mxu0 0
        %2687 = vmatmul.mubr.bf16.gmra.mxu0 %v1179
        %v2688 = vpop.f32.mrf.mxu0
        %v2689 = vadd.f32 0.0, %v2688
        %v2690 = vpop.f32.mrf.mxu0
        %v2691 = vpop.f32.mrf.mxu0
        %v2692 = vadd.f32 0.0, %v2691
        %v2693 = vpop.f32.mrf.mxu0
        %2694 = vmatprep.mubr.bf16.mxu0 0
        %2695 = vmatmul.mubr.bf16.gmra.mxu0 %v1182
        %v2696 = vpop.f32.mrf.mxu0
        %v2697 = vadd.f32 0.0, %v2696
        %v2698 = vpop.f32.mrf.mxu0
        %v2699 = vpop.f32.mrf.mxu0
        %v2700 = vadd.f32 0.0, %v2699
        %v2701 = vpop.f32.mrf.mxu0
        %2702 = vmatprep.mubr.bf16.mxu0 0
        %2703 = vmatmul.mubr.bf16.gmra.mxu0 %v1185
        %v2704 = vpop.f32.mrf.mxu0
        %v2705 = vadd.f32 0.0, %v2704
        %v2706 = vpop.f32.mrf.mxu0
        %v2707 = vpop.f32.mrf.mxu0
        %v2708 = vadd.f32 0.0, %v2707
        %v2709 = vpop.f32.mrf.mxu0
        %2710 = vmatprep.mubr.bf16.mxu0 0
        %2711 = vmatmul.mubr.bf16.gmra.mxu0 %v1188
        %v2712 = vpop.f32.mrf.mxu0
        %v2713 = vadd.f32 0.0, %v2712
        %v2714 = vpop.f32.mrf.mxu0
        %v2715 = vpop.f32.mrf.mxu0
        %v2716 = vadd.f32 0.0, %v2715
        %v2717 = vpop.f32.mrf.mxu0
        %2718 = vmatprep.mubr.bf16.mxu0 0
        %2719 = vmatmul.mubr.bf16.gmra.mxu0 %v1191
        %v2720 = vpop.f32.mrf.mxu0
        %v2721 = vadd.f32 0.0, %v2720
        %v2722 = vpop.f32.mrf.mxu0
        %v2723 = vpop.f32.mrf.mxu0
        %v2724 = vadd.f32 0.0, %v2723
        %v2725 = vpop.f32.mrf.mxu0
        %2726 = vmatprep.mubr.bf16.mxu0 0
        %2727 = vmatmul.mubr.bf16.gmra.mxu0 %v1194
        %v2728 = vpop.f32.mrf.mxu0
        %v2729 = vadd.f32 0.0, %v2728
        %v2730 = vpop.f32.mrf.mxu0
        %v2731 = vpop.f32.mrf.mxu0
        %v2732 = vadd.f32 0.0, %v2731
        %v2733 = vpop.f32.mrf.mxu0
        %2734 = vmatprep.mubr.bf16.mxu0 0
        %2735 = vmatmul.mubr.bf16.gmra.mxu0 %v1885
        %v2736 = vpop.f32.mrf.mxu0
        %v2737 = vadd.f32 0.0, %v2736
        %v2738 = vpop.f32.mrf.mxu0
        %v2739 = vpop.f32.mrf.mxu0
        %v2740 = vadd.f32 0.0, %v2739
        %v2741 = vpop.f32.mrf.mxu0
        %2742 = vmatprep.mubr.bf16.mxu0 0
        %2743 = vmatmul.mubr.bf16.gmra.mxu0 %v2588
        %v2744 = vpop.f32.mrf.mxu0
        %v2745 = vadd.f32 0.0, %v2744
        %v2746 = vpop.f32.mrf.mxu0
        %v2747 = vpop.f32.mrf.mxu0
        %v2748 = vadd.f32 0.0, %v2747
        %v2749 = vpop.f32.mrf.mxu0
        %2750 = vdwg.mxu0
        %v2751 = vadd.f32 %v2517, %v2625
        %v2752 = vadd.f32 %v2518, %v2628
        %v2753 = vadd.f32 %v2519, %v2633
        %v2754 = vadd.f32 %v2520, %v2636
        %v2755 = vadd.f32 %v2521, %v2641
        %v2756 = vadd.f32 %v2522, %v2644
        %v2757 = vadd.f32 %v2523, %v2649
        %v2758 = vadd.f32 %v2524, %v2652
        %v2759 = vadd.f32 %v2525, %v2657
        %v2760 = vadd.f32 %v2526, %v2660
        %v2761 = vadd.f32 %v2527, %v2665
        %v2762 = vadd.f32 %v2528, %v2668
        %v2763 = vadd.f32 %v2529, %v2673
        %v2764 = vadd.f32 %v2530, %v2676
        %v2765 = vadd.f32 %v2531, %v2681
        %v2766 = vadd.f32 %v2532, %v2684
        %v2767 = vadd.f32 %v2533, %v2689
        %v2768 = vadd.f32 %v2534, %v2692
        %v2769 = vadd.f32 %v2535, %v2697
        %v2770 = vadd.f32 %v2536, %v2700
        %v2771 = vadd.f32 %v2537, %v2705
        %v2772 = vadd.f32 %v2538, %v2708
        %v2773 = vadd.f32 %v2539, %v2713
        %v2774 = vadd.f32 %v2540, %v2716
        %v2775 = vadd.f32 %v2541, %v2721
        %v2776 = vadd.f32 %v2542, %v2724
        %v2777 = vadd.f32 %v2543, %v2729
        %v2778 = vadd.f32 %v2544, %v2732
        %v2779 = vadd.f32 %v2545, %v2737
        %v2780 = vadd.f32 %v2546, %v2740
        %v2781 = vadd.f32 %v2547, %v2745
        %v2782 = vadd.f32 %v2548, %v2748
        %v2783 = vpack.c.bf16 %v2752, %v2751
        %v2784 = vpack.c.bf16 %v2754, %v2753
        %v2785 = vpack.c.bf16 %v2756, %v2755
        %v2786 = vpack.c.bf16 %v2758, %v2757
        %v2787 = vpack.c.bf16 %v2760, %v2759
        %v2788 = vpack.c.bf16 %v2762, %v2761
        %v2789 = vpack.c.bf16 %v2764, %v2763
        %v2790 = vpack.c.bf16 %v2766, %v2765
        %v2791 = vpack.c.bf16 %v2768, %v2767
        %v2792 = vpack.c.bf16 %v2770, %v2769
        %v2793 = vpack.c.bf16 %v2772, %v2771
        %v2794 = vpack.c.bf16 %v2774, %v2773
        %v2795 = vpack.c.bf16 %v2776, %v2775
        %v2796 = vpack.c.bf16 %v2778, %v2777
        %v2797 = vpack.c.bf16 %v2780, %v2779
        %v2798 = vpack.c.bf16 %v2782, %v2781
        %v2799 = vld [vmem:[%s3] sm:$0xf]
        %v2800 = vld [vmem:[%s3 + $0xc] sm:$0xf]
        %v2801 = vld [vmem:[%s3 + $0x18] sm:$0xf]
        %v2802 = vld [vmem:[%s3 + $0x24] sm:$0xf]
        %v2803 = vld [vmem:[%s3 + $0x30] sm:$0xf]
        %v2804 = vld [vmem:[%s3 + $0x3c] sm:$0xf]
        %v2805 = vld [vmem:[%s3 + $0x48] sm:$0xf]
        %v2806 = vld [vmem:[%s3 + $0x54] sm:$0xf]
        %v2807 = vld [vmem:[%s3 + $0x60] sm:$0xf]
        %v2808 = vld [vmem:[%s3 + $0x6c] sm:$0xf]
        %v2809 = vld [vmem:[%s3 + $0x78] sm:$0xf]
        %v2810 = vld [vmem:[%s3 + $0x84] sm:$0xf]
        %v2811 = vld [vmem:[%s3 + $0x90] sm:$0xf]
        %v2812 = vld [vmem:[%s3 + $0x9c] sm:$0xf]
        %v2813 = vld [vmem:[%s3 + $0xa8] sm:$0xf]
        %v2814 = vld [vmem:[%s3 + $0xb4] sm:$0xf]
        %v2815 = vld [vmem:[%s4] sm:$0xf]
        %v2816 = vld [vmem:[%s4 + $0xc] sm:$0xf]
        %v2817 = vld [vmem:[%s4 + $0x18] sm:$0xf]
        %v2818 = vld [vmem:[%s4 + $0x24] sm:$0xf]
        %v2819 = vld [vmem:[%s4 + $0x30] sm:$0xf]
        %v2820 = vld [vmem:[%s4 + $0x3c] sm:$0xf]
        %v2821 = vld [vmem:[%s4 + $0x48] sm:$0xf]
        %v2822 = vld [vmem:[%s4 + $0x54] sm:$0xf]
        %v2831 = vunpack.c.l.b16 %v2815
        %v2832 = vunpack.c.l.b16 %v2816
        %v2833 = vunpack.c.l.b16 %v2817
        %v2834 = vunpack.c.l.b16 %v2818
        %v2835 = vunpack.c.l.b16 %v2819
        %v2836 = vunpack.c.l.b16 %v2820
        %v2837 = vunpack.c.l.b16 %v2821
        %v2838 = vunpack.c.l.b16 %v2822
        %v2839 = vpack.c.b16 %v2832, %v2831
        %v2840 = vpack.c.b16 %v2834, %v2833
        %v2841 = vpack.c.b16 %v2836, %v2835
        %v2842 = vpack.c.b16 %v2838, %v2837
        %2847 = vmatprep.subr.bf16.mxu0 0
        %2848 = vmatpush1.bf16.msra.mxu0 0
        %2849 = vmatprep.subr.bf16.mxu0 0
        %2850 = vmatpush1.bf16.msra.mxu0 0
        %2851 = vmatprep.subr.bf16.mxu0 0
        %2852 = vmatpush1.bf16.msra.mxu0 0
        %2853 = vmatprep.subr.bf16.mxu0 0
        %2854 = vmatpush1.bf16.msra.mxu0 0
        %2855 = vmatprep.subr.bf16.mxu0 0
        %2856 = vmatpush1.bf16.msra.mxu0 %v2842
        %2857 = vmatprep.subr.bf16.mxu0 0
        %2858 = vmatpush1.bf16.msra.mxu0 %v2841
        %2859 = vmatprep.subr.bf16.mxu0 0
        %2860 = vmatpush1.bf16.msra.mxu0 %v2840
        %2861 = vmatprep.subr.bf16.mxu0 0
        %2862 = vmatpush1.bf16.msra.mxu0 %v2839
        %2863 = vmatprep.subr.bf16.mxu0 0
        %2864 = vmatpush2.bf16.msra.mxu0 0
        %2865 = vmatprep.subr.bf16.mxu0 0
        %2866 = vmatpush2.bf16.msra.mxu0 0
        %2867 = vmatprep.subr.bf16.mxu0 0
        %2868 = vmatpush2.bf16.msra.mxu0 0
        %2869 = vmatprep.subr.bf16.mxu0 0
        %2870 = vmatpush2.bf16.msra.mxu0 0
        %2871 = vmatprep.subr.bf16.mxu0 0
        %2872 = vmatpush2.bf16.msra.mxu0 0
        %2873 = vmatprep.subr.bf16.mxu0 0
        %2874 = vmatpush2.bf16.msra.mxu0 0
        %2875 = vmatprep.subr.bf16.mxu0 0
        %2876 = vmatpush2.bf16.msra.mxu0 0
        %2877 = vmatprep.subr.bf16.mxu0 0
        %2878 = vmatpush2.bf16.msra.mxu0 0
        %2879 = vmatprep.mubr.bf16.mxu0 0
        %2880 = vmatmul.mubr.bf16.gmra.mxu0 %v612
        %v2881 = vpop.f32.mrf.mxu0
        %v2882 = vadd.f32 0.0, %v2881
        %v2883 = vpop.f32.mrf.mxu0
        %v2884 = vpop.f32.mrf.mxu0
        %v2885 = vadd.f32 0.0, %v2884
        %v2886 = vpop.f32.mrf.mxu0
        %2887 = vmatprep.mubr.bf16.mxu0 0
        %2888 = vmatmul.mubr.bf16.gmra.mxu0 %v615
        %v2889 = vpop.f32.mrf.mxu0
        %v2890 = vadd.f32 0.0, %v2889
        %v2891 = vpop.f32.mrf.mxu0
        %v2892 = vpop.f32.mrf.mxu0
        %v2893 = vadd.f32 0.0, %v2892
        %v2894 = vpop.f32.mrf.mxu0
        %2895 = vmatprep.mubr.bf16.mxu0 0
        %2896 = vmatmul.mubr.bf16.gmra.mxu0 %v618
        %v2897 = vpop.f32.mrf.mxu0
        %v2898 = vadd.f32 0.0, %v2897
        %v2899 = vpop.f32.mrf.mxu0
        %v2900 = vpop.f32.mrf.mxu0
        %v2901 = vadd.f32 0.0, %v2900
        %v2902 = vpop.f32.mrf.mxu0
        %2903 = vmatprep.mubr.bf16.mxu0 0
        %2904 = vmatmul.mubr.bf16.gmra.mxu0 %v621
        %v2905 = vpop.f32.mrf.mxu0
        %v2906 = vadd.f32 0.0, %v2905
        %v2907 = vpop.f32.mrf.mxu0
        %v2908 = vpop.f32.mrf.mxu0
        %v2909 = vadd.f32 0.0, %v2908
        %v2910 = vpop.f32.mrf.mxu0
        %2911 = vmatprep.mubr.bf16.mxu0 0
        %2912 = vmatmul.mubr.bf16.gmra.mxu0 %v624
        %v2913 = vpop.f32.mrf.mxu0
        %v2914 = vadd.f32 0.0, %v2913
        %v2915 = vpop.f32.mrf.mxu0
        %v2916 = vpop.f32.mrf.mxu0
        %v2917 = vadd.f32 0.0, %v2916
        %v2918 = vpop.f32.mrf.mxu0
        %2919 = vmatprep.mubr.bf16.mxu0 0
        %2920 = vmatmul.mubr.bf16.gmra.mxu0 %v627
        %v2921 = vpop.f32.mrf.mxu0
        %v2922 = vadd.f32 0.0, %v2921
        %v2923 = vpop.f32.mrf.mxu0
        %v2924 = vpop.f32.mrf.mxu0
        %v2925 = vadd.f32 0.0, %v2924
        %v2926 = vpop.f32.mrf.mxu0
        %2927 = vmatprep.mubr.bf16.mxu0 0
        %2928 = vmatmul.mubr.bf16.gmra.mxu0 %v630
        %v2929 = vpop.f32.mrf.mxu0
        %v2930 = vadd.f32 0.0, %v2929
        %v2931 = vpop.f32.mrf.mxu0
        %v2932 = vpop.f32.mrf.mxu0
        %v2933 = vadd.f32 0.0, %v2932
        %v2934 = vpop.f32.mrf.mxu0
        %2935 = vmatprep.mubr.bf16.mxu0 0
        %2936 = vmatmul.mubr.bf16.gmra.mxu0 %v633
        %v2937 = vpop.f32.mrf.mxu0
        %v2938 = vadd.f32 0.0, %v2937
        %v2939 = vpop.f32.mrf.mxu0
        %v2940 = vpop.f32.mrf.mxu0
        %v2941 = vadd.f32 0.0, %v2940
        %v2942 = vpop.f32.mrf.mxu0
        %2943 = vmatprep.mubr.bf16.mxu0 0
        %2944 = vmatmul.mubr.bf16.gmra.mxu0 %v636
        %v2945 = vpop.f32.mrf.mxu0
        %v2946 = vadd.f32 0.0, %v2945
        %v2947 = vpop.f32.mrf.mxu0
        %v2948 = vpop.f32.mrf.mxu0
        %v2949 = vadd.f32 0.0, %v2948
        %v2950 = vpop.f32.mrf.mxu0
        %2951 = vmatprep.mubr.bf16.mxu0 0
        %2952 = vmatmul.mubr.bf16.gmra.mxu0 %v639
        %v2953 = vpop.f32.mrf.mxu0
        %v2954 = vadd.f32 0.0, %v2953
        %v2955 = vpop.f32.mrf.mxu0
        %v2956 = vpop.f32.mrf.mxu0
        %v2957 = vadd.f32 0.0, %v2956
        %v2958 = vpop.f32.mrf.mxu0
        %2959 = vmatprep.mubr.bf16.mxu0 0
        %2960 = vmatmul.mubr.bf16.gmra.mxu0 %v642
        %v2961 = vpop.f32.mrf.mxu0
        %v2962 = vadd.f32 0.0, %v2961
        %v2963 = vpop.f32.mrf.mxu0
        %v2964 = vpop.f32.mrf.mxu0
        %v2965 = vadd.f32 0.0, %v2964
        %v2966 = vpop.f32.mrf.mxu0
        %2967 = vmatprep.mubr.bf16.mxu0 0
        %2968 = vmatmul.mubr.bf16.gmra.mxu0 %v645
        %v2969 = vpop.f32.mrf.mxu0
        %v2970 = vadd.f32 0.0, %v2969
        %v2971 = vpop.f32.mrf.mxu0
        %v2972 = vpop.f32.mrf.mxu0
        %v2973 = vadd.f32 0.0, %v2972
        %v2974 = vpop.f32.mrf.mxu0
        %2975 = vmatprep.mubr.bf16.mxu0 0
        %2976 = vmatmul.mubr.bf16.gmra.mxu0 %v648
        %v2977 = vpop.f32.mrf.mxu0
        %v2978 = vadd.f32 0.0, %v2977
        %v2979 = vpop.f32.mrf.mxu0
        %v2980 = vpop.f32.mrf.mxu0
        %v2981 = vadd.f32 0.0, %v2980
        %v2982 = vpop.f32.mrf.mxu0
        %2983 = vmatprep.mubr.bf16.mxu0 0
        %2984 = vmatmul.mubr.bf16.gmra.mxu0 %v651
        %v2985 = vpop.f32.mrf.mxu0
        %v2986 = vadd.f32 0.0, %v2985
        %v2987 = vpop.f32.mrf.mxu0
        %v2988 = vpop.f32.mrf.mxu0
        %v2989 = vadd.f32 0.0, %v2988
        %v2990 = vpop.f32.mrf.mxu0
        %2991 = vmatprep.mubr.bf16.mxu0 0
        %2992 = vmatmul.mubr.bf16.gmra.mxu0 %v654
        %v2993 = vpop.f32.mrf.mxu0
        %v2994 = vadd.f32 0.0, %v2993
        %v2995 = vpop.f32.mrf.mxu0
        %v2996 = vpop.f32.mrf.mxu0
        %v2997 = vadd.f32 0.0, %v2996
        %v2998 = vpop.f32.mrf.mxu0
        %2999 = vmatprep.mubr.bf16.mxu0 0
        %3000 = vmatmul.mubr.bf16.gmra.mxu0 %v1651
        %v3001 = vpop.f32.mrf.mxu0
        %v3002 = vadd.f32 0.0, %v3001
        %v3003 = vpop.f32.mrf.mxu0
        %v3004 = vpop.f32.mrf.mxu0
        %v3005 = vadd.f32 0.0, %v3004
        %v3006 = vpop.f32.mrf.mxu0
        %3007 = vdwg.mxu0
        %v3024 = vunpack.c.l.b16 %v2799
        %v3025 = vunpack.c.l.b16 %v2800
        %v3026 = vunpack.c.l.b16 %v2801
        %v3027 = vunpack.c.l.b16 %v2802
        %v3028 = vunpack.c.l.b16 %v2803
        %v3029 = vunpack.c.l.b16 %v2804
        %v3030 = vunpack.c.l.b16 %v2805
        %v3031 = vunpack.c.l.b16 %v2806
        %v3032 = vunpack.c.l.b16 %v2807
        %v3033 = vunpack.c.l.b16 %v2808
        %v3034 = vunpack.c.l.b16 %v2809
        %v3035 = vunpack.c.l.b16 %v2810
        %v3036 = vunpack.c.l.b16 %v2811
        %v3037 = vunpack.c.l.b16 %v2812
        %v3038 = vunpack.c.l.b16 %v2813
        %v3039 = vunpack.c.l.b16 %v2814
        %v3040 = vpack.c.b16 %v3025, %v3024
        %v3041 = vpack.c.b16 %v3027, %v3026
        %v3042 = vpack.c.b16 %v3029, %v3028
        %v3043 = vpack.c.b16 %v3031, %v3030
        %v3044 = vpack.c.b16 %v3033, %v3032
        %v3045 = vpack.c.b16 %v3035, %v3034
        %v3046 = vpack.c.b16 %v3037, %v3036
        %v3047 = vpack.c.b16 %v3039, %v3038
        %3056 = vmatprep.subr.bf16.mxu0 0
        %3057 = vmatpush1.bf16.msra.mxu0 %v3047
        %3058 = vmatprep.subr.bf16.mxu0 0
        %3059 = vmatpush1.bf16.msra.mxu0 %v3046
        %3060 = vmatprep.subr.bf16.mxu0 0
        %3061 = vmatpush1.bf16.msra.mxu0 %v3045
        %3062 = vmatprep.subr.bf16.mxu0 0
        %3063 = vmatpush1.bf16.msra.mxu0 %v3044
        %3064 = vmatprep.subr.bf16.mxu0 0
        %3065 = vmatpush1.bf16.msra.mxu0 %v3043
        %3066 = vmatprep.subr.bf16.mxu0 0
        %3067 = vmatpush1.bf16.msra.mxu0 %v3042
        %3068 = vmatprep.subr.bf16.mxu0 0
        %3069 = vmatpush1.bf16.msra.mxu0 %v3041
        %3070 = vmatprep.subr.bf16.mxu0 0
        %3071 = vmatpush1.bf16.msra.mxu0 %v3040
        %3072 = vmatprep.subr.bf16.mxu0 0
        %3073 = vmatpush2.bf16.msra.mxu0 0
        %3074 = vmatprep.subr.bf16.mxu0 0
        %3075 = vmatpush2.bf16.msra.mxu0 0
        %3076 = vmatprep.subr.bf16.mxu0 0
        %3077 = vmatpush2.bf16.msra.mxu0 0
        %3078 = vmatprep.subr.bf16.mxu0 0
        %3079 = vmatpush2.bf16.msra.mxu0 0
        %3080 = vmatprep.subr.bf16.mxu0 0
        %3081 = vmatpush2.bf16.msra.mxu0 0
        %3082 = vmatprep.subr.bf16.mxu0 0
        %3083 = vmatpush2.bf16.msra.mxu0 0
        %3084 = vmatprep.subr.bf16.mxu0 0
        %3085 = vmatpush2.bf16.msra.mxu0 0
        %3086 = vmatprep.subr.bf16.mxu0 0
        %3087 = vmatpush2.bf16.msra.mxu0 0
        %3088 = vmatprep.mubr.bf16.mxu0 0
        %3089 = vmatmul.mubr.bf16.gmra.mxu0 %v2783
        %v3090 = vpop.f32.mrf.mxu0
        %v3091 = vadd.f32 %v2882, %v3090
        %v3092 = vpop.f32.mrf.mxu0
        %v3093 = vpop.f32.mrf.mxu0
        %v3094 = vadd.f32 %v2885, %v3093
        %v3095 = vpop.f32.mrf.mxu0
        %3096 = vmatprep.mubr.bf16.mxu0 0
        %3097 = vmatmul.mubr.bf16.gmra.mxu0 %v2784
        %v3098 = vpop.f32.mrf.mxu0
        %v3099 = vadd.f32 %v2890, %v3098
        %v3100 = vpop.f32.mrf.mxu0
        %v3101 = vpop.f32.mrf.mxu0
        %v3102 = vadd.f32 %v2893, %v3101
        %v3103 = vpop.f32.mrf.mxu0
        %3104 = vmatprep.mubr.bf16.mxu0 0
        %3105 = vmatmul.mubr.bf16.gmra.mxu0 %v2785
        %v3106 = vpop.f32.mrf.mxu0
        %v3107 = vadd.f32 %v2898, %v3106
        %v3108 = vpop.f32.mrf.mxu0
        %v3109 = vpop.f32.mrf.mxu0
        %v3110 = vadd.f32 %v2901, %v3109
        %v3111 = vpop.f32.mrf.mxu0
        %3112 = vmatprep.mubr.bf16.mxu0 0
        %3113 = vmatmul.mubr.bf16.gmra.mxu0 %v2786
        %v3114 = vpop.f32.mrf.mxu0
        %v3115 = vadd.f32 %v2906, %v3114
        %v3116 = vpop.f32.mrf.mxu0
        %v3117 = vpop.f32.mrf.mxu0
        %v3118 = vadd.f32 %v2909, %v3117
        %v3119 = vpop.f32.mrf.mxu0
        %3120 = vmatprep.mubr.bf16.mxu0 0
        %3121 = vmatmul.mubr.bf16.gmra.mxu0 %v2787
        %v3122 = vpop.f32.mrf.mxu0
        %v3123 = vadd.f32 %v2914, %v3122
        %v3124 = vpop.f32.mrf.mxu0
        %v3125 = vpop.f32.mrf.mxu0
        %v3126 = vadd.f32 %v2917, %v3125
        %v3127 = vpop.f32.mrf.mxu0
        %3128 = vmatprep.mubr.bf16.mxu0 0
        %3129 = vmatmul.mubr.bf16.gmra.mxu0 %v2788
        %v3130 = vpop.f32.mrf.mxu0
        %v3131 = vadd.f32 %v2922, %v3130
        %v3132 = vpop.f32.mrf.mxu0
        %v3133 = vpop.f32.mrf.mxu0
        %v3134 = vadd.f32 %v2925, %v3133
        %v3135 = vpop.f32.mrf.mxu0
        %3136 = vmatprep.mubr.bf16.mxu0 0
        %3137 = vmatmul.mubr.bf16.gmra.mxu0 %v2789
        %v3138 = vpop.f32.mrf.mxu0
        %v3139 = vadd.f32 %v2930, %v3138
        %v3140 = vpop.f32.mrf.mxu0
        %v3141 = vpop.f32.mrf.mxu0
        %v3142 = vadd.f32 %v2933, %v3141
        %v3143 = vpop.f32.mrf.mxu0
        %3144 = vmatprep.mubr.bf16.mxu0 0
        %3145 = vmatmul.mubr.bf16.gmra.mxu0 %v2790
        %v3146 = vpop.f32.mrf.mxu0
        %v3147 = vadd.f32 %v2938, %v3146
        %v3148 = vpop.f32.mrf.mxu0
        %v3149 = vpop.f32.mrf.mxu0
        %v3150 = vadd.f32 %v2941, %v3149
        %v3151 = vpop.f32.mrf.mxu0
        %3152 = vmatprep.mubr.bf16.mxu0 0
        %3153 = vmatmul.mubr.bf16.gmra.mxu0 %v2791
        %v3154 = vpop.f32.mrf.mxu0
        %v3155 = vadd.f32 %v2946, %v3154
        %v3156 = vpop.f32.mrf.mxu0
        %v3157 = vpop.f32.mrf.mxu0
        %v3158 = vadd.f32 %v2949, %v3157
        %v3159 = vpop.f32.mrf.mxu0
        %3160 = vmatprep.mubr.bf16.mxu0 0
        %3161 = vmatmul.mubr.bf16.gmra.mxu0 %v2792
        %v3162 = vpop.f32.mrf.mxu0
        %v3163 = vadd.f32 %v2954, %v3162
        %v3164 = vpop.f32.mrf.mxu0
        %v3165 = vpop.f32.mrf.mxu0
        %v3166 = vadd.f32 %v2957, %v3165
        %v3167 = vpop.f32.mrf.mxu0
        %3168 = vmatprep.mubr.bf16.mxu0 0
        %3169 = vmatmul.mubr.bf16.gmra.mxu0 %v2793
        %v3170 = vpop.f32.mrf.mxu0
        %v3171 = vadd.f32 %v2962, %v3170
        %v3172 = vpop.f32.mrf.mxu0
        %v3173 = vpop.f32.mrf.mxu0
        %v3174 = vadd.f32 %v2965, %v3173
        %v3175 = vpop.f32.mrf.mxu0
        %3176 = vmatprep.mubr.bf16.mxu0 0
        %3177 = vmatmul.mubr.bf16.gmra.mxu0 %v2794
        %v3178 = vpop.f32.mrf.mxu0
        %v3179 = vadd.f32 %v2970, %v3178
        %v3180 = vpop.f32.mrf.mxu0
        %v3181 = vpop.f32.mrf.mxu0
        %v3182 = vadd.f32 %v2973, %v3181
        %v3183 = vpop.f32.mrf.mxu0
        %3184 = vmatprep.mubr.bf16.mxu0 0
        %3185 = vmatmul.mubr.bf16.gmra.mxu0 %v2795
        %v3186 = vpop.f32.mrf.mxu0
        %v3187 = vadd.f32 %v2978, %v3186
        %v3188 = vpop.f32.mrf.mxu0
        %v3189 = vpop.f32.mrf.mxu0
        %v3190 = vadd.f32 %v2981, %v3189
        %v3191 = vpop.f32.mrf.mxu0
        %3192 = vmatprep.mubr.bf16.mxu0 0
        %3193 = vmatmul.mubr.bf16.gmra.mxu0 %v2796
        %v3194 = vpop.f32.mrf.mxu0
        %v3195 = vadd.f32 %v2986, %v3194
        %v3196 = vpop.f32.mrf.mxu0
        %v3197 = vpop.f32.mrf.mxu0
        %v3198 = vadd.f32 %v2989, %v3197
        %v3199 = vpop.f32.mrf.mxu0
        %3200 = vmatprep.mubr.bf16.mxu0 0
        %3201 = vmatmul.mubr.bf16.gmra.mxu0 %v2797
        %v3202 = vpop.f32.mrf.mxu0
        %v3203 = vadd.f32 %v2994, %v3202
        %v3204 = vpop.f32.mrf.mxu0
        %v3205 = vpop.f32.mrf.mxu0
        %v3206 = vadd.f32 %v2997, %v3205
        %v3207 = vpop.f32.mrf.mxu0
        %3208 = vmatprep.mubr.bf16.mxu0 0
        %3209 = vmatmul.mubr.bf16.gmra.mxu0 %v2798
        %v3210 = vpop.f32.mrf.mxu0
        %v3211 = vadd.f32 %v3002, %v3210
        %v3212 = vpop.f32.mrf.mxu0
        %v3213 = vpop.f32.mrf.mxu0
        %v3214 = vadd.f32 %v3005, %v3213
        %v3215 = vpop.f32.mrf.mxu0
        %3216 = vdwg.mxu0
        %v3217 = vmax.f32 %v3091, 0.0
        %v3218 = vmax.f32 %v3094, 0.0
        %v3219 = vmax.f32 %v3099, 0.0
        %v3220 = vmax.f32 %v3102, 0.0
        %v3221 = vmax.f32 %v3107, 0.0
        %v3222 = vmax.f32 %v3110, 0.0
        %v3223 = vmax.f32 %v3115, 0.0
        %v3224 = vmax.f32 %v3118, 0.0
        %v3225 = vmax.f32 %v3123, 0.0
        %v3226 = vmax.f32 %v3126, 0.0
        %v3227 = vmax.f32 %v3131, 0.0
        %v3228 = vmax.f32 %v3134, 0.0
        %v3229 = vmax.f32 %v3139, 0.0
        %v3230 = vmax.f32 %v3142, 0.0
        %v3231 = vmax.f32 %v3147, 0.0
        %v3232 = vmax.f32 %v3150, 0.0
        %v3233 = vmax.f32 %v3155, 0.0
        %v3234 = vmax.f32 %v3158, 0.0
        %v3235 = vmax.f32 %v3163, 0.0
        %v3236 = vmax.f32 %v3166, 0.0
        %v3237 = vmax.f32 %v3171, 0.0
        %v3238 = vmax.f32 %v3174, 0.0
        %v3239 = vmax.f32 %v3179, 0.0
        %v3240 = vmax.f32 %v3182, 0.0
        %v3241 = vmax.f32 %v3187, 0.0
        %v3242 = vmax.f32 %v3190, 0.0
        %v3243 = vmax.f32 %v3195, 0.0
        %v3244 = vmax.f32 %v3198, 0.0
        %v3245 = vmax.f32 %v3203, 0.0
        %v3246 = vmax.f32 %v3206, 0.0
        %v3247 = vmax.f32 %v3211, 0.0
        %v3248 = vmax.f32 %v3214, 0.0
        %v3249 = vpack.c.bf16 %v3218, %v3217
        %v3250 = vpack.c.bf16 %v3220, %v3219
        %v3251 = vpack.c.bf16 %v3222, %v3221
        %v3252 = vpack.c.bf16 %v3224, %v3223
        %v3253 = vpack.c.bf16 %v3226, %v3225
        %v3254 = vpack.c.bf16 %v3228, %v3227
        %v3255 = vpack.c.bf16 %v3230, %v3229
        %v3256 = vpack.c.bf16 %v3232, %v3231
        %v3257 = vpack.c.bf16 %v3234, %v3233
        %v3258 = vpack.c.bf16 %v3236, %v3235
        %v3259 = vpack.c.bf16 %v3238, %v3237
        %v3260 = vpack.c.bf16 %v3240, %v3239
        %v3261 = vpack.c.bf16 %v3242, %v3241
        %v3262 = vpack.c.bf16 %v3244, %v3243
        %v3263 = vpack.c.bf16 %v3246, %v3245
        %v3264 = vpack.c.bf16 %v3248, %v3247
        %v3265 = vld [vmem:[%s5] sm:$0xf]
        %v3266 = vld [vmem:[%s5 + $0x4] sm:$0xf]
        %v3267 = vld [vmem:[%s5 + $0x8] sm:$0xf]
        %v3268 = vld [vmem:[%s5 + $0xc] sm:$0xf]
        %v3269 = vld [vmem:[%s5 + $0x10] sm:$0xf]
        %v3270 = vld [vmem:[%s5 + $0x14] sm:$0xf]
        %v3271 = vld [vmem:[%s5 + $0x18] sm:$0xf]
        %v3272 = vld [vmem:[%s5 + $0x1c] sm:$0xf]
        %v3273 = vld [vmem:[%s5 + $0x20] sm:$0xf]
        %v3274 = vld [vmem:[%s5 + $0x24] sm:$0xf]
        %v3275 = vld [vmem:[%s5 + $0x28] sm:$0xf]
        %v3276 = vld [vmem:[%s5 + $0x2c] sm:$0xf]
        %v3277 = vld [vmem:[%s5 + $0x30] sm:$0xf]
        %v3278 = vld [vmem:[%s5 + $0x34] sm:$0xf]
        %v3279 = vld [vmem:[%s5 + $0x38] sm:$0xf]
        %v3280 = vld [vmem:[%s5 + $0x3c] sm:$0xf]
        %v3281 = vld [vmem:[%s3 + $0x4] sm:$0xf]
        %v3282 = vld [vmem:[%s3 + $0x10] sm:$0xf]
        %v3283 = vld [vmem:[%s3 + $0x1c] sm:$0xf]
        %v3284 = vld [vmem:[%s3 + $0x28] sm:$0xf]
        %v3285 = vld [vmem:[%s3 + $0x34] sm:$0xf]
        %v3286 = vld [vmem:[%s3 + $0x40] sm:$0xf]
        %v3287 = vld [vmem:[%s3 + $0x4c] sm:$0xf]
        %v3288 = vld [vmem:[%s3 + $0x58] sm:$0xf]
        %v3289 = vld [vmem:[%s3 + $0x64] sm:$0xf]
        %v3290 = vld [vmem:[%s3 + $0x70] sm:$0xf]
        %v3291 = vld [vmem:[%s3 + $0x7c] sm:$0xf]
        %v3292 = vld [vmem:[%s3 + $0x88] sm:$0xf]
        %v3293 = vld [vmem:[%s3 + $0x94] sm:$0xf]
        %v3294 = vld [vmem:[%s3 + $0xa0] sm:$0xf]
        %v3295 = vld [vmem:[%s3 + $0xac] sm:$0xf]
        %v3296 = vld [vmem:[%s3 + $0xb8] sm:$0xf]
        %v3297 = vld [vmem:[%s4 + $0x4] sm:$0xf]
        %v3298 = vld [vmem:[%s4 + $0x10] sm:$0xf]
        %v3299 = vld [vmem:[%s4 + $0x1c] sm:$0xf]
        %v3300 = vld [vmem:[%s4 + $0x28] sm:$0xf]
        %v3301 = vld [vmem:[%s4 + $0x34] sm:$0xf]
        %v3302 = vld [vmem:[%s4 + $0x40] sm:$0xf]
        %v3303 = vld [vmem:[%s4 + $0x4c] sm:$0xf]
        %v3304 = vld [vmem:[%s4 + $0x58] sm:$0xf]
        %v3313 = vunpack.c.l.b16 %v3297
        %v3314 = vunpack.c.l.b16 %v3298
        %v3315 = vunpack.c.l.b16 %v3299
        %v3316 = vunpack.c.l.b16 %v3300
        %v3317 = vunpack.c.l.b16 %v3301
        %v3318 = vunpack.c.l.b16 %v3302
        %v3319 = vunpack.c.l.b16 %v3303
        %v3320 = vunpack.c.l.b16 %v3304
        %v3321 = vpack.c.b16 %v3314, %v3313
        %v3322 = vpack.c.b16 %v3316, %v3315
        %v3323 = vpack.c.b16 %v3318, %v3317
        %v3324 = vpack.c.b16 %v3320, %v3319
        %3329 = vmatprep.subr.bf16.mxu0 0
        %3330 = vmatpush1.bf16.msra.mxu0 0
        %3331 = vmatprep.subr.bf16.mxu0 0
        %3332 = vmatpush1.bf16.msra.mxu0 0
        %3333 = vmatprep.subr.bf16.mxu0 0
        %3334 = vmatpush1.bf16.msra.mxu0 0
        %3335 = vmatprep.subr.bf16.mxu0 0
        %3336 = vmatpush1.bf16.msra.mxu0 0
        %3337 = vmatprep.subr.bf16.mxu0 0
        %3338 = vmatpush1.bf16.msra.mxu0 %v3324
        %3339 = vmatprep.subr.bf16.mxu0 0
        %3340 = vmatpush1.bf16.msra.mxu0 %v3323
        %3341 = vmatprep.subr.bf16.mxu0 0
        %3342 = vmatpush1.bf16.msra.mxu0 %v3322
        %3343 = vmatprep.subr.bf16.mxu0 0
        %3344 = vmatpush1.bf16.msra.mxu0 %v3321
        %3345 = vmatprep.subr.bf16.mxu0 0
        %3346 = vmatpush2.bf16.msra.mxu0 0
        %3347 = vmatprep.subr.bf16.mxu0 0
        %3348 = vmatpush2.bf16.msra.mxu0 0
        %3349 = vmatprep.subr.bf16.mxu0 0
        %3350 = vmatpush2.bf16.msra.mxu0 0
        %3351 = vmatprep.subr.bf16.mxu0 0
        %3352 = vmatpush2.bf16.msra.mxu0 0
        %3353 = vmatprep.subr.bf16.mxu0 0
        %3354 = vmatpush2.bf16.msra.mxu0 0
        %3355 = vmatprep.subr.bf16.mxu0 0
        %3356 = vmatpush2.bf16.msra.mxu0 0
        %3357 = vmatprep.subr.bf16.mxu0 0
        %3358 = vmatpush2.bf16.msra.mxu0 0
        %3359 = vmatprep.subr.bf16.mxu0 0
        %3360 = vmatpush2.bf16.msra.mxu0 0
        %3361 = vmatprep.mubr.bf16.mxu0 0
        %3362 = vmatmul.mubr.bf16.gmra.mxu0 %v612
        %v3363 = vpop.f32.mrf.mxu0
        %v3364 = vadd.f32 0.0, %v3363
        %v3365 = vpop.f32.mrf.mxu0
        %v3366 = vpop.f32.mrf.mxu0
        %v3367 = vadd.f32 0.0, %v3366
        %v3368 = vpop.f32.mrf.mxu0
        %3369 = vmatprep.mubr.bf16.mxu0 0
        %3370 = vmatmul.mubr.bf16.gmra.mxu0 %v615
        %v3371 = vpop.f32.mrf.mxu0
        %v3372 = vadd.f32 0.0, %v3371
        %v3373 = vpop.f32.mrf.mxu0
        %v3374 = vpop.f32.mrf.mxu0
        %v3375 = vadd.f32 0.0, %v3374
        %v3376 = vpop.f32.mrf.mxu0
        %3377 = vmatprep.mubr.bf16.mxu0 0
        %3378 = vmatmul.mubr.bf16.gmra.mxu0 %v618
        %v3379 = vpop.f32.mrf.mxu0
        %v3380 = vadd.f32 0.0, %v3379
        %v3381 = vpop.f32.mrf.mxu0
        %v3382 = vpop.f32.mrf.mxu0
        %v3383 = vadd.f32 0.0, %v3382
        %v3384 = vpop.f32.mrf.mxu0
        %3385 = vmatprep.mubr.bf16.mxu0 0
        %3386 = vmatmul.mubr.bf16.gmra.mxu0 %v621
        %v3387 = vpop.f32.mrf.mxu0
        %v3388 = vadd.f32 0.0, %v3387
        %v3389 = vpop.f32.mrf.mxu0
        %v3390 = vpop.f32.mrf.mxu0
        %v3391 = vadd.f32 0.0, %v3390
        %v3392 = vpop.f32.mrf.mxu0
        %3393 = vmatprep.mubr.bf16.mxu0 0
        %3394 = vmatmul.mubr.bf16.gmra.mxu0 %v624
        %v3395 = vpop.f32.mrf.mxu0
        %v3396 = vadd.f32 0.0, %v3395
        %v3397 = vpop.f32.mrf.mxu0
        %v3398 = vpop.f32.mrf.mxu0
        %v3399 = vadd.f32 0.0, %v3398
        %v3400 = vpop.f32.mrf.mxu0
        %3401 = vmatprep.mubr.bf16.mxu0 0
        %3402 = vmatmul.mubr.bf16.gmra.mxu0 %v627
        %v3403 = vpop.f32.mrf.mxu0
        %v3404 = vadd.f32 0.0, %v3403
        %v3405 = vpop.f32.mrf.mxu0
        %v3406 = vpop.f32.mrf.mxu0
        %v3407 = vadd.f32 0.0, %v3406
        %v3408 = vpop.f32.mrf.mxu0
        %3409 = vmatprep.mubr.bf16.mxu0 0
        %3410 = vmatmul.mubr.bf16.gmra.mxu0 %v630
        %v3411 = vpop.f32.mrf.mxu0
        %v3412 = vadd.f32 0.0, %v3411
        %v3413 = vpop.f32.mrf.mxu0
        %v3414 = vpop.f32.mrf.mxu0
        %v3415 = vadd.f32 0.0, %v3414
        %v3416 = vpop.f32.mrf.mxu0
        %3417 = vmatprep.mubr.bf16.mxu0 0
        %3418 = vmatmul.mubr.bf16.gmra.mxu0 %v633
        %v3419 = vpop.f32.mrf.mxu0
        %v3420 = vadd.f32 0.0, %v3419
        %v3421 = vpop.f32.mrf.mxu0
        %v3422 = vpop.f32.mrf.mxu0
        %v3423 = vadd.f32 0.0, %v3422
        %v3424 = vpop.f32.mrf.mxu0
        %3425 = vmatprep.mubr.bf16.mxu0 0
        %3426 = vmatmul.mubr.bf16.gmra.mxu0 %v636
        %v3427 = vpop.f32.mrf.mxu0
        %v3428 = vadd.f32 0.0, %v3427
        %v3429 = vpop.f32.mrf.mxu0
        %v3430 = vpop.f32.mrf.mxu0
        %v3431 = vadd.f32 0.0, %v3430
        %v3432 = vpop.f32.mrf.mxu0
        %3433 = vmatprep.mubr.bf16.mxu0 0
        %3434 = vmatmul.mubr.bf16.gmra.mxu0 %v639
        %v3435 = vpop.f32.mrf.mxu0
        %v3436 = vadd.f32 0.0, %v3435
        %v3437 = vpop.f32.mrf.mxu0
        %v3438 = vpop.f32.mrf.mxu0
        %v3439 = vadd.f32 0.0, %v3438
        %v3440 = vpop.f32.mrf.mxu0
        %3441 = vmatprep.mubr.bf16.mxu0 0
        %3442 = vmatmul.mubr.bf16.gmra.mxu0 %v642
        %v3443 = vpop.f32.mrf.mxu0
        %v3444 = vadd.f32 0.0, %v3443
        %v3445 = vpop.f32.mrf.mxu0
        %v3446 = vpop.f32.mrf.mxu0
        %v3447 = vadd.f32 0.0, %v3446
        %v3448 = vpop.f32.mrf.mxu0
        %3449 = vmatprep.mubr.bf16.mxu0 0
        %3450 = vmatmul.mubr.bf16.gmra.mxu0 %v645
        %v3451 = vpop.f32.mrf.mxu0
        %v3452 = vadd.f32 0.0, %v3451
        %v3453 = vpop.f32.mrf.mxu0
        %v3454 = vpop.f32.mrf.mxu0
        %v3455 = vadd.f32 0.0, %v3454
        %v3456 = vpop.f32.mrf.mxu0
        %3457 = vmatprep.mubr.bf16.mxu0 0
        %3458 = vmatmul.mubr.bf16.gmra.mxu0 %v648
        %v3459 = vpop.f32.mrf.mxu0
        %v3460 = vadd.f32 0.0, %v3459
        %v3461 = vpop.f32.mrf.mxu0
        %v3462 = vpop.f32.mrf.mxu0
        %v3463 = vadd.f32 0.0, %v3462
        %v3464 = vpop.f32.mrf.mxu0
        %3465 = vmatprep.mubr.bf16.mxu0 0
        %3466 = vmatmul.mubr.bf16.gmra.mxu0 %v651
        %v3467 = vpop.f32.mrf.mxu0
        %v3468 = vadd.f32 0.0, %v3467
        %v3469 = vpop.f32.mrf.mxu0
        %v3470 = vpop.f32.mrf.mxu0
        %v3471 = vadd.f32 0.0, %v3470
        %v3472 = vpop.f32.mrf.mxu0
        %3473 = vmatprep.mubr.bf16.mxu0 0
        %3474 = vmatmul.mubr.bf16.gmra.mxu0 %v654
        %v3475 = vpop.f32.mrf.mxu0
        %v3476 = vadd.f32 0.0, %v3475
        %v3477 = vpop.f32.mrf.mxu0
        %v3478 = vpop.f32.mrf.mxu0
        %v3479 = vadd.f32 0.0, %v3478
        %v3480 = vpop.f32.mrf.mxu0
        %3481 = vmatprep.mubr.bf16.mxu0 0
        %3482 = vmatmul.mubr.bf16.gmra.mxu0 %v1651
        %v3483 = vpop.f32.mrf.mxu0
        %v3484 = vadd.f32 0.0, %v3483
        %v3485 = vpop.f32.mrf.mxu0
        %v3486 = vpop.f32.mrf.mxu0
        %v3487 = vadd.f32 0.0, %v3486
        %v3488 = vpop.f32.mrf.mxu0
        %3489 = vdwg.mxu0
        %v3506 = vunpack.c.l.b16 %v3281
        %v3507 = vunpack.c.l.b16 %v3282
        %v3508 = vunpack.c.l.b16 %v3283
        %v3509 = vunpack.c.l.b16 %v3284
        %v3510 = vunpack.c.l.b16 %v3285
        %v3511 = vunpack.c.l.b16 %v3286
        %v3512 = vunpack.c.l.b16 %v3287
        %v3513 = vunpack.c.l.b16 %v3288
        %v3514 = vunpack.c.l.b16 %v3289
        %v3515 = vunpack.c.l.b16 %v3290
        %v3516 = vunpack.c.l.b16 %v3291
        %v3517 = vunpack.c.l.b16 %v3292
        %v3518 = vunpack.c.l.b16 %v3293
        %v3519 = vunpack.c.l.b16 %v3294
        %v3520 = vunpack.c.l.b16 %v3295
        %v3521 = vunpack.c.l.b16 %v3296
        %v3522 = vpack.c.b16 %v3507, %v3506
        %v3523 = vpack.c.b16 %v3509, %v3508
        %v3524 = vpack.c.b16 %v3511, %v3510
        %v3525 = vpack.c.b16 %v3513, %v3512
        %v3526 = vpack.c.b16 %v3515, %v3514
        %v3527 = vpack.c.b16 %v3517, %v3516
        %v3528 = vpack.c.b16 %v3519, %v3518
        %v3529 = vpack.c.b16 %v3521, %v3520
        %3538 = vmatprep.subr.bf16.mxu0 0
        %3539 = vmatpush1.bf16.msra.mxu0 %v3529
        %3540 = vmatprep.subr.bf16.mxu0 0
        %3541 = vmatpush1.bf16.msra.mxu0 %v3528
        %3542 = vmatprep.subr.bf16.mxu0 0
        %3543 = vmatpush1.bf16.msra.mxu0 %v3527
        %3544 = vmatprep.subr.bf16.mxu0 0
        %3545 = vmatpush1.bf16.msra.mxu0 %v3526
        %3546 = vmatprep.subr.bf16.mxu0 0
        %3547 = vmatpush1.bf16.msra.mxu0 %v3525
        %3548 = vmatprep.subr.bf16.mxu0 0
        %3549 = vmatpush1.bf16.msra.mxu0 %v3524
        %3550 = vmatprep.subr.bf16.mxu0 0
        %3551 = vmatpush1.bf16.msra.mxu0 %v3523
        %3552 = vmatprep.subr.bf16.mxu0 0
        %3553 = vmatpush1.bf16.msra.mxu0 %v3522
        %3554 = vmatprep.subr.bf16.mxu0 0
        %3555 = vmatpush2.bf16.msra.mxu0 0
        %3556 = vmatprep.subr.bf16.mxu0 0
        %3557 = vmatpush2.bf16.msra.mxu0 0
        %3558 = vmatprep.subr.bf16.mxu0 0
        %3559 = vmatpush2.bf16.msra.mxu0 0
        %3560 = vmatprep.subr.bf16.mxu0 0
        %3561 = vmatpush2.bf16.msra.mxu0 0
        %3562 = vmatprep.subr.bf16.mxu0 0
        %3563 = vmatpush2.bf16.msra.mxu0 0
        %3564 = vmatprep.subr.bf16.mxu0 0
        %3565 = vmatpush2.bf16.msra.mxu0 0
        %3566 = vmatprep.subr.bf16.mxu0 0
        %3567 = vmatpush2.bf16.msra.mxu0 0
        %3568 = vmatprep.subr.bf16.mxu0 0
        %3569 = vmatpush2.bf16.msra.mxu0 0
        %3570 = vmatprep.mubr.bf16.mxu0 0
        %3571 = vmatmul.mubr.bf16.gmra.mxu0 %v2783
        %v3572 = vpop.f32.mrf.mxu0
        %v3573 = vadd.f32 %v3364, %v3572
        %v3574 = vpop.f32.mrf.mxu0
        %v3575 = vpop.f32.mrf.mxu0
        %v3576 = vadd.f32 %v3367, %v3575
        %v3577 = vpop.f32.mrf.mxu0
        %3578 = vmatprep.mubr.bf16.mxu0 0
        %3579 = vmatmul.mubr.bf16.gmra.mxu0 %v2784
        %v3580 = vpop.f32.mrf.mxu0
        %v3581 = vadd.f32 %v3372, %v3580
        %v3582 = vpop.f32.mrf.mxu0
        %v3583 = vpop.f32.mrf.mxu0
        %v3584 = vadd.f32 %v3375, %v3583
        %v3585 = vpop.f32.mrf.mxu0
        %3586 = vmatprep.mubr.bf16.mxu0 0
        %3587 = vmatmul.mubr.bf16.gmra.mxu0 %v2785
        %v3588 = vpop.f32.mrf.mxu0
        %v3589 = vadd.f32 %v3380, %v3588
        %v3590 = vpop.f32.mrf.mxu0
        %v3591 = vpop.f32.mrf.mxu0
        %v3592 = vadd.f32 %v3383, %v3591
        %v3593 = vpop.f32.mrf.mxu0
        %3594 = vmatprep.mubr.bf16.mxu0 0
        %3595 = vmatmul.mubr.bf16.gmra.mxu0 %v2786
        %v3596 = vpop.f32.mrf.mxu0
        %v3597 = vadd.f32 %v3388, %v3596
        %v3598 = vpop.f32.mrf.mxu0
        %v3599 = vpop.f32.mrf.mxu0
        %v3600 = vadd.f32 %v3391, %v3599
        %v3601 = vpop.f32.mrf.mxu0
        %3602 = vmatprep.mubr.bf16.mxu0 0
        %3603 = vmatmul.mubr.bf16.gmra.mxu0 %v2787
        %v3604 = vpop.f32.mrf.mxu0
        %v3605 = vadd.f32 %v3396, %v3604
        %v3606 = vpop.f32.mrf.mxu0
        %v3607 = vpop.f32.mrf.mxu0
        %v3608 = vadd.f32 %v3399, %v3607
        %v3609 = vpop.f32.mrf.mxu0
        %3610 = vmatprep.mubr.bf16.mxu0 0
        %3611 = vmatmul.mubr.bf16.gmra.mxu0 %v2788
        %v3612 = vpop.f32.mrf.mxu0
        %v3613 = vadd.f32 %v3404, %v3612
        %v3614 = vpop.f32.mrf.mxu0
        %v3615 = vpop.f32.mrf.mxu0
        %v3616 = vadd.f32 %v3407, %v3615
        %v3617 = vpop.f32.mrf.mxu0
        %3618 = vmatprep.mubr.bf16.mxu0 0
        %3619 = vmatmul.mubr.bf16.gmra.mxu0 %v2789
        %v3620 = vpop.f32.mrf.mxu0
        %v3621 = vadd.f32 %v3412, %v3620
        %v3622 = vpop.f32.mrf.mxu0
        %v3623 = vpop.f32.mrf.mxu0
        %v3624 = vadd.f32 %v3415, %v3623
        %v3625 = vpop.f32.mrf.mxu0
        %3626 = vmatprep.mubr.bf16.mxu0 0
        %3627 = vmatmul.mubr.bf16.gmra.mxu0 %v2790
        %v3628 = vpop.f32.mrf.mxu0
        %v3629 = vadd.f32 %v3420, %v3628
        %v3630 = vpop.f32.mrf.mxu0
        %v3631 = vpop.f32.mrf.mxu0
        %v3632 = vadd.f32 %v3423, %v3631
        %v3633 = vpop.f32.mrf.mxu0
        %3634 = vmatprep.mubr.bf16.mxu0 0
        %3635 = vmatmul.mubr.bf16.gmra.mxu0 %v2791
        %v3636 = vpop.f32.mrf.mxu0
        %v3637 = vadd.f32 %v3428, %v3636
        %v3638 = vpop.f32.mrf.mxu0
        %v3639 = vpop.f32.mrf.mxu0
        %v3640 = vadd.f32 %v3431, %v3639
        %v3641 = vpop.f32.mrf.mxu0
        %3642 = vmatprep.mubr.bf16.mxu0 0
        %3643 = vmatmul.mubr.bf16.gmra.mxu0 %v2792
        %v3644 = vpop.f32.mrf.mxu0
        %v3645 = vadd.f32 %v3436, %v3644
        %v3646 = vpop.f32.mrf.mxu0
        %v3647 = vpop.f32.mrf.mxu0
        %v3648 = vadd.f32 %v3439, %v3647
        %v3649 = vpop.f32.mrf.mxu0
        %3650 = vmatprep.mubr.bf16.mxu0 0
        %3651 = vmatmul.mubr.bf16.gmra.mxu0 %v2793
        %v3652 = vpop.f32.mrf.mxu0
        %v3653 = vadd.f32 %v3444, %v3652
        %v3654 = vpop.f32.mrf.mxu0
        %v3655 = vpop.f32.mrf.mxu0
        %v3656 = vadd.f32 %v3447, %v3655
        %v3657 = vpop.f32.mrf.mxu0
        %3658 = vmatprep.mubr.bf16.mxu0 0
        %3659 = vmatmul.mubr.bf16.gmra.mxu0 %v2794
        %v3660 = vpop.f32.mrf.mxu0
        %v3661 = vadd.f32 %v3452, %v3660
        %v3662 = vpop.f32.mrf.mxu0
        %v3663 = vpop.f32.mrf.mxu0
        %v3664 = vadd.f32 %v3455, %v3663
        %v3665 = vpop.f32.mrf.mxu0
        %3666 = vmatprep.mubr.bf16.mxu0 0
        %3667 = vmatmul.mubr.bf16.gmra.mxu0 %v2795
        %v3668 = vpop.f32.mrf.mxu0
        %v3669 = vadd.f32 %v3460, %v3668
        %v3670 = vpop.f32.mrf.mxu0
        %v3671 = vpop.f32.mrf.mxu0
        %v3672 = vadd.f32 %v3463, %v3671
        %v3673 = vpop.f32.mrf.mxu0
        %3674 = vmatprep.mubr.bf16.mxu0 0
        %3675 = vmatmul.mubr.bf16.gmra.mxu0 %v2796
        %v3676 = vpop.f32.mrf.mxu0
        %v3677 = vadd.f32 %v3468, %v3676
        %v3678 = vpop.f32.mrf.mxu0
        %v3679 = vpop.f32.mrf.mxu0
        %v3680 = vadd.f32 %v3471, %v3679
        %v3681 = vpop.f32.mrf.mxu0
        %3682 = vmatprep.mubr.bf16.mxu0 0
        %3683 = vmatmul.mubr.bf16.gmra.mxu0 %v2797
        %v3684 = vpop.f32.mrf.mxu0
        %v3685 = vadd.f32 %v3476, %v3684
        %v3686 = vpop.f32.mrf.mxu0
        %v3687 = vpop.f32.mrf.mxu0
        %v3688 = vadd.f32 %v3479, %v3687
        %v3689 = vpop.f32.mrf.mxu0
        %3690 = vmatprep.mubr.bf16.mxu0 0
        %3691 = vmatmul.mubr.bf16.gmra.mxu0 %v2798
        %v3692 = vpop.f32.mrf.mxu0
        %v3693 = vadd.f32 %v3484, %v3692
        %v3694 = vpop.f32.mrf.mxu0
        %v3695 = vpop.f32.mrf.mxu0
        %v3696 = vadd.f32 %v3487, %v3695
        %v3697 = vpop.f32.mrf.mxu0
        %3698 = vdwg.mxu0
        %v3699 = vmax.f32 %v3573, 0.0
        %v3700 = vmax.f32 %v3576, 0.0
        %v3701 = vmax.f32 %v3581, 0.0
        %v3702 = vmax.f32 %v3584, 0.0
        %v3703 = vmax.f32 %v3589, 0.0
        %v3704 = vmax.f32 %v3592, 0.0
        %v3705 = vmax.f32 %v3597, 0.0
        %v3706 = vmax.f32 %v3600, 0.0
        %v3707 = vmax.f32 %v3605, 0.0
        %v3708 = vmax.f32 %v3608, 0.0
        %v3709 = vmax.f32 %v3613, 0.0
        %v3710 = vmax.f32 %v3616, 0.0
        %v3711 = vmax.f32 %v3621, 0.0
        %v3712 = vmax.f32 %v3624, 0.0
        %v3713 = vmax.f32 %v3629, 0.0
        %v3714 = vmax.f32 %v3632, 0.0
        %v3715 = vmax.f32 %v3637, 0.0
        %v3716 = vmax.f32 %v3640, 0.0
        %v3717 = vmax.f32 %v3645, 0.0
        %v3718 = vmax.f32 %v3648, 0.0
        %v3719 = vmax.f32 %v3653, 0.0
        %v3720 = vmax.f32 %v3656, 0.0
        %v3721 = vmax.f32 %v3661, 0.0
        %v3722 = vmax.f32 %v3664, 0.0
        %v3723 = vmax.f32 %v3669, 0.0
        %v3724 = vmax.f32 %v3672, 0.0
        %v3725 = vmax.f32 %v3677, 0.0
        %v3726 = vmax.f32 %v3680, 0.0
        %v3727 = vmax.f32 %v3685, 0.0
        %v3728 = vmax.f32 %v3688, 0.0
        %v3729 = vmax.f32 %v3693, 0.0
        %v3730 = vmax.f32 %v3696, 0.0
        %v3731 = vpack.c.bf16 %v3700, %v3699
        %v3732 = vpack.c.bf16 %v3702, %v3701
        %v3733 = vpack.c.bf16 %v3704, %v3703
        %v3734 = vpack.c.bf16 %v3706, %v3705
        %v3735 = vpack.c.bf16 %v3708, %v3707
        %v3736 = vpack.c.bf16 %v3710, %v3709
        %v3737 = vpack.c.bf16 %v3712, %v3711
        %v3738 = vpack.c.bf16 %v3714, %v3713
        %v3739 = vpack.c.bf16 %v3716, %v3715
        %v3740 = vpack.c.bf16 %v3718, %v3717
        %v3741 = vpack.c.bf16 %v3720, %v3719
        %v3742 = vpack.c.bf16 %v3722, %v3721
        %v3743 = vpack.c.bf16 %v3724, %v3723
        %v3744 = vpack.c.bf16 %v3726, %v3725
        %v3745 = vpack.c.bf16 %v3728, %v3727
        %v3746 = vpack.c.bf16 %v3730, %v3729
        %v3747 = vld [vmem:[%s5 + $0x40] sm:$0xf]
        %v3748 = vld [vmem:[%s5 + $0x44] sm:$0xf]
        %v3749 = vld [vmem:[%s5 + $0x48] sm:$0xf]
        %v3750 = vld [vmem:[%s5 + $0x4c] sm:$0xf]
        %v3751 = vld [vmem:[%s5 + $0x50] sm:$0xf]
        %v3752 = vld [vmem:[%s5 + $0x54] sm:$0xf]
        %v3753 = vld [vmem:[%s5 + $0x58] sm:$0xf]
        %v3754 = vld [vmem:[%s5 + $0x5c] sm:$0xf]
        %v3755 = vld [vmem:[%s5 + $0x60] sm:$0xf]
        %v3756 = vld [vmem:[%s5 + $0x64] sm:$0xf]
        %v3757 = vld [vmem:[%s5 + $0x68] sm:$0xf]
        %v3758 = vld [vmem:[%s5 + $0x6c] sm:$0xf]
        %v3759 = vld [vmem:[%s5 + $0x70] sm:$0xf]
        %v3760 = vld [vmem:[%s5 + $0x74] sm:$0xf]
        %v3761 = vld [vmem:[%s5 + $0x78] sm:$0xf]
        %v3762 = vld [vmem:[%s5 + $0x7c] sm:$0xf]
        %v3779 = vunpack.c.l.b16 %v3747
        %v3780 = vunpack.c.l.b16 %v3748
        %v3781 = vunpack.c.l.b16 %v3749
        %v3782 = vunpack.c.l.b16 %v3750
        %v3783 = vunpack.c.l.b16 %v3751
        %v3784 = vunpack.c.l.b16 %v3752
        %v3785 = vunpack.c.l.b16 %v3753
        %v3786 = vunpack.c.l.b16 %v3754
        %v3787 = vunpack.c.l.b16 %v3755
        %v3788 = vunpack.c.l.b16 %v3756
        %v3789 = vunpack.c.l.b16 %v3757
        %v3790 = vunpack.c.l.b16 %v3758
        %v3791 = vunpack.c.l.b16 %v3759
        %v3792 = vunpack.c.l.b16 %v3760
        %v3793 = vunpack.c.l.b16 %v3761
        %v3794 = vunpack.c.l.b16 %v3762
        %v3795 = vpack.c.b16 %v3780, %v3779
        %v3796 = vpack.c.b16 %v3782, %v3781
        %v3797 = vpack.c.b16 %v3784, %v3783
        %v3798 = vpack.c.b16 %v3786, %v3785
        %v3799 = vpack.c.b16 %v3788, %v3787
        %v3800 = vpack.c.b16 %v3790, %v3789
        %v3801 = vpack.c.b16 %v3792, %v3791
        %v3802 = vpack.c.b16 %v3794, %v3793
        %3811 = vmatprep.subr.bf16.mxu0 0
        %3812 = vmatpush1.bf16.msra.mxu0 %v3802
        %3813 = vmatprep.subr.bf16.mxu0 0
        %3814 = vmatpush1.bf16.msra.mxu0 %v3801
        %3815 = vmatprep.subr.bf16.mxu0 0
        %3816 = vmatpush1.bf16.msra.mxu0 %v3800
        %3817 = vmatprep.subr.bf16.mxu0 0
        %3818 = vmatpush1.bf16.msra.mxu0 %v3799
        %3819 = vmatprep.subr.bf16.mxu0 0
        %3820 = vmatpush1.bf16.msra.mxu0 %v3798
        %3821 = vmatprep.subr.bf16.mxu0 0
        %3822 = vmatpush1.bf16.msra.mxu0 %v3797
        %3823 = vmatprep.subr.bf16.mxu0 0
        %3824 = vmatpush1.bf16.msra.mxu0 %v3796
        %3825 = vmatprep.subr.bf16.mxu0 0
        %3826 = vmatpush1.bf16.msra.mxu0 %v3795
        %3827 = vmatprep.subr.bf16.mxu0 0
        %3828 = vmatpush2.bf16.msra.mxu0 0
        %3829 = vmatprep.subr.bf16.mxu0 0
        %3830 = vmatpush2.bf16.msra.mxu0 0
        %3831 = vmatprep.subr.bf16.mxu0 0
        %3832 = vmatpush2.bf16.msra.mxu0 0
        %3833 = vmatprep.subr.bf16.mxu0 0
        %3834 = vmatpush2.bf16.msra.mxu0 0
        %3835 = vmatprep.subr.bf16.mxu0 0
        %3836 = vmatpush2.bf16.msra.mxu0 0
        %3837 = vmatprep.subr.bf16.mxu0 0
        %3838 = vmatpush2.bf16.msra.mxu0 0
        %3839 = vmatprep.subr.bf16.mxu0 0
        %3840 = vmatpush2.bf16.msra.mxu0 0
        %3841 = vmatprep.subr.bf16.mxu0 0
        %3842 = vmatpush2.bf16.msra.mxu0 0
        %3843 = vmatprep.mubr.bf16.mxu0 0
        %3844 = vmatmul.mubr.bf16.gmra.mxu0 %v3731
        %v3845 = vpop.f32.mrf.mxu0
        %v3846 = vadd.f32 0.0, %v3845
        %v3847 = vpop.f32.mrf.mxu0
        %v3848 = vpop.f32.mrf.mxu0
        %v3849 = vadd.f32 0.0, %v3848
        %v3850 = vpop.f32.mrf.mxu0
        %3851 = vmatprep.mubr.bf16.mxu0 0
        %3852 = vmatmul.mubr.bf16.gmra.mxu0 %v3732
        %v3853 = vpop.f32.mrf.mxu0
        %v3854 = vadd.f32 0.0, %v3853
        %v3855 = vpop.f32.mrf.mxu0
        %v3856 = vpop.f32.mrf.mxu0
        %v3857 = vadd.f32 0.0, %v3856
        %v3858 = vpop.f32.mrf.mxu0
        %3859 = vmatprep.mubr.bf16.mxu0 0
        %3860 = vmatmul.mubr.bf16.gmra.mxu0 %v3733
        %v3861 = vpop.f32.mrf.mxu0
        %v3862 = vadd.f32 0.0, %v3861
        %v3863 = vpop.f32.mrf.mxu0
        %v3864 = vpop.f32.mrf.mxu0
        %v3865 = vadd.f32 0.0, %v3864
        %v3866 = vpop.f32.mrf.mxu0
        %3867 = vmatprep.mubr.bf16.mxu0 0
        %3868 = vmatmul.mubr.bf16.gmra.mxu0 %v3734
        %v3869 = vpop.f32.mrf.mxu0
        %v3870 = vadd.f32 0.0, %v3869
        %v3871 = vpop.f32.mrf.mxu0
        %v3872 = vpop.f32.mrf.mxu0
        %v3873 = vadd.f32 0.0, %v3872
        %v3874 = vpop.f32.mrf.mxu0
        %3875 = vmatprep.mubr.bf16.mxu0 0
        %3876 = vmatmul.mubr.bf16.gmra.mxu0 %v3735
        %v3877 = vpop.f32.mrf.mxu0
        %v3878 = vadd.f32 0.0, %v3877
        %v3879 = vpop.f32.mrf.mxu0
        %v3880 = vpop.f32.mrf.mxu0
        %v3881 = vadd.f32 0.0, %v3880
        %v3882 = vpop.f32.mrf.mxu0
        %3883 = vmatprep.mubr.bf16.mxu0 0
        %3884 = vmatmul.mubr.bf16.gmra.mxu0 %v3736
        %v3885 = vpop.f32.mrf.mxu0
        %v3886 = vadd.f32 0.0, %v3885
        %v3887 = vpop.f32.mrf.mxu0
        %v3888 = vpop.f32.mrf.mxu0
        %v3889 = vadd.f32 0.0, %v3888
        %v3890 = vpop.f32.mrf.mxu0
        %3891 = vmatprep.mubr.bf16.mxu0 0
        %3892 = vmatmul.mubr.bf16.gmra.mxu0 %v3737
        %v3893 = vpop.f32.mrf.mxu0
        %v3894 = vadd.f32 0.0, %v3893
        %v3895 = vpop.f32.mrf.mxu0
        %v3896 = vpop.f32.mrf.mxu0
        %v3897 = vadd.f32 0.0, %v3896
        %v3898 = vpop.f32.mrf.mxu0
        %3899 = vmatprep.mubr.bf16.mxu0 0
        %3900 = vmatmul.mubr.bf16.gmra.mxu0 %v3738
        %v3901 = vpop.f32.mrf.mxu0
        %v3902 = vadd.f32 0.0, %v3901
        %v3903 = vpop.f32.mrf.mxu0
        %v3904 = vpop.f32.mrf.mxu0
        %v3905 = vadd.f32 0.0, %v3904
        %v3906 = vpop.f32.mrf.mxu0
        %3907 = vmatprep.mubr.bf16.mxu0 0
        %3908 = vmatmul.mubr.bf16.gmra.mxu0 %v3739
        %v3909 = vpop.f32.mrf.mxu0
        %v3910 = vadd.f32 0.0, %v3909
        %v3911 = vpop.f32.mrf.mxu0
        %v3912 = vpop.f32.mrf.mxu0
        %v3913 = vadd.f32 0.0, %v3912
        %v3914 = vpop.f32.mrf.mxu0
        %3915 = vmatprep.mubr.bf16.mxu0 0
        %3916 = vmatmul.mubr.bf16.gmra.mxu0 %v3740
        %v3917 = vpop.f32.mrf.mxu0
        %v3918 = vadd.f32 0.0, %v3917
        %v3919 = vpop.f32.mrf.mxu0
        %v3920 = vpop.f32.mrf.mxu0
        %v3921 = vadd.f32 0.0, %v3920
        %v3922 = vpop.f32.mrf.mxu0
        %3923 = vmatprep.mubr.bf16.mxu0 0
        %3924 = vmatmul.mubr.bf16.gmra.mxu0 %v3741
        %v3925 = vpop.f32.mrf.mxu0
        %v3926 = vadd.f32 0.0, %v3925
        %v3927 = vpop.f32.mrf.mxu0
        %v3928 = vpop.f32.mrf.mxu0
        %v3929 = vadd.f32 0.0, %v3928
        %v3930 = vpop.f32.mrf.mxu0
        %3931 = vmatprep.mubr.bf16.mxu0 0
        %3932 = vmatmul.mubr.bf16.gmra.mxu0 %v3742
        %v3933 = vpop.f32.mrf.mxu0
        %v3934 = vadd.f32 0.0, %v3933
        %v3935 = vpop.f32.mrf.mxu0
        %v3936 = vpop.f32.mrf.mxu0
        %v3937 = vadd.f32 0.0, %v3936
        %v3938 = vpop.f32.mrf.mxu0
        %3939 = vmatprep.mubr.bf16.mxu0 0
        %3940 = vmatmul.mubr.bf16.gmra.mxu0 %v3743
        %v3941 = vpop.f32.mrf.mxu0
        %v3942 = vadd.f32 0.0, %v3941
        %v3943 = vpop.f32.mrf.mxu0
        %v3944 = vpop.f32.mrf.mxu0
        %v3945 = vadd.f32 0.0, %v3944
        %v3946 = vpop.f32.mrf.mxu0
        %3947 = vmatprep.mubr.bf16.mxu0 0
        %3948 = vmatmul.mubr.bf16.gmra.mxu0 %v3744
        %v3949 = vpop.f32.mrf.mxu0
        %v3950 = vadd.f32 0.0, %v3949
        %v3951 = vpop.f32.mrf.mxu0
        %v3952 = vpop.f32.mrf.mxu0
        %v3953 = vadd.f32 0.0, %v3952
        %v3954 = vpop.f32.mrf.mxu0
        %3955 = vmatprep.mubr.bf16.mxu0 0
        %3956 = vmatmul.mubr.bf16.gmra.mxu0 %v3745
        %v3957 = vpop.f32.mrf.mxu0
        %v3958 = vadd.f32 0.0, %v3957
        %v3959 = vpop.f32.mrf.mxu0
        %v3960 = vpop.f32.mrf.mxu0
        %v3961 = vadd.f32 0.0, %v3960
        %v3962 = vpop.f32.mrf.mxu0
        %3963 = vmatprep.mubr.bf16.mxu0 0
        %3964 = vmatmul.mubr.bf16.gmra.mxu0 %v3746
        %v3965 = vpop.f32.mrf.mxu0
        %v3966 = vadd.f32 0.0, %v3965
        %v3967 = vpop.f32.mrf.mxu0
        %v3968 = vpop.f32.mrf.mxu0
        %v3969 = vadd.f32 0.0, %v3968
        %v3970 = vpop.f32.mrf.mxu0
        %3971 = vdwg.mxu0
        %v3988 = vunpack.c.l.b16 %v3265
        %v3989 = vunpack.c.l.b16 %v3266
        %v3990 = vunpack.c.l.b16 %v3267
        %v3991 = vunpack.c.l.b16 %v3268
        %v3992 = vunpack.c.l.b16 %v3269
        %v3993 = vunpack.c.l.b16 %v3270
        %v3994 = vunpack.c.l.b16 %v3271
        %v3995 = vunpack.c.l.b16 %v3272
        %v3996 = vunpack.c.l.b16 %v3273
        %v3997 = vunpack.c.l.b16 %v3274
        %v3998 = vunpack.c.l.b16 %v3275
        %v3999 = vunpack.c.l.b16 %v3276
        %v4000 = vunpack.c.l.b16 %v3277
        %v4001 = vunpack.c.l.b16 %v3278
        %v4002 = vunpack.c.l.b16 %v3279
        %v4003 = vunpack.c.l.b16 %v3280
        %v4004 = vpack.c.b16 %v3989, %v3988
        %v4005 = vpack.c.b16 %v3991, %v3990
        %v4006 = vpack.c.b16 %v3993, %v3992
        %v4007 = vpack.c.b16 %v3995, %v3994
        %v4008 = vpack.c.b16 %v3997, %v3996
        %v4009 = vpack.c.b16 %v3999, %v3998
        %v4010 = vpack.c.b16 %v4001, %v4000
        %v4011 = vpack.c.b16 %v4003, %v4002
        %4020 = vmatprep.subr.bf16.mxu0 0
        %4021 = vmatpush1.bf16.msra.mxu0 %v4011
        %4022 = vmatprep.subr.bf16.mxu0 0
        %4023 = vmatpush1.bf16.msra.mxu0 %v4010
        %4024 = vmatprep.subr.bf16.mxu0 0
        %4025 = vmatpush1.bf16.msra.mxu0 %v4009
        %4026 = vmatprep.subr.bf16.mxu0 0
        %4027 = vmatpush1.bf16.msra.mxu0 %v4008
        %4028 = vmatprep.subr.bf16.mxu0 0
        %4029 = vmatpush1.bf16.msra.mxu0 %v4007
        %4030 = vmatprep.subr.bf16.mxu0 0
        %4031 = vmatpush1.bf16.msra.mxu0 %v4006
        %4032 = vmatprep.subr.bf16.mxu0 0
        %4033 = vmatpush1.bf16.msra.mxu0 %v4005
        %4034 = vmatprep.subr.bf16.mxu0 0
        %4035 = vmatpush1.bf16.msra.mxu0 %v4004
        %4036 = vmatprep.subr.bf16.mxu0 0
        %4037 = vmatpush2.bf16.msra.mxu0 0
        %4038 = vmatprep.subr.bf16.mxu0 0
        %4039 = vmatpush2.bf16.msra.mxu0 0
        %4040 = vmatprep.subr.bf16.mxu0 0
        %4041 = vmatpush2.bf16.msra.mxu0 0
        %4042 = vmatprep.subr.bf16.mxu0 0
        %4043 = vmatpush2.bf16.msra.mxu0 0
        %4044 = vmatprep.subr.bf16.mxu0 0
        %4045 = vmatpush2.bf16.msra.mxu0 0
        %4046 = vmatprep.subr.bf16.mxu0 0
        %4047 = vmatpush2.bf16.msra.mxu0 0
        %4048 = vmatprep.subr.bf16.mxu0 0
        %4049 = vmatpush2.bf16.msra.mxu0 0
        %4050 = vmatprep.subr.bf16.mxu0 0
        %4051 = vmatpush2.bf16.msra.mxu0 0
        %4052 = vmatprep.mubr.bf16.mxu0 0
        %4053 = vmatmul.mubr.bf16.gmra.mxu0 %v3249
        %v4054 = vpop.f32.mrf.mxu0
        %v4055 = vadd.f32 %v3846, %v4054
        %v4056 = vpop.f32.mrf.mxu0
        %v4057 = vpop.f32.mrf.mxu0
        %v4058 = vadd.f32 %v3849, %v4057
        %v4059 = vpop.f32.mrf.mxu0
        %4060 = vmatprep.mubr.bf16.mxu0 0
        %4061 = vmatmul.mubr.bf16.gmra.mxu0 %v3250
        %v4062 = vpop.f32.mrf.mxu0
        %v4063 = vadd.f32 %v3854, %v4062
        %v4064 = vpop.f32.mrf.mxu0
        %v4065 = vpop.f32.mrf.mxu0
        %v4066 = vadd.f32 %v3857, %v4065
        %v4067 = vpop.f32.mrf.mxu0
        %4068 = vmatprep.mubr.bf16.mxu0 0
        %4069 = vmatmul.mubr.bf16.gmra.mxu0 %v3251
        %v4070 = vpop.f32.mrf.mxu0
        %v4071 = vadd.f32 %v3862, %v4070
        %v4072 = vpop.f32.mrf.mxu0
        %v4073 = vpop.f32.mrf.mxu0
        %v4074 = vadd.f32 %v3865, %v4073
        %v4075 = vpop.f32.mrf.mxu0
        %4076 = vmatprep.mubr.bf16.mxu0 0
        %4077 = vmatmul.mubr.bf16.gmra.mxu0 %v3252
        %v4078 = vpop.f32.mrf.mxu0
        %v4079 = vadd.f32 %v3870, %v4078
        %v4080 = vpop.f32.mrf.mxu0
        %v4081 = vpop.f32.mrf.mxu0
        %v4082 = vadd.f32 %v3873, %v4081
        %v4083 = vpop.f32.mrf.mxu0
        %4084 = vmatprep.mubr.bf16.mxu0 0
        %4085 = vmatmul.mubr.bf16.gmra.mxu0 %v3253
        %v4086 = vpop.f32.mrf.mxu0
        %v4087 = vadd.f32 %v3878, %v4086
        %v4088 = vpop.f32.mrf.mxu0
        %v4089 = vpop.f32.mrf.mxu0
        %v4090 = vadd.f32 %v3881, %v4089
        %v4091 = vpop.f32.mrf.mxu0
        %4092 = vmatprep.mubr.bf16.mxu0 0
        %4093 = vmatmul.mubr.bf16.gmra.mxu0 %v3254
        %v4094 = vpop.f32.mrf.mxu0
        %v4095 = vadd.f32 %v3886, %v4094
        %v4096 = vpop.f32.mrf.mxu0
        %v4097 = vpop.f32.mrf.mxu0
        %v4098 = vadd.f32 %v3889, %v4097
        %v4099 = vpop.f32.mrf.mxu0
        %4100 = vmatprep.mubr.bf16.mxu0 0
        %4101 = vmatmul.mubr.bf16.gmra.mxu0 %v3255
        %v4102 = vpop.f32.mrf.mxu0
        %v4103 = vadd.f32 %v3894, %v4102
        %v4104 = vpop.f32.mrf.mxu0
        %v4105 = vpop.f32.mrf.mxu0
        %v4106 = vadd.f32 %v3897, %v4105
        %v4107 = vpop.f32.mrf.mxu0
        %4108 = vmatprep.mubr.bf16.mxu0 0
        %4109 = vmatmul.mubr.bf16.gmra.mxu0 %v3256
        %v4110 = vpop.f32.mrf.mxu0
        %v4111 = vadd.f32 %v3902, %v4110
        %v4112 = vpop.f32.mrf.mxu0
        %v4113 = vpop.f32.mrf.mxu0
        %v4114 = vadd.f32 %v3905, %v4113
        %v4115 = vpop.f32.mrf.mxu0
        %4116 = vmatprep.mubr.bf16.mxu0 0
        %4117 = vmatmul.mubr.bf16.gmra.mxu0 %v3257
        %v4118 = vpop.f32.mrf.mxu0
        %v4119 = vadd.f32 %v3910, %v4118
        %v4120 = vpop.f32.mrf.mxu0
        %v4121 = vpop.f32.mrf.mxu0
        %v4122 = vadd.f32 %v3913, %v4121
        %v4123 = vpop.f32.mrf.mxu0
        %4124 = vmatprep.mubr.bf16.mxu0 0
        %4125 = vmatmul.mubr.bf16.gmra.mxu0 %v3258
        %v4126 = vpop.f32.mrf.mxu0
        %v4127 = vadd.f32 %v3918, %v4126
        %v4128 = vpop.f32.mrf.mxu0
        %v4129 = vpop.f32.mrf.mxu0
        %v4130 = vadd.f32 %v3921, %v4129
        %v4131 = vpop.f32.mrf.mxu0
        %4132 = vmatprep.mubr.bf16.mxu0 0
        %4133 = vmatmul.mubr.bf16.gmra.mxu0 %v3259
        %v4134 = vpop.f32.mrf.mxu0
        %v4135 = vadd.f32 %v3926, %v4134
        %v4136 = vpop.f32.mrf.mxu0
        %v4137 = vpop.f32.mrf.mxu0
        %v4138 = vadd.f32 %v3929, %v4137
        %v4139 = vpop.f32.mrf.mxu0
        %4140 = vmatprep.mubr.bf16.mxu0 0
        %4141 = vmatmul.mubr.bf16.gmra.mxu0 %v3260
        %v4142 = vpop.f32.mrf.mxu0
        %v4143 = vadd.f32 %v3934, %v4142
        %v4144 = vpop.f32.mrf.mxu0
        %v4145 = vpop.f32.mrf.mxu0
        %v4146 = vadd.f32 %v3937, %v4145
        %v4147 = vpop.f32.mrf.mxu0
        %4148 = vmatprep.mubr.bf16.mxu0 0
        %4149 = vmatmul.mubr.bf16.gmra.mxu0 %v3261
        %v4150 = vpop.f32.mrf.mxu0
        %v4151 = vadd.f32 %v3942, %v4150
        %v4152 = vpop.f32.mrf.mxu0
        %v4153 = vpop.f32.mrf.mxu0
        %v4154 = vadd.f32 %v3945, %v4153
        %v4155 = vpop.f32.mrf.mxu0
        %4156 = vmatprep.mubr.bf16.mxu0 0
        %4157 = vmatmul.mubr.bf16.gmra.mxu0 %v3262
        %v4158 = vpop.f32.mrf.mxu0
        %v4159 = vadd.f32 %v3950, %v4158
        %v4160 = vpop.f32.mrf.mxu0
        %v4161 = vpop.f32.mrf.mxu0
        %v4162 = vadd.f32 %v3953, %v4161
        %v4163 = vpop.f32.mrf.mxu0
        %4164 = vmatprep.mubr.bf16.mxu0 0
        %4165 = vmatmul.mubr.bf16.gmra.mxu0 %v3263
        %v4166 = vpop.f32.mrf.mxu0
        %v4167 = vadd.f32 %v3958, %v4166
        %v4168 = vpop.f32.mrf.mxu0
        %v4169 = vpop.f32.mrf.mxu0
        %v4170 = vadd.f32 %v3961, %v4169
        %v4171 = vpop.f32.mrf.mxu0
        %4172 = vmatprep.mubr.bf16.mxu0 0
        %4173 = vmatmul.mubr.bf16.gmra.mxu0 %v3264
        %v4174 = vpop.f32.mrf.mxu0
        %v4175 = vadd.f32 %v3966, %v4174
        %v4176 = vpop.f32.mrf.mxu0
        %v4177 = vpop.f32.mrf.mxu0
        %v4178 = vadd.f32 %v3969, %v4177
        %v4179 = vpop.f32.mrf.mxu0
        %4180 = vdwg.mxu0
        %v4181 = vld [vmem:[%s3 + $0x8] sm:$0xf]
        %v4182 = vld [vmem:[%s3 + $0x14] sm:$0xf]
        %v4183 = vld [vmem:[%s3 + $0x20] sm:$0xf]
        %v4184 = vld [vmem:[%s3 + $0x2c] sm:$0xf]
        %v4185 = vld [vmem:[%s3 + $0x38] sm:$0xf]
        %v4186 = vld [vmem:[%s3 + $0x44] sm:$0xf]
        %v4187 = vld [vmem:[%s3 + $0x50] sm:$0xf]
        %v4188 = vld [vmem:[%s3 + $0x5c] sm:$0xf]
        %v4189 = vld [vmem:[%s3 + $0x68] sm:$0xf]
        %v4190 = vld [vmem:[%s3 + $0x74] sm:$0xf]
        %v4191 = vld [vmem:[%s3 + $0x80] sm:$0xf]
        %v4192 = vld [vmem:[%s3 + $0x8c] sm:$0xf]
        %v4193 = vld [vmem:[%s3 + $0x98] sm:$0xf]
        %v4194 = vld [vmem:[%s3 + $0xa4] sm:$0xf]
        %v4195 = vld [vmem:[%s3 + $0xb0] sm:$0xf]
        %v4196 = vld [vmem:[%s3 + $0xbc] sm:$0xf]
        %v4197 = vld [vmem:[%s4 + $0x8] sm:$0xf]
        %v4198 = vld [vmem:[%s4 + $0x14] sm:$0xf]
        %v4199 = vld [vmem:[%s4 + $0x20] sm:$0xf]
        %v4200 = vld [vmem:[%s4 + $0x2c] sm:$0xf]
        %v4201 = vld [vmem:[%s4 + $0x38] sm:$0xf]
        %v4202 = vld [vmem:[%s4 + $0x44] sm:$0xf]
        %v4203 = vld [vmem:[%s4 + $0x50] sm:$0xf]
        %v4204 = vld [vmem:[%s4 + $0x5c] sm:$0xf]
        %v4213 = vunpack.c.l.b16 %v4197
        %v4214 = vunpack.c.l.b16 %v4198
        %v4215 = vunpack.c.l.b16 %v4199
        %v4216 = vunpack.c.l.b16 %v4200
        %v4217 = vunpack.c.l.b16 %v4201
        %v4218 = vunpack.c.l.b16 %v4202
        %v4219 = vunpack.c.l.b16 %v4203
        %v4220 = vunpack.c.l.b16 %v4204
        %v4221 = vpack.c.b16 %v4214, %v4213
        %v4222 = vpack.c.b16 %v4216, %v4215
        %v4223 = vpack.c.b16 %v4218, %v4217
        %v4224 = vpack.c.b16 %v4220, %v4219
        %4229 = vmatprep.subr.bf16.mxu0 0
        %4230 = vmatpush1.bf16.msra.mxu0 0
        %4231 = vmatprep.subr.bf16.mxu0 0
        %4232 = vmatpush1.bf16.msra.mxu0 0
        %4233 = vmatprep.subr.bf16.mxu0 0
        %4234 = vmatpush1.bf16.msra.mxu0 0
        %4235 = vmatprep.subr.bf16.mxu0 0
        %4236 = vmatpush1.bf16.msra.mxu0 0
        %4237 = vmatprep.subr.bf16.mxu0 0
        %4238 = vmatpush1.bf16.msra.mxu0 %v4224
        %4239 = vmatprep.subr.bf16.mxu0 0
        %4240 = vmatpush1.bf16.msra.mxu0 %v4223
        %4241 = vmatprep.subr.bf16.mxu0 0
        %4242 = vmatpush1.bf16.msra.mxu0 %v4222
        %4243 = vmatprep.subr.bf16.mxu0 0
        %4244 = vmatpush1.bf16.msra.mxu0 %v4221
        %4245 = vmatprep.subr.bf16.mxu0 0
        %4246 = vmatpush2.bf16.msra.mxu0 0
        %4247 = vmatprep.subr.bf16.mxu0 0
        %4248 = vmatpush2.bf16.msra.mxu0 0
        %4249 = vmatprep.subr.bf16.mxu0 0
        %4250 = vmatpush2.bf16.msra.mxu0 0
        %4251 = vmatprep.subr.bf16.mxu0 0
        %4252 = vmatpush2.bf16.msra.mxu0 0
        %4253 = vmatprep.subr.bf16.mxu0 0
        %4254 = vmatpush2.bf16.msra.mxu0 0
        %4255 = vmatprep.subr.bf16.mxu0 0
        %4256 = vmatpush2.bf16.msra.mxu0 0
        %4257 = vmatprep.subr.bf16.mxu0 0
        %4258 = vmatpush2.bf16.msra.mxu0 0
        %4259 = vmatprep.subr.bf16.mxu0 0
        %4260 = vmatpush2.bf16.msra.mxu0 0
        %4261 = vmatprep.mubr.bf16.mxu0 0
        %4262 = vmatmul.mubr.bf16.gmra.mxu0 %v612
        %v4263 = vpop.f32.mrf.mxu0
        %v4264 = vadd.f32 0.0, %v4263
        %v4265 = vpop.f32.mrf.mxu0
        %v4266 = vpop.f32.mrf.mxu0
        %v4267 = vadd.f32 0.0, %v4266
        %v4268 = vpop.f32.mrf.mxu0
        %4269 = vmatprep.mubr.bf16.mxu0 0
        %4270 = vmatmul.mubr.bf16.gmra.mxu0 %v615
        %v4271 = vpop.f32.mrf.mxu0
        %v4272 = vadd.f32 0.0, %v4271
        %v4273 = vpop.f32.mrf.mxu0
        %v4274 = vpop.f32.mrf.mxu0
        %v4275 = vadd.f32 0.0, %v4274
        %v4276 = vpop.f32.mrf.mxu0
        %4277 = vmatprep.mubr.bf16.mxu0 0
        %4278 = vmatmul.mubr.bf16.gmra.mxu0 %v618
        %v4279 = vpop.f32.mrf.mxu0
        %v4280 = vadd.f32 0.0, %v4279
        %v4281 = vpop.f32.mrf.mxu0
        %v4282 = vpop.f32.mrf.mxu0
        %v4283 = vadd.f32 0.0, %v4282
        %v4284 = vpop.f32.mrf.mxu0
        %4285 = vmatprep.mubr.bf16.mxu0 0
        %4286 = vmatmul.mubr.bf16.gmra.mxu0 %v621
        %v4287 = vpop.f32.mrf.mxu0
        %v4288 = vadd.f32 0.0, %v4287
        %v4289 = vpop.f32.mrf.mxu0
        %v4290 = vpop.f32.mrf.mxu0
        %v4291 = vadd.f32 0.0, %v4290
        %v4292 = vpop.f32.mrf.mxu0
        %4293 = vmatprep.mubr.bf16.mxu0 0
        %4294 = vmatmul.mubr.bf16.gmra.mxu0 %v624
        %v4295 = vpop.f32.mrf.mxu0
        %v4296 = vadd.f32 0.0, %v4295
        %v4297 = vpop.f32.mrf.mxu0
        %v4298 = vpop.f32.mrf.mxu0
        %v4299 = vadd.f32 0.0, %v4298
        %v4300 = vpop.f32.mrf.mxu0
        %4301 = vmatprep.mubr.bf16.mxu0 0
        %4302 = vmatmul.mubr.bf16.gmra.mxu0 %v627
        %v4303 = vpop.f32.mrf.mxu0
        %v4304 = vadd.f32 0.0, %v4303
        %v4305 = vpop.f32.mrf.mxu0
        %v4306 = vpop.f32.mrf.mxu0
        %v4307 = vadd.f32 0.0, %v4306
        %v4308 = vpop.f32.mrf.mxu0
        %4309 = vmatprep.mubr.bf16.mxu0 0
        %4310 = vmatmul.mubr.bf16.gmra.mxu0 %v630
        %v4311 = vpop.f32.mrf.mxu0
        %v4312 = vadd.f32 0.0, %v4311
        %v4313 = vpop.f32.mrf.mxu0
        %v4314 = vpop.f32.mrf.mxu0
        %v4315 = vadd.f32 0.0, %v4314
        %v4316 = vpop.f32.mrf.mxu0
        %4317 = vmatprep.mubr.bf16.mxu0 0
        %4318 = vmatmul.mubr.bf16.gmra.mxu0 %v633
        %v4319 = vpop.f32.mrf.mxu0
        %v4320 = vadd.f32 0.0, %v4319
        %v4321 = vpop.f32.mrf.mxu0
        %v4322 = vpop.f32.mrf.mxu0
        %v4323 = vadd.f32 0.0, %v4322
        %v4324 = vpop.f32.mrf.mxu0
        %4325 = vmatprep.mubr.bf16.mxu0 0
        %4326 = vmatmul.mubr.bf16.gmra.mxu0 %v636
        %v4327 = vpop.f32.mrf.mxu0
        %v4328 = vadd.f32 0.0, %v4327
        %v4329 = vpop.f32.mrf.mxu0
        %v4330 = vpop.f32.mrf.mxu0
        %v4331 = vadd.f32 0.0, %v4330
        %v4332 = vpop.f32.mrf.mxu0
        %4333 = vmatprep.mubr.bf16.mxu0 0
        %4334 = vmatmul.mubr.bf16.gmra.mxu0 %v639
        %v4335 = vpop.f32.mrf.mxu0
        %v4336 = vadd.f32 0.0, %v4335
        %v4337 = vpop.f32.mrf.mxu0
        %v4338 = vpop.f32.mrf.mxu0
        %v4339 = vadd.f32 0.0, %v4338
        %v4340 = vpop.f32.mrf.mxu0
        %4341 = vmatprep.mubr.bf16.mxu0 0
        %4342 = vmatmul.mubr.bf16.gmra.mxu0 %v642
        %v4343 = vpop.f32.mrf.mxu0
        %v4344 = vadd.f32 0.0, %v4343
        %v4345 = vpop.f32.mrf.mxu0
        %v4346 = vpop.f32.mrf.mxu0
        %v4347 = vadd.f32 0.0, %v4346
        %v4348 = vpop.f32.mrf.mxu0
        %4349 = vmatprep.mubr.bf16.mxu0 0
        %4350 = vmatmul.mubr.bf16.gmra.mxu0 %v645
        %v4351 = vpop.f32.mrf.mxu0
        %v4352 = vadd.f32 0.0, %v4351
        %v4353 = vpop.f32.mrf.mxu0
        %v4354 = vpop.f32.mrf.mxu0
        %v4355 = vadd.f32 0.0, %v4354
        %v4356 = vpop.f32.mrf.mxu0
        %4357 = vmatprep.mubr.bf16.mxu0 0
        %4358 = vmatmul.mubr.bf16.gmra.mxu0 %v648
        %v4359 = vpop.f32.mrf.mxu0
        %v4360 = vadd.f32 0.0, %v4359
        %v4361 = vpop.f32.mrf.mxu0
        %v4362 = vpop.f32.mrf.mxu0
        %v4363 = vadd.f32 0.0, %v4362
        %v4364 = vpop.f32.mrf.mxu0
        %4365 = vmatprep.mubr.bf16.mxu0 0
        %4366 = vmatmul.mubr.bf16.gmra.mxu0 %v651
        %v4367 = vpop.f32.mrf.mxu0
        %v4368 = vadd.f32 0.0, %v4367
        %v4369 = vpop.f32.mrf.mxu0
        %v4370 = vpop.f32.mrf.mxu0
        %v4371 = vadd.f32 0.0, %v4370
        %v4372 = vpop.f32.mrf.mxu0
        %4373 = vmatprep.mubr.bf16.mxu0 0
        %4374 = vmatmul.mubr.bf16.gmra.mxu0 %v654
        %v4375 = vpop.f32.mrf.mxu0
        %v4376 = vadd.f32 0.0, %v4375
        %v4377 = vpop.f32.mrf.mxu0
        %v4378 = vpop.f32.mrf.mxu0
        %v4379 = vadd.f32 0.0, %v4378
        %v4380 = vpop.f32.mrf.mxu0
        %4381 = vmatprep.mubr.bf16.mxu0 0
        %4382 = vmatmul.mubr.bf16.gmra.mxu0 %v1651
        %v4383 = vpop.f32.mrf.mxu0
        %v4384 = vadd.f32 0.0, %v4383
        %v4385 = vpop.f32.mrf.mxu0
        %v4386 = vpop.f32.mrf.mxu0
        %v4387 = vadd.f32 0.0, %v4386
        %v4388 = vpop.f32.mrf.mxu0
        %4389 = vdwg.mxu0
        %v4406 = vunpack.c.l.b16 %v4181
        %v4407 = vunpack.c.l.b16 %v4182
        %v4408 = vunpack.c.l.b16 %v4183
        %v4409 = vunpack.c.l.b16 %v4184
        %v4410 = vunpack.c.l.b16 %v4185
        %v4411 = vunpack.c.l.b16 %v4186
        %v4412 = vunpack.c.l.b16 %v4187
        %v4413 = vunpack.c.l.b16 %v4188
        %v4414 = vunpack.c.l.b16 %v4189
        %v4415 = vunpack.c.l.b16 %v4190
        %v4416 = vunpack.c.l.b16 %v4191
        %v4417 = vunpack.c.l.b16 %v4192
        %v4418 = vunpack.c.l.b16 %v4193
        %v4419 = vunpack.c.l.b16 %v4194
        %v4420 = vunpack.c.l.b16 %v4195
        %v4421 = vunpack.c.l.b16 %v4196
        %v4422 = vpack.c.b16 %v4407, %v4406
        %v4423 = vpack.c.b16 %v4409, %v4408
        %v4424 = vpack.c.b16 %v4411, %v4410
        %v4425 = vpack.c.b16 %v4413, %v4412
        %v4426 = vpack.c.b16 %v4415, %v4414
        %v4427 = vpack.c.b16 %v4417, %v4416
        %v4428 = vpack.c.b16 %v4419, %v4418
        %v4429 = vpack.c.b16 %v4421, %v4420
        %4438 = vmatprep.subr.bf16.mxu0 0
        %4439 = vmatpush1.bf16.msra.mxu0 %v4429
        %4440 = vmatprep.subr.bf16.mxu0 0
        %4441 = vmatpush1.bf16.msra.mxu0 %v4428
        %4442 = vmatprep.subr.bf16.mxu0 0
        %4443 = vmatpush1.bf16.msra.mxu0 %v4427
        %4444 = vmatprep.subr.bf16.mxu0 0
        %4445 = vmatpush1.bf16.msra.mxu0 %v4426
        %4446 = vmatprep.subr.bf16.mxu0 0
        %4447 = vmatpush1.bf16.msra.mxu0 %v4425
        %4448 = vmatprep.subr.bf16.mxu0 0
        %4449 = vmatpush1.bf16.msra.mxu0 %v4424
        %4450 = vmatprep.subr.bf16.mxu0 0
        %4451 = vmatpush1.bf16.msra.mxu0 %v4423
        %4452 = vmatprep.subr.bf16.mxu0 0
        %4453 = vmatpush1.bf16.msra.mxu0 %v4422
        %4454 = vmatprep.subr.bf16.mxu0 0
        %4455 = vmatpush2.bf16.msra.mxu0 0
        %4456 = vmatprep.subr.bf16.mxu0 0
        %4457 = vmatpush2.bf16.msra.mxu0 0
        %4458 = vmatprep.subr.bf16.mxu0 0
        %4459 = vmatpush2.bf16.msra.mxu0 0
        %4460 = vmatprep.subr.bf16.mxu0 0
        %4461 = vmatpush2.bf16.msra.mxu0 0
        %4462 = vmatprep.subr.bf16.mxu0 0
        %4463 = vmatpush2.bf16.msra.mxu0 0
        %4464 = vmatprep.subr.bf16.mxu0 0
        %4465 = vmatpush2.bf16.msra.mxu0 0
        %4466 = vmatprep.subr.bf16.mxu0 0
        %4467 = vmatpush2.bf16.msra.mxu0 0
        %4468 = vmatprep.subr.bf16.mxu0 0
        %4469 = vmatpush2.bf16.msra.mxu0 0
        %4470 = vmatprep.mubr.bf16.mxu0 0
        %4471 = vmatmul.mubr.bf16.gmra.mxu0 %v2783
        %v4472 = vpop.f32.mrf.mxu0
        %v4473 = vadd.f32 %v4264, %v4472
        %v4474 = vpop.f32.mrf.mxu0
        %v4475 = vpop.f32.mrf.mxu0
        %v4476 = vadd.f32 %v4267, %v4475
        %v4477 = vpop.f32.mrf.mxu0
        %4478 = vmatprep.mubr.bf16.mxu0 0
        %4479 = vmatmul.mubr.bf16.gmra.mxu0 %v2784
        %v4480 = vpop.f32.mrf.mxu0
        %v4481 = vadd.f32 %v4272, %v4480
        %v4482 = vpop.f32.mrf.mxu0
        %v4483 = vpop.f32.mrf.mxu0
        %v4484 = vadd.f32 %v4275, %v4483
        %v4485 = vpop.f32.mrf.mxu0
        %4486 = vmatprep.mubr.bf16.mxu0 0
        %4487 = vmatmul.mubr.bf16.gmra.mxu0 %v2785
        %v4488 = vpop.f32.mrf.mxu0
        %v4489 = vadd.f32 %v4280, %v4488
        %v4490 = vpop.f32.mrf.mxu0
        %v4491 = vpop.f32.mrf.mxu0
        %v4492 = vadd.f32 %v4283, %v4491
        %v4493 = vpop.f32.mrf.mxu0
        %4494 = vmatprep.mubr.bf16.mxu0 0
        %4495 = vmatmul.mubr.bf16.gmra.mxu0 %v2786
        %v4496 = vpop.f32.mrf.mxu0
        %v4497 = vadd.f32 %v4288, %v4496
        %v4498 = vpop.f32.mrf.mxu0
        %v4499 = vpop.f32.mrf.mxu0
        %v4500 = vadd.f32 %v4291, %v4499
        %v4501 = vpop.f32.mrf.mxu0
        %4502 = vmatprep.mubr.bf16.mxu0 0
        %4503 = vmatmul.mubr.bf16.gmra.mxu0 %v2787
        %v4504 = vpop.f32.mrf.mxu0
        %v4505 = vadd.f32 %v4296, %v4504
        %v4506 = vpop.f32.mrf.mxu0
        %v4507 = vpop.f32.mrf.mxu0
        %v4508 = vadd.f32 %v4299, %v4507
        %v4509 = vpop.f32.mrf.mxu0
        %4510 = vmatprep.mubr.bf16.mxu0 0
        %4511 = vmatmul.mubr.bf16.gmra.mxu0 %v2788
        %v4512 = vpop.f32.mrf.mxu0
        %v4513 = vadd.f32 %v4304, %v4512
        %v4514 = vpop.f32.mrf.mxu0
        %v4515 = vpop.f32.mrf.mxu0
        %v4516 = vadd.f32 %v4307, %v4515
        %v4517 = vpop.f32.mrf.mxu0
        %4518 = vmatprep.mubr.bf16.mxu0 0
        %4519 = vmatmul.mubr.bf16.gmra.mxu0 %v2789
        %v4520 = vpop.f32.mrf.mxu0
        %v4521 = vadd.f32 %v4312, %v4520
        %v4522 = vpop.f32.mrf.mxu0
        %v4523 = vpop.f32.mrf.mxu0
        %v4524 = vadd.f32 %v4315, %v4523
        %v4525 = vpop.f32.mrf.mxu0
        %4526 = vmatprep.mubr.bf16.mxu0 0
        %4527 = vmatmul.mubr.bf16.gmra.mxu0 %v2790
        %v4528 = vpop.f32.mrf.mxu0
        %v4529 = vadd.f32 %v4320, %v4528
        %v4530 = vpop.f32.mrf.mxu0
        %v4531 = vpop.f32.mrf.mxu0
        %v4532 = vadd.f32 %v4323, %v4531
        %v4533 = vpop.f32.mrf.mxu0
        %4534 = vmatprep.mubr.bf16.mxu0 0
        %4535 = vmatmul.mubr.bf16.gmra.mxu0 %v2791
        %v4536 = vpop.f32.mrf.mxu0
        %v4537 = vadd.f32 %v4328, %v4536
        %v4538 = vpop.f32.mrf.mxu0
        %v4539 = vpop.f32.mrf.mxu0
        %v4540 = vadd.f32 %v4331, %v4539
        %v4541 = vpop.f32.mrf.mxu0
        %4542 = vmatprep.mubr.bf16.mxu0 0
        %4543 = vmatmul.mubr.bf16.gmra.mxu0 %v2792
        %v4544 = vpop.f32.mrf.mxu0
        %v4545 = vadd.f32 %v4336, %v4544
        %v4546 = vpop.f32.mrf.mxu0
        %v4547 = vpop.f32.mrf.mxu0
        %v4548 = vadd.f32 %v4339, %v4547
        %v4549 = vpop.f32.mrf.mxu0
        %4550 = vmatprep.mubr.bf16.mxu0 0
        %4551 = vmatmul.mubr.bf16.gmra.mxu0 %v2793
        %v4552 = vpop.f32.mrf.mxu0
        %v4553 = vadd.f32 %v4344, %v4552
        %v4554 = vpop.f32.mrf.mxu0
        %v4555 = vpop.f32.mrf.mxu0
        %v4556 = vadd.f32 %v4347, %v4555
        %v4557 = vpop.f32.mrf.mxu0
        %4558 = vmatprep.mubr.bf16.mxu0 0
        %4559 = vmatmul.mubr.bf16.gmra.mxu0 %v2794
        %v4560 = vpop.f32.mrf.mxu0
        %v4561 = vadd.f32 %v4352, %v4560
        %v4562 = vpop.f32.mrf.mxu0
        %v4563 = vpop.f32.mrf.mxu0
        %v4564 = vadd.f32 %v4355, %v4563
        %v4565 = vpop.f32.mrf.mxu0
        %4566 = vmatprep.mubr.bf16.mxu0 0
        %4567 = vmatmul.mubr.bf16.gmra.mxu0 %v2795
        %v4568 = vpop.f32.mrf.mxu0
        %v4569 = vadd.f32 %v4360, %v4568
        %v4570 = vpop.f32.mrf.mxu0
        %v4571 = vpop.f32.mrf.mxu0
        %v4572 = vadd.f32 %v4363, %v4571
        %v4573 = vpop.f32.mrf.mxu0
        %4574 = vmatprep.mubr.bf16.mxu0 0
        %4575 = vmatmul.mubr.bf16.gmra.mxu0 %v2796
        %v4576 = vpop.f32.mrf.mxu0
        %v4577 = vadd.f32 %v4368, %v4576
        %v4578 = vpop.f32.mrf.mxu0
        %v4579 = vpop.f32.mrf.mxu0
        %v4580 = vadd.f32 %v4371, %v4579
        %v4581 = vpop.f32.mrf.mxu0
        %4582 = vmatprep.mubr.bf16.mxu0 0
        %4583 = vmatmul.mubr.bf16.gmra.mxu0 %v2797
        %v4584 = vpop.f32.mrf.mxu0
        %v4585 = vadd.f32 %v4376, %v4584
        %v4586 = vpop.f32.mrf.mxu0
        %v4587 = vpop.f32.mrf.mxu0
        %v4588 = vadd.f32 %v4379, %v4587
        %v4589 = vpop.f32.mrf.mxu0
        %4590 = vmatprep.mubr.bf16.mxu0 0
        %4591 = vmatmul.mubr.bf16.gmra.mxu0 %v2798
        %v4592 = vpop.f32.mrf.mxu0
        %v4593 = vadd.f32 %v4384, %v4592
        %v4594 = vpop.f32.mrf.mxu0
        %v4595 = vpop.f32.mrf.mxu0
        %v4596 = vadd.f32 %v4387, %v4595
        %v4597 = vpop.f32.mrf.mxu0
        %4598 = vdwg.mxu0
        %v4599 = vmax.f32 %v4473, 0.0
        %v4600 = vmax.f32 %v4476, 0.0
        %v4601 = vmax.f32 %v4481, 0.0
        %v4602 = vmax.f32 %v4484, 0.0
        %v4603 = vmax.f32 %v4489, 0.0
        %v4604 = vmax.f32 %v4492, 0.0
        %v4605 = vmax.f32 %v4497, 0.0
        %v4606 = vmax.f32 %v4500, 0.0
        %v4607 = vmax.f32 %v4505, 0.0
        %v4608 = vmax.f32 %v4508, 0.0
        %v4609 = vmax.f32 %v4513, 0.0
        %v4610 = vmax.f32 %v4516, 0.0
        %v4611 = vmax.f32 %v4521, 0.0
        %v4612 = vmax.f32 %v4524, 0.0
        %v4613 = vmax.f32 %v4529, 0.0
        %v4614 = vmax.f32 %v4532, 0.0
        %v4615 = vmax.f32 %v4537, 0.0
        %v4616 = vmax.f32 %v4540, 0.0
        %v4617 = vmax.f32 %v4545, 0.0
        %v4618 = vmax.f32 %v4548, 0.0
        %v4619 = vmax.f32 %v4553, 0.0
        %v4620 = vmax.f32 %v4556, 0.0
        %v4621 = vmax.f32 %v4561, 0.0
        %v4622 = vmax.f32 %v4564, 0.0
        %v4623 = vmax.f32 %v4569, 0.0
        %v4624 = vmax.f32 %v4572, 0.0
        %v4625 = vmax.f32 %v4577, 0.0
        %v4626 = vmax.f32 %v4580, 0.0
        %v4627 = vmax.f32 %v4585, 0.0
        %v4628 = vmax.f32 %v4588, 0.0
        %v4629 = vmax.f32 %v4593, 0.0
        %v4630 = vmax.f32 %v4596, 0.0
        %v4631 = vpack.c.bf16 %v4600, %v4599
        %v4632 = vpack.c.bf16 %v4602, %v4601
        %v4633 = vpack.c.bf16 %v4604, %v4603
        %v4634 = vpack.c.bf16 %v4606, %v4605
        %v4635 = vpack.c.bf16 %v4608, %v4607
        %v4636 = vpack.c.bf16 %v4610, %v4609
        %v4637 = vpack.c.bf16 %v4612, %v4611
        %v4638 = vpack.c.bf16 %v4614, %v4613
        %v4639 = vpack.c.bf16 %v4616, %v4615
        %v4640 = vpack.c.bf16 %v4618, %v4617
        %v4641 = vpack.c.bf16 %v4620, %v4619
        %v4642 = vpack.c.bf16 %v4622, %v4621
        %v4643 = vpack.c.bf16 %v4624, %v4623
        %v4644 = vpack.c.bf16 %v4626, %v4625
        %v4645 = vpack.c.bf16 %v4628, %v4627
        %v4646 = vpack.c.bf16 %v4630, %v4629
        %v4647 = vld [vmem:[%s5 + $0x80] sm:$0xf]
        %v4648 = vld [vmem:[%s5 + $0x84] sm:$0xf]
        %v4649 = vld [vmem:[%s5 + $0x88] sm:$0xf]
        %v4650 = vld [vmem:[%s5 + $0x8c] sm:$0xf]
        %v4651 = vld [vmem:[%s5 + $0x90] sm:$0xf]
        %v4652 = vld [vmem:[%s5 + $0x94] sm:$0xf]
        %v4653 = vld [vmem:[%s5 + $0x98] sm:$0xf]
        %v4654 = vld [vmem:[%s5 + $0x9c] sm:$0xf]
        %v4655 = vld [vmem:[%s5 + $0xa0] sm:$0xf]
        %v4656 = vld [vmem:[%s5 + $0xa4] sm:$0xf]
        %v4657 = vld [vmem:[%s5 + $0xa8] sm:$0xf]
        %v4658 = vld [vmem:[%s5 + $0xac] sm:$0xf]
        %v4659 = vld [vmem:[%s5 + $0xb0] sm:$0xf]
        %v4660 = vld [vmem:[%s5 + $0xb4] sm:$0xf]
        %v4661 = vld [vmem:[%s5 + $0xb8] sm:$0xf]
        %v4662 = vld [vmem:[%s5 + $0xbc] sm:$0xf]
        %v4679 = vunpack.c.l.b16 %v4647
        %v4680 = vunpack.c.l.b16 %v4648
        %v4681 = vunpack.c.l.b16 %v4649
        %v4682 = vunpack.c.l.b16 %v4650
        %v4683 = vunpack.c.l.b16 %v4651
        %v4684 = vunpack.c.l.b16 %v4652
        %v4685 = vunpack.c.l.b16 %v4653
        %v4686 = vunpack.c.l.b16 %v4654
        %v4687 = vunpack.c.l.b16 %v4655
        %v4688 = vunpack.c.l.b16 %v4656
        %v4689 = vunpack.c.l.b16 %v4657
        %v4690 = vunpack.c.l.b16 %v4658
        %v4691 = vunpack.c.l.b16 %v4659
        %v4692 = vunpack.c.l.b16 %v4660
        %v4693 = vunpack.c.l.b16 %v4661
        %v4694 = vunpack.c.l.b16 %v4662
        %v4695 = vpack.c.b16 %v4680, %v4679
        %v4696 = vpack.c.b16 %v4682, %v4681
        %v4697 = vpack.c.b16 %v4684, %v4683
        %v4698 = vpack.c.b16 %v4686, %v4685
        %v4699 = vpack.c.b16 %v4688, %v4687
        %v4700 = vpack.c.b16 %v4690, %v4689
        %v4701 = vpack.c.b16 %v4692, %v4691
        %v4702 = vpack.c.b16 %v4694, %v4693
        %4711 = vmatprep.subr.bf16.mxu0 0
        %4712 = vmatpush1.bf16.msra.mxu0 %v4702
        %4713 = vmatprep.subr.bf16.mxu0 0
        %4714 = vmatpush1.bf16.msra.mxu0 %v4701
        %4715 = vmatprep.subr.bf16.mxu0 0
        %4716 = vmatpush1.bf16.msra.mxu0 %v4700
        %4717 = vmatprep.subr.bf16.mxu0 0
        %4718 = vmatpush1.bf16.msra.mxu0 %v4699
        %4719 = vmatprep.subr.bf16.mxu0 0
        %4720 = vmatpush1.bf16.msra.mxu0 %v4698
        %4721 = vmatprep.subr.bf16.mxu0 0
        %4722 = vmatpush1.bf16.msra.mxu0 %v4697
        %4723 = vmatprep.subr.bf16.mxu0 0
        %4724 = vmatpush1.bf16.msra.mxu0 %v4696
        %4725 = vmatprep.subr.bf16.mxu0 0
        %4726 = vmatpush1.bf16.msra.mxu0 %v4695
        %4727 = vmatprep.subr.bf16.mxu0 0
        %4728 = vmatpush2.bf16.msra.mxu0 0
        %4729 = vmatprep.subr.bf16.mxu0 0
        %4730 = vmatpush2.bf16.msra.mxu0 0
        %4731 = vmatprep.subr.bf16.mxu0 0
        %4732 = vmatpush2.bf16.msra.mxu0 0
        %4733 = vmatprep.subr.bf16.mxu0 0
        %4734 = vmatpush2.bf16.msra.mxu0 0
        %4735 = vmatprep.subr.bf16.mxu0 0
        %4736 = vmatpush2.bf16.msra.mxu0 0
        %4737 = vmatprep.subr.bf16.mxu0 0
        %4738 = vmatpush2.bf16.msra.mxu0 0
        %4739 = vmatprep.subr.bf16.mxu0 0
        %4740 = vmatpush2.bf16.msra.mxu0 0
        %4741 = vmatprep.subr.bf16.mxu0 0
        %4742 = vmatpush2.bf16.msra.mxu0 0
        %4743 = vmatprep.mubr.bf16.mxu0 0
        %4744 = vmatmul.mubr.bf16.gmra.mxu0 %v4631
        %v4745 = vpop.f32.mrf.mxu0
        %v4746 = vadd.f32 0.0, %v4745
        %v4747 = vpop.f32.mrf.mxu0
        %v4748 = vpop.f32.mrf.mxu0
        %v4749 = vadd.f32 0.0, %v4748
        %v4750 = vpop.f32.mrf.mxu0
        %4751 = vmatprep.mubr.bf16.mxu0 0
        %4752 = vmatmul.mubr.bf16.gmra.mxu0 %v4632
        %v4753 = vpop.f32.mrf.mxu0
        %v4754 = vadd.f32 0.0, %v4753
        %v4755 = vpop.f32.mrf.mxu0
        %v4756 = vpop.f32.mrf.mxu0
        %v4757 = vadd.f32 0.0, %v4756
        %v4758 = vpop.f32.mrf.mxu0
        %4759 = vmatprep.mubr.bf16.mxu0 0
        %4760 = vmatmul.mubr.bf16.gmra.mxu0 %v4633
        %v4761 = vpop.f32.mrf.mxu0
        %v4762 = vadd.f32 0.0, %v4761
        %v4763 = vpop.f32.mrf.mxu0
        %v4764 = vpop.f32.mrf.mxu0
        %v4765 = vadd.f32 0.0, %v4764
        %v4766 = vpop.f32.mrf.mxu0
        %4767 = vmatprep.mubr.bf16.mxu0 0
        %4768 = vmatmul.mubr.bf16.gmra.mxu0 %v4634
        %v4769 = vpop.f32.mrf.mxu0
        %v4770 = vadd.f32 0.0, %v4769
        %v4771 = vpop.f32.mrf.mxu0
        %v4772 = vpop.f32.mrf.mxu0
        %v4773 = vadd.f32 0.0, %v4772
        %v4774 = vpop.f32.mrf.mxu0
        %4775 = vmatprep.mubr.bf16.mxu0 0
        %4776 = vmatmul.mubr.bf16.gmra.mxu0 %v4635
        %v4777 = vpop.f32.mrf.mxu0
        %v4778 = vadd.f32 0.0, %v4777
        %v4779 = vpop.f32.mrf.mxu0
        %v4780 = vpop.f32.mrf.mxu0
        %v4781 = vadd.f32 0.0, %v4780
        %v4782 = vpop.f32.mrf.mxu0
        %4783 = vmatprep.mubr.bf16.mxu0 0
        %4784 = vmatmul.mubr.bf16.gmra.mxu0 %v4636
        %v4785 = vpop.f32.mrf.mxu0
        %v4786 = vadd.f32 0.0, %v4785
        %v4787 = vpop.f32.mrf.mxu0
        %v4788 = vpop.f32.mrf.mxu0
        %v4789 = vadd.f32 0.0, %v4788
        %v4790 = vpop.f32.mrf.mxu0
        %4791 = vmatprep.mubr.bf16.mxu0 0
        %4792 = vmatmul.mubr.bf16.gmra.mxu0 %v4637
        %v4793 = vpop.f32.mrf.mxu0
        %v4794 = vadd.f32 0.0, %v4793
        %v4795 = vpop.f32.mrf.mxu0
        %v4796 = vpop.f32.mrf.mxu0
        %v4797 = vadd.f32 0.0, %v4796
        %v4798 = vpop.f32.mrf.mxu0
        %4799 = vmatprep.mubr.bf16.mxu0 0
        %4800 = vmatmul.mubr.bf16.gmra.mxu0 %v4638
        %v4801 = vpop.f32.mrf.mxu0
        %v4802 = vadd.f32 0.0, %v4801
        %v4803 = vpop.f32.mrf.mxu0
        %v4804 = vpop.f32.mrf.mxu0
        %v4805 = vadd.f32 0.0, %v4804
        %v4806 = vpop.f32.mrf.mxu0
        %4807 = vmatprep.mubr.bf16.mxu0 0
        %4808 = vmatmul.mubr.bf16.gmra.mxu0 %v4639
        %v4809 = vpop.f32.mrf.mxu0
        %v4810 = vadd.f32 0.0, %v4809
        %v4811 = vpop.f32.mrf.mxu0
        %v4812 = vpop.f32.mrf.mxu0
        %v4813 = vadd.f32 0.0, %v4812
        %v4814 = vpop.f32.mrf.mxu0
        %4815 = vmatprep.mubr.bf16.mxu0 0
        %4816 = vmatmul.mubr.bf16.gmra.mxu0 %v4640
        %v4817 = vpop.f32.mrf.mxu0
        %v4818 = vadd.f32 0.0, %v4817
        %v4819 = vpop.f32.mrf.mxu0
        %v4820 = vpop.f32.mrf.mxu0
        %v4821 = vadd.f32 0.0, %v4820
        %v4822 = vpop.f32.mrf.mxu0
        %4823 = vmatprep.mubr.bf16.mxu0 0
        %4824 = vmatmul.mubr.bf16.gmra.mxu0 %v4641
        %v4825 = vpop.f32.mrf.mxu0
        %v4826 = vadd.f32 0.0, %v4825
        %v4827 = vpop.f32.mrf.mxu0
        %v4828 = vpop.f32.mrf.mxu0
        %v4829 = vadd.f32 0.0, %v4828
        %v4830 = vpop.f32.mrf.mxu0
        %4831 = vmatprep.mubr.bf16.mxu0 0
        %4832 = vmatmul.mubr.bf16.gmra.mxu0 %v4642
        %v4833 = vpop.f32.mrf.mxu0
        %v4834 = vadd.f32 0.0, %v4833
        %v4835 = vpop.f32.mrf.mxu0
        %v4836 = vpop.f32.mrf.mxu0
        %v4837 = vadd.f32 0.0, %v4836
        %v4838 = vpop.f32.mrf.mxu0
        %4839 = vmatprep.mubr.bf16.mxu0 0
        %4840 = vmatmul.mubr.bf16.gmra.mxu0 %v4643
        %v4841 = vpop.f32.mrf.mxu0
        %v4842 = vadd.f32 0.0, %v4841
        %v4843 = vpop.f32.mrf.mxu0
        %v4844 = vpop.f32.mrf.mxu0
        %v4845 = vadd.f32 0.0, %v4844
        %v4846 = vpop.f32.mrf.mxu0
        %4847 = vmatprep.mubr.bf16.mxu0 0
        %4848 = vmatmul.mubr.bf16.gmra.mxu0 %v4644
        %v4849 = vpop.f32.mrf.mxu0
        %v4850 = vadd.f32 0.0, %v4849
        %v4851 = vpop.f32.mrf.mxu0
        %v4852 = vpop.f32.mrf.mxu0
        %v4853 = vadd.f32 0.0, %v4852
        %v4854 = vpop.f32.mrf.mxu0
        %4855 = vmatprep.mubr.bf16.mxu0 0
        %4856 = vmatmul.mubr.bf16.gmra.mxu0 %v4645
        %v4857 = vpop.f32.mrf.mxu0
        %v4858 = vadd.f32 0.0, %v4857
        %v4859 = vpop.f32.mrf.mxu0
        %v4860 = vpop.f32.mrf.mxu0
        %v4861 = vadd.f32 0.0, %v4860
        %v4862 = vpop.f32.mrf.mxu0
        %4863 = vmatprep.mubr.bf16.mxu0 0
        %4864 = vmatmul.mubr.bf16.gmra.mxu0 %v4646
        %v4865 = vpop.f32.mrf.mxu0
        %v4866 = vadd.f32 0.0, %v4865
        %v4867 = vpop.f32.mrf.mxu0
        %v4868 = vpop.f32.mrf.mxu0
        %v4869 = vadd.f32 0.0, %v4868
        %v4870 = vpop.f32.mrf.mxu0
        %4871 = vdwg.mxu0
        %v4872 = vadd.f32 %v4055, %v4746
        %v4873 = vadd.f32 %v4058, %v4749
        %v4874 = vadd.f32 %v4063, %v4754
        %v4875 = vadd.f32 %v4066, %v4757
        %v4876 = vadd.f32 %v4071, %v4762
        %v4877 = vadd.f32 %v4074, %v4765
        %v4878 = vadd.f32 %v4079, %v4770
        %v4879 = vadd.f32 %v4082, %v4773
        %v4880 = vadd.f32 %v4087, %v4778
        %v4881 = vadd.f32 %v4090, %v4781
        %v4882 = vadd.f32 %v4095, %v4786
        %v4883 = vadd.f32 %v4098, %v4789
        %v4884 = vadd.f32 %v4103, %v4794
        %v4885 = vadd.f32 %v4106, %v4797
        %v4886 = vadd.f32 %v4111, %v4802
        %v4887 = vadd.f32 %v4114, %v4805
        %v4888 = vadd.f32 %v4119, %v4810
        %v4889 = vadd.f32 %v4122, %v4813
        %v4890 = vadd.f32 %v4127, %v4818
        %v4891 = vadd.f32 %v4130, %v4821
        %v4892 = vadd.f32 %v4135, %v4826
        %v4893 = vadd.f32 %v4138, %v4829
        %v4894 = vadd.f32 %v4143, %v4834
        %v4895 = vadd.f32 %v4146, %v4837
        %v4896 = vadd.f32 %v4151, %v4842
        %v4897 = vadd.f32 %v4154, %v4845
        %v4898 = vadd.f32 %v4159, %v4850
        %v4899 = vadd.f32 %v4162, %v4853
        %v4900 = vadd.f32 %v4167, %v4858
        %v4901 = vadd.f32 %v4170, %v4861
        %v4902 = vadd.f32 %v4175, %v4866
        %v4903 = vadd.f32 %v4178, %v4869
        %v4904 = vld [vmem:[%s269] sm:$0xff]
        %v4905 = vld [vmem:[%s269 + $0x8] sm:$0xff]
        %v4906 = vld [vmem:[%s269 + $0x10] sm:$0xff]
        %v4907 = vld [vmem:[%s269 + $0x18] sm:$0xff]
        %v4908 = vld [vmem:[%s269 + $0x20] sm:$0xff]
        %v4909 = vld [vmem:[%s269 + $0x28] sm:$0xff]
        %v4910 = vld [vmem:[%s269 + $0x30] sm:$0xff]
        %v4911 = vld [vmem:[%s269 + $0x38] sm:$0xff]
        %v4912 = vld [vmem:[%s269 + $0x40] sm:$0xff]
        %v4913 = vld [vmem:[%s269 + $0x48] sm:$0xff]
        %v4914 = vld [vmem:[%s269 + $0x50] sm:$0xff]
        %v4915 = vld [vmem:[%s269 + $0x58] sm:$0xff]
        %v4916 = vld [vmem:[%s269 + $0x60] sm:$0xff]
        %v4917 = vld [vmem:[%s269 + $0x68] sm:$0xff]
        %v4918 = vld [vmem:[%s269 + $0x70] sm:$0xff]
        %v4919 = vld [vmem:[%s269 + $0x78] sm:$0xff]
        %v4920 = vld [vmem:[%s269 + $0x80] sm:$0xff]
        %v4921 = vld [vmem:[%s269 + $0x88] sm:$0xff]
        %v4922 = vld [vmem:[%s269 + $0x90] sm:$0xff]
        %v4923 = vld [vmem:[%s269 + $0x98] sm:$0xff]
        %v4924 = vld [vmem:[%s269 + $0xa0] sm:$0xff]
        %v4925 = vld [vmem:[%s269 + $0xa8] sm:$0xff]
        %v4926 = vld [vmem:[%s269 + $0xb0] sm:$0xff]
        %v4927 = vld [vmem:[%s269 + $0xb8] sm:$0xff]
        %v4928 = vld [vmem:[%s269 + $0xc0] sm:$0xff]
        %v4929 = vld [vmem:[%s269 + $0xc8] sm:$0xff]
        %v4930 = vld [vmem:[%s269 + $0xd0] sm:$0xff]
        %v4931 = vld [vmem:[%s269 + $0xd8] sm:$0xff]
        %v4932 = vld [vmem:[%s269 + $0xe0] sm:$0xff]
        %v4933 = vld [vmem:[%s269 + $0xe8] sm:$0xff]
        %v4934 = vld [vmem:[%s269 + $0xf0] sm:$0xff]
        %v4935 = vld [vmem:[%s269 + $0xf8] sm:$0xff]
        %4937 = vset.pattern.permute.xlu0 0
        %4938 = vperm.xlu0 %4937, %v4904
        %v4939 = vpop.permute.xlu0 %4938
        %4942 = vset.pattern.permute.xlu0 0
        %4943 = vperm.xlu0 %4942, %v4905
        %v4944 = vpop.permute.xlu0 %4943
        %4947 = vset.pattern.permute.xlu0 0
        %4948 = vperm.xlu0 %4947, %v4906
        %v4949 = vpop.permute.xlu0 %4948
        %4952 = vset.pattern.permute.xlu0 0
        %4953 = vperm.xlu0 %4952, %v4907
        %v4954 = vpop.permute.xlu0 %4953
        %4957 = vset.pattern.permute.xlu0 0
        %4958 = vperm.xlu0 %4957, %v4908
        %v4959 = vpop.permute.xlu0 %4958
        %4962 = vset.pattern.permute.xlu0 0
        %4963 = vperm.xlu0 %4962, %v4909
        %v4964 = vpop.permute.xlu0 %4963
        %4967 = vset.pattern.permute.xlu0 0
        %4968 = vperm.xlu0 %4967, %v4910
        %v4969 = vpop.permute.xlu0 %4968
        %4972 = vset.pattern.permute.xlu0 0
        %4973 = vperm.xlu0 %4972, %v4911
        %v4974 = vpop.permute.xlu0 %4973
        %4977 = vset.pattern.permute.xlu0 0
        %4978 = vperm.xlu0 %4977, %v4912
        %v4979 = vpop.permute.xlu0 %4978
        %4982 = vset.pattern.permute.xlu0 0
        %4983 = vperm.xlu0 %4982, %v4913
        %v4984 = vpop.permute.xlu0 %4983
        %4987 = vset.pattern.permute.xlu0 0
        %4988 = vperm.xlu0 %4987, %v4914
        %v4989 = vpop.permute.xlu0 %4988
        %4992 = vset.pattern.permute.xlu0 0
        %4993 = vperm.xlu0 %4992, %v4915
        %v4994 = vpop.permute.xlu0 %4993
        %4997 = vset.pattern.permute.xlu0 0
        %4998 = vperm.xlu0 %4997, %v4916
        %v4999 = vpop.permute.xlu0 %4998
        %5002 = vset.pattern.permute.xlu0 0
        %5003 = vperm.xlu0 %5002, %v4917
        %v5004 = vpop.permute.xlu0 %5003
        %5007 = vset.pattern.permute.xlu0 0
        %5008 = vperm.xlu0 %5007, %v4918
        %v5009 = vpop.permute.xlu0 %5008
        %5012 = vset.pattern.permute.xlu0 0
        %5013 = vperm.xlu0 %5012, %v4919
        %v5014 = vpop.permute.xlu0 %5013
        %5017 = vset.pattern.permute.xlu0 0
        %5018 = vperm.xlu0 %5017, %v4920
        %v5019 = vpop.permute.xlu0 %5018
        %5022 = vset.pattern.permute.xlu0 0
        %5023 = vperm.xlu0 %5022, %v4921
        %v5024 = vpop.permute.xlu0 %5023
        %5027 = vset.pattern.permute.xlu0 0
        %5028 = vperm.xlu0 %5027, %v4922
        %v5029 = vpop.permute.xlu0 %5028
        %5032 = vset.pattern.permute.xlu0 0
        %5033 = vperm.xlu0 %5032, %v4923
        %v5034 = vpop.permute.xlu0 %5033
        %5037 = vset.pattern.permute.xlu0 0
        %5038 = vperm.xlu0 %5037, %v4924
        %v5039 = vpop.permute.xlu0 %5038
        %5042 = vset.pattern.permute.xlu0 0
        %5043 = vperm.xlu0 %5042, %v4925
        %v5044 = vpop.permute.xlu0 %5043
        %5047 = vset.pattern.permute.xlu0 0
        %5048 = vperm.xlu0 %5047, %v4926
        %v5049 = vpop.permute.xlu0 %5048
        %5052 = vset.pattern.permute.xlu0 0
        %5053 = vperm.xlu0 %5052, %v4927
        %v5054 = vpop.permute.xlu0 %5053
        %5057 = vset.pattern.permute.xlu0 0
        %5058 = vperm.xlu0 %5057, %v4928
        %v5059 = vpop.permute.xlu0 %5058
        %5062 = vset.pattern.permute.xlu0 0
        %5063 = vperm.xlu0 %5062, %v4929
        %v5064 = vpop.permute.xlu0 %5063
        %5067 = vset.pattern.permute.xlu0 0
        %5068 = vperm.xlu0 %5067, %v4930
        %v5069 = vpop.permute.xlu0 %5068
        %5072 = vset.pattern.permute.xlu0 0
        %5073 = vperm.xlu0 %5072, %v4931
        %v5074 = vpop.permute.xlu0 %5073
        %5077 = vset.pattern.permute.xlu0 0
        %5078 = vperm.xlu0 %5077, %v4932
        %v5079 = vpop.permute.xlu0 %5078
        %5082 = vset.pattern.permute.xlu0 0
        %5083 = vperm.xlu0 %5082, %v4933
        %v5084 = vpop.permute.xlu0 %5083
        %5087 = vset.pattern.permute.xlu0 0
        %5088 = vperm.xlu0 %5087, %v4934
        %v5089 = vpop.permute.xlu0 %5088
        %5092 = vset.pattern.permute.xlu0 0
        %5093 = vperm.xlu0 %5092, %v4935
        %v5094 = vpop.permute.xlu0 %5093
        %v5096 = vmul.f32 %v4872, %v4939
        %v5097 = vmul.f32 %v4873, %v4944
        %v5098 = vmul.f32 %v4874, %v4949
        %v5099 = vmul.f32 %v4875, %v4954
        %v5100 = vmul.f32 %v4876, %v4959
        %v5101 = vmul.f32 %v4877, %v4964
        %v5102 = vmul.f32 %v4878, %v4969
        %v5103 = vmul.f32 %v4879, %v4974
        %v5104 = vmul.f32 %v4880, %v4979
        %v5105 = vmul.f32 %v4881, %v4984
        %v5106 = vmul.f32 %v4882, %v4989
        %v5107 = vmul.f32 %v4883, %v4994
        %v5108 = vmul.f32 %v4884, %v4999
        %v5109 = vmul.f32 %v4885, %v5004
        %v5110 = vmul.f32 %v4886, %v5009
        %v5111 = vmul.f32 %v4887, %v5014
        %v5112 = vmul.f32 %v4888, %v5019
        %v5113 = vmul.f32 %v4889, %v5024
        %v5114 = vmul.f32 %v4890, %v5029
        %v5115 = vmul.f32 %v4891, %v5034
        %v5116 = vmul.f32 %v4892, %v5039
        %v5117 = vmul.f32 %v4893, %v5044
        %v5118 = vmul.f32 %v4894, %v5049
        %v5119 = vmul.f32 %v4895, %v5054
        %v5120 = vmul.f32 %v4896, %v5059
        %v5121 = vmul.f32 %v4897, %v5064
        %v5122 = vmul.f32 %v4898, %v5069
        %v5123 = vmul.f32 %v4899, %v5074
        %v5124 = vmul.f32 %v4900, %v5079
        %v5125 = vmul.f32 %v4901, %v5084
        %v5126 = vmul.f32 %v4902, %v5089
        %v5127 = vmul.f32 %v4903, %v5094
        %vm5160 = vcmask 1040384
        %v5161 = vrot.slane %v5096, 7
        %v5162 = vrot.slane %v5097, 7
        %v5163 = vsel %vm5160, %v5161, %v5162
        %v5164 = vrot.slane %v5098, 7
        %v5165 = vrot.slane %v5099, 7
        %v5166 = vsel %vm5160, %v5164, %v5165
        %v5167 = vrot.slane %v5100, 7
        %v5168 = vrot.slane %v5101, 7
        %v5169 = vsel %vm5160, %v5167, %v5168
        %v5170 = vrot.slane %v5102, 7
        %v5171 = vrot.slane %v5103, 7
        %v5172 = vsel %vm5160, %v5170, %v5171
        %v5173 = vrot.slane %v5104, 7
        %v5174 = vrot.slane %v5105, 7
        %v5175 = vsel %vm5160, %v5173, %v5174
        %v5176 = vrot.slane %v5106, 7
        %v5177 = vrot.slane %v5107, 7
        %v5178 = vsel %vm5160, %v5176, %v5177
        %v5179 = vrot.slane %v5108, 7
        %v5180 = vrot.slane %v5109, 7
        %v5181 = vsel %vm5160, %v5179, %v5180
        %v5182 = vrot.slane %v5110, 7
        %v5183 = vrot.slane %v5111, 7
        %v5184 = vsel %vm5160, %v5182, %v5183
        %v5185 = vrot.slane %v5112, 7
        %v5186 = vrot.slane %v5113, 7
        %v5187 = vsel %vm5160, %v5185, %v5186
        %v5188 = vrot.slane %v5114, 7
        %v5189 = vrot.slane %v5115, 7
        %v5190 = vsel %vm5160, %v5188, %v5189
        %v5191 = vrot.slane %v5116, 7
        %v5192 = vrot.slane %v5117, 7
        %v5193 = vsel %vm5160, %v5191, %v5192
        %v5194 = vrot.slane %v5118, 7
        %v5195 = vrot.slane %v5119, 7
        %v5196 = vsel %vm5160, %v5194, %v5195
        %v5197 = vrot.slane %v5120, 7
        %v5198 = vrot.slane %v5121, 7
        %v5199 = vsel %vm5160, %v5197, %v5198
        %v5200 = vrot.slane %v5122, 7
        %v5201 = vrot.slane %v5123, 7
        %v5202 = vsel %vm5160, %v5200, %v5201
        %v5203 = vrot.slane %v5124, 7
        %v5204 = vrot.slane %v5125, 7
        %v5205 = vsel %vm5160, %v5203, %v5204
        %v5206 = vrot.slane %v5126, 7
        %v5207 = vrot.slane %v5127, 7
        %v5208 = vsel %vm5160, %v5206, %v5207
        %v5257 = vadd.f32 %v274, %v5161
        %v5258 = vadd.f32 %v275, %v5163
        %v5259 = vadd.f32 %v276, %v5162
        %v5260 = vadd.f32 %v277, %v5164
        %v5261 = vadd.f32 %v278, %v5166
        %v5262 = vadd.f32 %v279, %v5165
        %v5263 = vadd.f32 %v280, %v5167
        %v5264 = vadd.f32 %v281, %v5169
        %v5265 = vadd.f32 %v282, %v5168
        %v5266 = vadd.f32 %v283, %v5170
        %v5267 = vadd.f32 %v284, %v5172
        %v5268 = vadd.f32 %v285, %v5171
        %v5269 = vadd.f32 %v286, %v5173
        %v5270 = vadd.f32 %v287, %v5175
        %v5271 = vadd.f32 %v288, %v5174
        %v5272 = vadd.f32 %v289, %v5176
        %v5273 = vadd.f32 %v290, %v5178
        %v5274 = vadd.f32 %v291, %v5177
        %v5275 = vadd.f32 %v292, %v5179
        %v5276 = vadd.f32 %v293, %v5181
        %v5277 = vadd.f32 %v294, %v5180
        %v5278 = vadd.f32 %v295, %v5182
        %v5279 = vadd.f32 %v296, %v5184
        %v5280 = vadd.f32 %v297, %v5183
        %v5281 = vadd.f32 %v298, %v5185
        %v5282 = vadd.f32 %v299, %v5187
        %v5283 = vadd.f32 %v300, %v5186
        %v5284 = vadd.f32 %v301, %v5188
        %v5285 = vadd.f32 %v302, %v5190
        %v5286 = vadd.f32 %v303, %v5189
        %v5287 = vadd.f32 %v304, %v5191
        %v5288 = vadd.f32 %v305, %v5193
        %v5289 = vadd.f32 %v306, %v5192
        %v5290 = vadd.f32 %v307, %v5194
        %v5291 = vadd.f32 %v308, %v5196
        %v5292 = vadd.f32 %v309, %v5195
        %v5293 = vadd.f32 %v310, %v5197
        %v5294 = vadd.f32 %v311, %v5199
        %v5295 = vadd.f32 %v312, %v5198
        %v5296 = vadd.f32 %v313, %v5200
        %v5297 = vadd.f32 %v314, %v5202
        %v5298 = vadd.f32 %v315, %v5201
        %v5299 = vadd.f32 %v316, %v5203
        %v5300 = vadd.f32 %v317, %v5205
        %v5301 = vadd.f32 %v318, %v5204
        %v5302 = vadd.f32 %v319, %v5206
        %v5303 = vadd.f32 %v320, %v5208
        %v5304 = vadd.f32 %v321, %v5207
        %vm5305 = vcmask 7168
        %5306 = vst.msk [vmem:[#allocation2] sm:$0xff] %vm5305, -inf
        %5307 = vst.msk [vmem:[#allocation2 + $0x8] sm:$0xff] %vm5305, -inf
        %vm5308 = vcmask 1024
        %5309 = vst.msk [vmem:[#allocation2 + $0x10] sm:$0x3] %vm5308, -inf
        %5310 = vst.msk [vmem:[#allocation2 + $0x18] sm:$0xff] %vm5305, -inf
        %5311 = vst.msk [vmem:[#allocation2 + $0x20] sm:$0xff] %vm5305, -inf
        %5312 = vst.msk [vmem:[#allocation2 + $0x28] sm:$0x3] %vm5308, -inf
        %5313 = vst.msk [vmem:[#allocation2 + $0x30] sm:$0xff] %vm5305, -inf
        %5314 = vst.msk [vmem:[#allocation2 + $0x38] sm:$0xff] %vm5305, -inf
        %5315 = vst.msk [vmem:[#allocation2 + $0x40] sm:$0x3] %vm5308, -inf
        %5316 = vst.msk [vmem:[#allocation2 + $0x48] sm:$0xff] %vm5305, -inf
        %5317 = vst.msk [vmem:[#allocation2 + $0x50] sm:$0xff] %vm5305, -inf
        %5318 = vst.msk [vmem:[#allocation2 + $0x58] sm:$0x3] %vm5308, -inf
        %5319 = vst.msk [vmem:[#allocation2 + $0x60] sm:$0xff] %vm5305, -inf
        %5320 = vst.msk [vmem:[#allocation2 + $0x68] sm:$0xff] %vm5305, -inf
        %5321 = vst.msk [vmem:[#allocation2 + $0x70] sm:$0x3] %vm5308, -inf
        %5322 = vst.msk [vmem:[#allocation2 + $0x78] sm:$0xff] %vm5305, -inf
        %5323 = vst.msk [vmem:[#allocation2 + $0x80] sm:$0xff] %vm5305, -inf
        %5324 = vst.msk [vmem:[#allocation2 + $0x88] sm:$0x3] %vm5308, -inf
        %5325 = vst.msk [vmem:[#allocation2 + $0x90] sm:$0xff] %vm5305, -inf
        %5326 = vst.msk [vmem:[#allocation2 + $0x98] sm:$0xff] %vm5305, -inf
        %5327 = vst.msk [vmem:[#allocation2 + $0xa0] sm:$0x3] %vm5308, -inf
        %5328 = vst.msk [vmem:[#allocation2 + $0xa8] sm:$0xff] %vm5305, -inf
        %5329 = vst.msk [vmem:[#allocation2 + $0xb0] sm:$0xff] %vm5305, -inf
        %5330 = vst.msk [vmem:[#allocation2 + $0xb8] sm:$0x3] %vm5308, -inf
        %5331 = vst.msk [vmem:[#allocation2 + $0xc0] sm:$0xff] %vm5305, -inf
        %5332 = vst.msk [vmem:[#allocation2 + $0xc8] sm:$0xff] %vm5305, -inf
        %5333 = vst.msk [vmem:[#allocation2 + $0xd0] sm:$0x3] %vm5308, -inf
        %5334 = vst.msk [vmem:[#allocation2 + $0xd8] sm:$0xff] %vm5305, -inf
        %5335 = vst.msk [vmem:[#allocation2 + $0xe0] sm:$0xff] %vm5305, -inf
        %5336 = vst.msk [vmem:[#allocation2 + $0xe8] sm:$0x3] %vm5308, -inf
        %5337 = vst.msk [vmem:[#allocation2 + $0xf0] sm:$0xff] %vm5305, -inf
        %5338 = vst.msk [vmem:[#allocation2 + $0xf8] sm:$0xff] %vm5305, -inf
        %5339 = vst.msk [vmem:[#allocation2 + $0x100] sm:$0x3] %vm5308, -inf
        %5340 = vst.msk [vmem:[#allocation2 + $0x108] sm:$0xff] %vm5305, -inf
        %5341 = vst.msk [vmem:[#allocation2 + $0x110] sm:$0xff] %vm5305, -inf
        %5342 = vst.msk [vmem:[#allocation2 + $0x118] sm:$0x3] %vm5308, -inf
        %5343 = vst.msk [vmem:[#allocation2 + $0x120] sm:$0xff] %vm5305, -inf
        %5344 = vst.msk [vmem:[#allocation2 + $0x128] sm:$0xff] %vm5305, -inf
        %5345 = vst.msk [vmem:[#allocation2 + $0x130] sm:$0x3] %vm5308, -inf
        %5346 = vst.msk [vmem:[#allocation2 + $0x138] sm:$0xff] %vm5305, -inf
        %5347 = vst.msk [vmem:[#allocation2 + $0x140] sm:$0xff] %vm5305, -inf
        %5348 = vst.msk [vmem:[#allocation2 + $0x148] sm:$0x3] %vm5308, -inf
        %5349 = vst.msk [vmem:[#allocation2 + $0x150] sm:$0xff] %vm5305, -inf
        %5350 = vst.msk [vmem:[#allocation2 + $0x158] sm:$0xff] %vm5305, -inf
        %5351 = vst.msk [vmem:[#allocation2 + $0x160] sm:$0x3] %vm5308, -inf
        %5352 = vst.msk [vmem:[#allocation2 + $0x168] sm:$0xff] %vm5305, -inf
        %5353 = vst.msk [vmem:[#allocation2 + $0x170] sm:$0xff] %vm5305, -inf
        %5354 = vst.msk [vmem:[#allocation2 + $0x178] sm:$0x3] %vm5308, -inf
        %5355 = vst.msk [vmem:[#allocation2 + $0x180] sm:$0xff] %vm5305, -inf
        %5356 = vst.msk [vmem:[#allocation2 + $0x188] sm:$0xff] %vm5305, -inf
        %5357 = vst.msk [vmem:[#allocation2 + $0x190] sm:$0x3] %vm5308, -inf
        %5358 = vst.msk [vmem:[#allocation2 + $0x198] sm:$0xff] %vm5305, -inf
        %5359 = vst.msk [vmem:[#allocation2 + $0x1a0] sm:$0xff] %vm5305, -inf
        %5360 = vst.msk [vmem:[#allocation2 + $0x1a8] sm:$0x3] %vm5308, -inf
        %s5361 = scalar_lea.vmem [#allocation2], 24
        %vm5362 = vcmask 7169
        %5363 = vst.msk [vmem:[%s5361] sm:$0xfe] %vm5362, %v5257
        %5364 = vst.msk [vmem:[%s5361 + $0x8] sm:$0xff] %vm5305, %v5258
        %vm5365 = vcmask 0
        %5366 = vst.msk [vmem:[%s5361 + $0x10] sm:$0x1] %vm5365, %v5259
        %5367 = vst.msk [vmem:[%s5361 + $0x18] sm:$0xfe] %vm5362, %v5260
        %5368 = vst.msk [vmem:[%s5361 + $0x20] sm:$0xff] %vm5305, %v5261
        %5369 = vst.msk [vmem:[%s5361 + $0x28] sm:$0x1] %vm5365, %v5262
        %5370 = vst.msk [vmem:[%s5361 + $0x30] sm:$0xfe] %vm5362, %v5263
        %5371 = vst.msk [vmem:[%s5361 + $0x38] sm:$0xff] %vm5305, %v5264
        %5372 = vst.msk [vmem:[%s5361 + $0x40] sm:$0x1] %vm5365, %v5265
        %5373 = vst.msk [vmem:[%s5361 + $0x48] sm:$0xfe] %vm5362, %v5266
        %5374 = vst.msk [vmem:[%s5361 + $0x50] sm:$0xff] %vm5305, %v5267
        %5375 = vst.msk [vmem:[%s5361 + $0x58] sm:$0x1] %vm5365, %v5268
        %5376 = vst.msk [vmem:[%s5361 + $0x60] sm:$0xfe] %vm5362, %v5269
        %5377 = vst.msk [vmem:[%s5361 + $0x68] sm:$0xff] %vm5305, %v5270
        %5378 = vst.msk [vmem:[%s5361 + $0x70] sm:$0x1] %vm5365, %v5271
        %5379 = vst.msk [vmem:[%s5361 + $0x78] sm:$0xfe] %vm5362, %v5272
        %5380 = vst.msk [vmem:[%s5361 + $0x80] sm:$0xff] %vm5305, %v5273
        %5381 = vst.msk [vmem:[%s5361 + $0x88] sm:$0x1] %vm5365, %v5274
        %5382 = vst.msk [vmem:[%s5361 + $0x90] sm:$0xfe] %vm5362, %v5275
        %5383 = vst.msk [vmem:[%s5361 + $0x98] sm:$0xff] %vm5305, %v5276
        %5384 = vst.msk [vmem:[%s5361 + $0xa0] sm:$0x1] %vm5365, %v5277
        %5385 = vst.msk [vmem:[%s5361 + $0xa8] sm:$0xfe] %vm5362, %v5278
        %5386 = vst.msk [vmem:[%s5361 + $0xb0] sm:$0xff] %vm5305, %v5279
        %5387 = vst.msk [vmem:[%s5361 + $0xb8] sm:$0x1] %vm5365, %v5280
        %5388 = vst.msk [vmem:[%s5361 + $0xc0] sm:$0xfe] %vm5362, %v5281
        %5389 = vst.msk [vmem:[%s5361 + $0xc8] sm:$0xff] %vm5305, %v5282
        %5390 = vst.msk [vmem:[%s5361 + $0xd0] sm:$0x1] %vm5365, %v5283
        %5391 = vst.msk [vmem:[%s5361 + $0xd8] sm:$0xfe] %vm5362, %v5284
        %5392 = vst.msk [vmem:[%s5361 + $0xe0] sm:$0xff] %vm5305, %v5285
        %5393 = vst.msk [vmem:[%s5361 + $0xe8] sm:$0x1] %vm5365, %v5286
        %5394 = vst.msk [vmem:[%s5361 + $0xf0] sm:$0xfe] %vm5362, %v5287
        %5395 = vst.msk [vmem:[%s5361 + $0xf8] sm:$0xff] %vm5305, %v5288
        %5396 = vst.msk [vmem:[%s5361 + $0x100] sm:$0x1] %vm5365, %v5289
        %5397 = vst.msk [vmem:[%s5361 + $0x108] sm:$0xfe] %vm5362, %v5290
        %5398 = vst.msk [vmem:[%s5361 + $0x110] sm:$0xff] %vm5305, %v5291
        %5399 = vst.msk [vmem:[%s5361 + $0x118] sm:$0x1] %vm5365, %v5292
        %5400 = vst.msk [vmem:[%s5361 + $0x120] sm:$0xfe] %vm5362, %v5293
        %5401 = vst.msk [vmem:[%s5361 + $0x128] sm:$0xff] %vm5305, %v5294
        %5402 = vst.msk [vmem:[%s5361 + $0x130] sm:$0x1] %vm5365, %v5295
        %5403 = vst.msk [vmem:[%s5361 + $0x138] sm:$0xfe] %vm5362, %v5296
        %5404 = vst.msk [vmem:[%s5361 + $0x140] sm:$0xff] %vm5305, %v5297
        %5405 = vst.msk [vmem:[%s5361 + $0x148] sm:$0x1] %vm5365, %v5298
        %5406 = vst.msk [vmem:[%s5361 + $0x150] sm:$0xfe] %vm5362, %v5299
        %5407 = vst.msk [vmem:[%s5361 + $0x158] sm:$0xff] %vm5305, %v5300
        %5408 = vst.msk [vmem:[%s5361 + $0x160] sm:$0x1] %vm5365, %v5301
        %5409 = vst.msk [vmem:[%s5361 + $0x168] sm:$0xfe] %vm5362, %v5302
        %5410 = vst.msk [vmem:[%s5361 + $0x170] sm:$0xff] %vm5305, %v5303
        %5411 = vst.msk [vmem:[%s5361 + $0x178] sm:$0x1] %vm5365, %v5304
        %v5412 = vld [vmem:[#allocation2] sm:$0xff]
        %v5413 = vld [vmem:[#allocation2 + $0x8] sm:$0xff]
        %v5414 = vld [vmem:[#allocation2 + $0x18] sm:$0xff]
        %v5415 = vld [vmem:[#allocation2 + $0x20] sm:$0xff]
        %v5416 = vld [vmem:[#allocation2 + $0x30] sm:$0xff]
        %v5417 = vld [vmem:[#allocation2 + $0x38] sm:$0xff]
        %v5418 = vld [vmem:[#allocation2 + $0x48] sm:$0xff]
        %v5419 = vld [vmem:[#allocation2 + $0x50] sm:$0xff]
        %v5420 = vld [vmem:[#allocation2 + $0x60] sm:$0xff]
        %v5421 = vld [vmem:[#allocation2 + $0x68] sm:$0xff]
        %v5422 = vld [vmem:[#allocation2 + $0x78] sm:$0xff]
        %v5423 = vld [vmem:[#allocation2 + $0x80] sm:$0xff]
        %v5424 = vld [vmem:[#allocation2 + $0x90] sm:$0xff]
        %v5425 = vld [vmem:[#allocation2 + $0x98] sm:$0xff]
        %v5426 = vld [vmem:[#allocation2 + $0xa8] sm:$0xff]
        %v5427 = vld [vmem:[#allocation2 + $0xb0] sm:$0xff]
        %v5428 = vld [vmem:[#allocation2 + $0xc0] sm:$0xff]
        %v5429 = vld [vmem:[#allocation2 + $0xc8] sm:$0xff]
        %v5430 = vld [vmem:[#allocation2 + $0xd8] sm:$0xff]
        %v5431 = vld [vmem:[#allocation2 + $0xe0] sm:$0xff]
        %v5432 = vld [vmem:[#allocation2 + $0xf0] sm:$0xff]
        %v5433 = vld [vmem:[#allocation2 + $0xf8] sm:$0xff]
        %v5434 = vld [vmem:[#allocation2 + $0x108] sm:$0xff]
        %v5435 = vld [vmem:[#allocation2 + $0x110] sm:$0xff]
        %v5436 = vld [vmem:[#allocation2 + $0x120] sm:$0xff]
        %v5437 = vld [vmem:[#allocation2 + $0x128] sm:$0xff]
        %v5438 = vld [vmem:[#allocation2 + $0x138] sm:$0xff]
        %v5439 = vld [vmem:[#allocation2 + $0x140] sm:$0xff]
        %v5440 = vld [vmem:[#allocation2 + $0x150] sm:$0xff]
        %v5441 = vld [vmem:[#allocation2 + $0x158] sm:$0xff]
        %v5442 = vld [vmem:[#allocation2 + $0x168] sm:$0xff]
        %v5443 = vld [vmem:[#allocation2 + $0x170] sm:$0xff]
        %v5444 = vld [vmem:[#allocation2 + $0x1] sm:$0xff]
        %v5445 = vld [vmem:[#allocation2 + $0x9] sm:$0xff]
        %v5446 = vld [vmem:[#allocation2 + $0x19] sm:$0xff]
        %v5447 = vld [vmem:[#allocation2 + $0x21] sm:$0xff]
        %v5448 = vld [vmem:[#allocation2 + $0x31] sm:$0xff]
        %v5449 = vld [vmem:[#allocation2 + $0x39] sm:$0xff]
        %v5450 = vld [vmem:[#allocation2 + $0x49] sm:$0xff]
        %v5451 = vld [vmem:[#allocation2 + $0x51] sm:$0xff]
        %v5452 = vld [vmem:[#allocation2 + $0x61] sm:$0xff]
        %v5453 = vld [vmem:[#allocation2 + $0x69] sm:$0xff]
        %v5454 = vld [vmem:[#allocation2 + $0x79] sm:$0xff]
        %v5455 = vld [vmem:[#allocation2 + $0x81] sm:$0xff]
        %v5456 = vld [vmem:[#allocation2 + $0x91] sm:$0xff]
        %v5457 = vld [vmem:[#allocation2 + $0x99] sm:$0xff]
        %v5458 = vld [vmem:[#allocation2 + $0xa9] sm:$0xff]
        %v5459 = vld [vmem:[#allocation2 + $0xb1] sm:$0xff]
        %v5460 = vld [vmem:[#allocation2 + $0xc1] sm:$0xff]
        %v5461 = vld [vmem:[#allocation2 + $0xc9] sm:$0xff]
        %v5462 = vld [vmem:[#allocation2 + $0xd9] sm:$0xff]
        %v5463 = vld [vmem:[#allocation2 + $0xe1] sm:$0xff]
        %v5464 = vld [vmem:[#allocation2 + $0xf1] sm:$0xff]
        %v5465 = vld [vmem:[#allocation2 + $0xf9] sm:$0xff]
        %v5466 = vld [vmem:[#allocation2 + $0x109] sm:$0xff]
        %v5467 = vld [vmem:[#allocation2 + $0x111] sm:$0xff]
        %v5468 = vld [vmem:[#allocation2 + $0x121] sm:$0xff]
        %v5469 = vld [vmem:[#allocation2 + $0x129] sm:$0xff]
        %v5470 = vld [vmem:[#allocation2 + $0x139] sm:$0xff]
        %v5471 = vld [vmem:[#allocation2 + $0x141] sm:$0xff]
        %v5472 = vld [vmem:[#allocation2 + $0x151] sm:$0xff]
        %v5473 = vld [vmem:[#allocation2 + $0x159] sm:$0xff]
        %v5474 = vld [vmem:[#allocation2 + $0x169] sm:$0xff]
        %v5475 = vld [vmem:[#allocation2 + $0x171] sm:$0xff]
        %v5476 = vmax.f32 %v5412, %v5444
        %v5477 = vmax.f32 %v5413, %v5445
        %v5478 = vmax.f32 %v5414, %v5446
        %v5479 = vmax.f32 %v5415, %v5447
        %v5480 = vmax.f32 %v5416, %v5448
        %v5481 = vmax.f32 %v5417, %v5449
        %v5482 = vmax.f32 %v5418, %v5450
        %v5483 = vmax.f32 %v5419, %v5451
        %v5484 = vmax.f32 %v5420, %v5452
        %v5485 = vmax.f32 %v5421, %v5453
        %v5486 = vmax.f32 %v5422, %v5454
        %v5487 = vmax.f32 %v5423, %v5455
        %v5488 = vmax.f32 %v5424, %v5456
        %v5489 = vmax.f32 %v5425, %v5457
        %v5490 = vmax.f32 %v5426, %v5458
        %v5491 = vmax.f32 %v5427, %v5459
        %v5492 = vmax.f32 %v5428, %v5460
        %v5493 = vmax.f32 %v5429, %v5461
        %v5494 = vmax.f32 %v5430, %v5462
        %v5495 = vmax.f32 %v5431, %v5463
        %v5496 = vmax.f32 %v5432, %v5464
        %v5497 = vmax.f32 %v5433, %v5465
        %v5498 = vmax.f32 %v5434, %v5466
        %v5499 = vmax.f32 %v5435, %v5467
        %v5500 = vmax.f32 %v5436, %v5468
        %v5501 = vmax.f32 %v5437, %v5469
        %v5502 = vmax.f32 %v5438, %v5470
        %v5503 = vmax.f32 %v5439, %v5471
        %v5504 = vmax.f32 %v5440, %v5472
        %v5505 = vmax.f32 %v5441, %v5473
        %v5506 = vmax.f32 %v5442, %v5474
        %v5507 = vmax.f32 %v5443, %v5475
        %v5508 = vld [vmem:[#allocation2 + $0x2] sm:$0xff]
        %v5509 = vld [vmem:[#allocation2 + $0xa] sm:$0xff]
        %v5510 = vld [vmem:[#allocation2 + $0x1a] sm:$0xff]
        %v5511 = vld [vmem:[#allocation2 + $0x22] sm:$0xff]
        %v5512 = vld [vmem:[#allocation2 + $0x32] sm:$0xff]
        %v5513 = vld [vmem:[#allocation2 + $0x3a] sm:$0xff]
        %v5514 = vld [vmem:[#allocation2 + $0x4a] sm:$0xff]
        %v5515 = vld [vmem:[#allocation2 + $0x52] sm:$0xff]
        %v5516 = vld [vmem:[#allocation2 + $0x62] sm:$0xff]
        %v5517 = vld [vmem:[#allocation2 + $0x6a] sm:$0xff]
        %v5518 = vld [vmem:[#allocation2 + $0x7a] sm:$0xff]
        %v5519 = vld [vmem:[#allocation2 + $0x82] sm:$0xff]
        %v5520 = vld [vmem:[#allocation2 + $0x92] sm:$0xff]
        %v5521 = vld [vmem:[#allocation2 + $0x9a] sm:$0xff]
        %v5522 = vld [vmem:[#allocation2 + $0xaa] sm:$0xff]
        %v5523 = vld [vmem:[#allocation2 + $0xb2] sm:$0xff]
        %v5524 = vld [vmem:[#allocation2 + $0xc2] sm:$0xff]
        %v5525 = vld [vmem:[#allocation2 + $0xca] sm:$0xff]
        %v5526 = vld [vmem:[#allocation2 + $0xda] sm:$0xff]
        %v5527 = vld [vmem:[#allocation2 + $0xe2] sm:$0xff]
        %v5528 = vld [vmem:[#allocation2 + $0xf2] sm:$0xff]
        %v5529 = vld [vmem:[#allocation2 + $0xfa] sm:$0xff]
        %v5530 = vld [vmem:[#allocation2 + $0x10a] sm:$0xff]
        %v5531 = vld [vmem:[#allocation2 + $0x112] sm:$0xff]
        %v5532 = vld [vmem:[#allocation2 + $0x122] sm:$0xff]
        %v5533 = vld [vmem:[#allocation2 + $0x12a] sm:$0xff]
        %v5534 = vld [vmem:[#allocation2 + $0x13a] sm:$0xff]
        %v5535 = vld [vmem:[#allocation2 + $0x142] sm:$0xff]
        %v5536 = vld [vmem:[#allocation2 + $0x152] sm:$0xff]
        %v5537 = vld [vmem:[#allocation2 + $0x15a] sm:$0xff]
        %v5538 = vld [vmem:[#allocation2 + $0x16a] sm:$0xff]
        %v5539 = vld [vmem:[#allocation2 + $0x172] sm:$0xff]
        %v5540 = vmax.f32 %v5476, %v5508
        %v5541 = vmax.f32 %v5477, %v5509
        %v5542 = vmax.f32 %v5478, %v5510
        %v5543 = vmax.f32 %v5479, %v5511
        %v5544 = vmax.f32 %v5480, %v5512
        %v5545 = vmax.f32 %v5481, %v5513
        %v5546 = vmax.f32 %v5482, %v5514
        %v5547 = vmax.f32 %v5483, %v5515
        %v5548 = vmax.f32 %v5484, %v5516
        %v5549 = vmax.f32 %v5485, %v5517
        %v5550 = vmax.f32 %v5486, %v5518
        %v5551 = vmax.f32 %v5487, %v5519
        %v5552 = vmax.f32 %v5488, %v5520
        %v5553 = vmax.f32 %v5489, %v5521
        %v5554 = vmax.f32 %v5490, %v5522
        %v5555 = vmax.f32 %v5491, %v5523
        %v5556 = vmax.f32 %v5492, %v5524
        %v5557 = vmax.f32 %v5493, %v5525
        %v5558 = vmax.f32 %v5494, %v5526
        %v5559 = vmax.f32 %v5495, %v5527
        %v5560 = vmax.f32 %v5496, %v5528
        %v5561 = vmax.f32 %v5497, %v5529
        %v5562 = vmax.f32 %v5498, %v5530
        %v5563 = vmax.f32 %v5499, %v5531
        %v5564 = vmax.f32 %v5500, %v5532
        %v5565 = vmax.f32 %v5501, %v5533
        %v5566 = vmax.f32 %v5502, %v5534
        %v5567 = vmax.f32 %v5503, %v5535
        %v5568 = vmax.f32 %v5504, %v5536
        %v5569 = vmax.f32 %v5505, %v5537
        %v5570 = vmax.f32 %v5506, %v5538
        %v5571 = vmax.f32 %v5507, %v5539
        %v5572 = vld [vmem:[%s5361] sm:$0xff]
        %v5573 = vld [vmem:[%s5361 + $0x8] sm:$0xff]
        %v5574 = vld [vmem:[%s5361 + $0x18] sm:$0xff]
        %v5575 = vld [vmem:[%s5361 + $0x20] sm:$0xff]
        %v5576 = vld [vmem:[%s5361 + $0x30] sm:$0xff]
        %v5577 = vld [vmem:[%s5361 + $0x38] sm:$0xff]
        %v5578 = vld [vmem:[%s5361 + $0x48] sm:$0xff]
        %v5579 = vld [vmem:[%s5361 + $0x50] sm:$0xff]
        %v5580 = vld [vmem:[%s5361 + $0x60] sm:$0xff]
        %v5581 = vld [vmem:[%s5361 + $0x68] sm:$0xff]
        %v5582 = vld [vmem:[%s5361 + $0x78] sm:$0xff]
        %v5583 = vld [vmem:[%s5361 + $0x80] sm:$0xff]
        %v5584 = vld [vmem:[%s5361 + $0x90] sm:$0xff]
        %v5585 = vld [vmem:[%s5361 + $0x98] sm:$0xff]
        %v5586 = vld [vmem:[%s5361 + $0xa8] sm:$0xff]
        %v5587 = vld [vmem:[%s5361 + $0xb0] sm:$0xff]
        %v5588 = vld [vmem:[%s5361 + $0xc0] sm:$0xff]
        %v5589 = vld [vmem:[%s5361 + $0xc8] sm:$0xff]
        %v5590 = vld [vmem:[%s5361 + $0xd8] sm:$0xff]
        %v5591 = vld [vmem:[%s5361 + $0xe0] sm:$0xff]
        %v5592 = vld [vmem:[%s5361 + $0xf0] sm:$0xff]
        %v5593 = vld [vmem:[%s5361 + $0xf8] sm:$0xff]
        %v5594 = vld [vmem:[%s5361 + $0x108] sm:$0xff]
        %v5595 = vld [vmem:[%s5361 + $0x110] sm:$0xff]
        %v5596 = vld [vmem:[%s5361 + $0x120] sm:$0xff]
        %v5597 = vld [vmem:[%s5361 + $0x128] sm:$0xff]
        %v5598 = vld [vmem:[%s5361 + $0x138] sm:$0xff]
        %v5599 = vld [vmem:[%s5361 + $0x140] sm:$0xff]
        %v5600 = vld [vmem:[%s5361 + $0x150] sm:$0xff]
        %v5601 = vld [vmem:[%s5361 + $0x158] sm:$0xff]
        %v5602 = vld [vmem:[%s5361 + $0x168] sm:$0xff]
        %v5603 = vld [vmem:[%s5361 + $0x170] sm:$0xff]
        %v5604 = vmax.f32 %v5540, %v5572
        %v5605 = vmax.f32 %v5541, %v5573
        %v5606 = vmax.f32 %v5542, %v5574
        %v5607 = vmax.f32 %v5543, %v5575
        %v5608 = vmax.f32 %v5544, %v5576
        %v5609 = vmax.f32 %v5545, %v5577
        %v5610 = vmax.f32 %v5546, %v5578
        %v5611 = vmax.f32 %v5547, %v5579
        %v5612 = vmax.f32 %v5548, %v5580
        %v5613 = vmax.f32 %v5549, %v5581
        %v5614 = vmax.f32 %v5550, %v5582
        %v5615 = vmax.f32 %v5551, %v5583
        %v5616 = vmax.f32 %v5552, %v5584
        %v5617 = vmax.f32 %v5553, %v5585
        %v5618 = vmax.f32 %v5554, %v5586
        %v5619 = vmax.f32 %v5555, %v5587
        %v5620 = vmax.f32 %v5556, %v5588
        %v5621 = vmax.f32 %v5557, %v5589
        %v5622 = vmax.f32 %v5558, %v5590
        %v5623 = vmax.f32 %v5559, %v5591
        %v5624 = vmax.f32 %v5560, %v5592
        %v5625 = vmax.f32 %v5561, %v5593
        %v5626 = vmax.f32 %v5562, %v5594
        %v5627 = vmax.f32 %v5563, %v5595
        %v5628 = vmax.f32 %v5564, %v5596
        %v5629 = vmax.f32 %v5565, %v5597
        %v5630 = vmax.f32 %v5566, %v5598
        %v5631 = vmax.f32 %v5567, %v5599
        %v5632 = vmax.f32 %v5568, %v5600
        %v5633 = vmax.f32 %v5569, %v5601
        %v5634 = vmax.f32 %v5570, %v5602
        %v5635 = vmax.f32 %v5571, %v5603
        %v5636 = vld [vmem:[%s5361 + $0x1] sm:$0xff]
        %v5637 = vld [vmem:[%s5361 + $0x9] sm:$0xff]
        %v5638 = vld [vmem:[%s5361 + $0x19] sm:$0xff]
        %v5639 = vld [vmem:[%s5361 + $0x21] sm:$0xff]
        %v5640 = vld [vmem:[%s5361 + $0x31] sm:$0xff]
        %v5641 = vld [vmem:[%s5361 + $0x39] sm:$0xff]
        %v5642 = vld [vmem:[%s5361 + $0x49] sm:$0xff]
        %v5643 = vld [vmem:[%s5361 + $0x51] sm:$0xff]
        %v5644 = vld [vmem:[%s5361 + $0x61] sm:$0xff]
        %v5645 = vld [vmem:[%s5361 + $0x69] sm:$0xff]
        %v5646 = vld [vmem:[%s5361 + $0x79] sm:$0xff]
        %v5647 = vld [vmem:[%s5361 + $0x81] sm:$0xff]
        %v5648 = vld [vmem:[%s5361 + $0x91] sm:$0xff]
        %v5649 = vld [vmem:[%s5361 + $0x99] sm:$0xff]
        %v5650 = vld [vmem:[%s5361 + $0xa9] sm:$0xff]
        %v5651 = vld [vmem:[%s5361 + $0xb1] sm:$0xff]
        %v5652 = vld [vmem:[%s5361 + $0xc1] sm:$0xff]
        %v5653 = vld [vmem:[%s5361 + $0xc9] sm:$0xff]
        %v5654 = vld [vmem:[%s5361 + $0xd9] sm:$0xff]
        %v5655 = vld [vmem:[%s5361 + $0xe1] sm:$0xff]
        %v5656 = vld [vmem:[%s5361 + $0xf1] sm:$0xff]
        %v5657 = vld [vmem:[%s5361 + $0xf9] sm:$0xff]
        %v5658 = vld [vmem:[%s5361 + $0x109] sm:$0xff]
        %v5659 = vld [vmem:[%s5361 + $0x111] sm:$0xff]
        %v5660 = vld [vmem:[%s5361 + $0x121] sm:$0xff]
        %v5661 = vld [vmem:[%s5361 + $0x129] sm:$0xff]
        %v5662 = vld [vmem:[%s5361 + $0x139] sm:$0xff]
        %v5663 = vld [vmem:[%s5361 + $0x141] sm:$0xff]
        %v5664 = vld [vmem:[%s5361 + $0x151] sm:$0xff]
        %v5665 = vld [vmem:[%s5361 + $0x159] sm:$0xff]
        %v5666 = vld [vmem:[%s5361 + $0x169] sm:$0xff]
        %v5667 = vld [vmem:[%s5361 + $0x171] sm:$0xff]
        %v5668 = vmax.f32 %v5604, %v5636
        %v5669 = vmax.f32 %v5605, %v5637
        %v5670 = vmax.f32 %v5606, %v5638
        %v5671 = vmax.f32 %v5607, %v5639
        %v5672 = vmax.f32 %v5608, %v5640
        %v5673 = vmax.f32 %v5609, %v5641
        %v5674 = vmax.f32 %v5610, %v5642
        %v5675 = vmax.f32 %v5611, %v5643
        %v5676 = vmax.f32 %v5612, %v5644
        %v5677 = vmax.f32 %v5613, %v5645
        %v5678 = vmax.f32 %v5614, %v5646
        %v5679 = vmax.f32 %v5615, %v5647
        %v5680 = vmax.f32 %v5616, %v5648
        %v5681 = vmax.f32 %v5617, %v5649
        %v5682 = vmax.f32 %v5618, %v5650
        %v5683 = vmax.f32 %v5619, %v5651
        %v5684 = vmax.f32 %v5620, %v5652
        %v5685 = vmax.f32 %v5621, %v5653
        %v5686 = vmax.f32 %v5622, %v5654
        %v5687 = vmax.f32 %v5623, %v5655
        %v5688 = vmax.f32 %v5624, %v5656
        %v5689 = vmax.f32 %v5625, %v5657
        %v5690 = vmax.f32 %v5626, %v5658
        %v5691 = vmax.f32 %v5627, %v5659
        %v5692 = vmax.f32 %v5628, %v5660
        %v5693 = vmax.f32 %v5629, %v5661
        %v5694 = vmax.f32 %v5630, %v5662
        %v5695 = vmax.f32 %v5631, %v5663
        %v5696 = vmax.f32 %v5632, %v5664
        %v5697 = vmax.f32 %v5633, %v5665
        %v5698 = vmax.f32 %v5634, %v5666
        %v5699 = vmax.f32 %v5635, %v5667
        %v5700 = vld [vmem:[%s5361 + $0x2] sm:$0xff]
        %v5701 = vld [vmem:[%s5361 + $0xa] sm:$0xff]
        %v5702 = vld [vmem:[%s5361 + $0x1a] sm:$0xff]
        %v5703 = vld [vmem:[%s5361 + $0x22] sm:$0xff]
        %v5704 = vld [vmem:[%s5361 + $0x32] sm:$0xff]
        %v5705 = vld [vmem:[%s5361 + $0x3a] sm:$0xff]
        %v5706 = vld [vmem:[%s5361 + $0x4a] sm:$0xff]
        %v5707 = vld [vmem:[%s5361 + $0x52] sm:$0xff]
        %v5708 = vld [vmem:[%s5361 + $0x62] sm:$0xff]
        %v5709 = vld [vmem:[%s5361 + $0x6a] sm:$0xff]
        %v5710 = vld [vmem:[%s5361 + $0x7a] sm:$0xff]
        %v5711 = vld [vmem:[%s5361 + $0x82] sm:$0xff]
        %v5712 = vld [vmem:[%s5361 + $0x92] sm:$0xff]
        %v5713 = vld [vmem:[%s5361 + $0x9a] sm:$0xff]
        %v5714 = vld [vmem:[%s5361 + $0xaa] sm:$0xff]
        %v5715 = vld [vmem:[%s5361 + $0xb2] sm:$0xff]
        %v5716 = vld [vmem:[%s5361 + $0xc2] sm:$0xff]
        %v5717 = vld [vmem:[%s5361 + $0xca] sm:$0xff]
        %v5718 = vld [vmem:[%s5361 + $0xda] sm:$0xff]
        %v5719 = vld [vmem:[%s5361 + $0xe2] sm:$0xff]
        %v5720 = vld [vmem:[%s5361 + $0xf2] sm:$0xff]
        %v5721 = vld [vmem:[%s5361 + $0xfa] sm:$0xff]
        %v5722 = vld [vmem:[%s5361 + $0x10a] sm:$0xff]
        %v5723 = vld [vmem:[%s5361 + $0x112] sm:$0xff]
        %v5724 = vld [vmem:[%s5361 + $0x122] sm:$0xff]
        %v5725 = vld [vmem:[%s5361 + $0x12a] sm:$0xff]
        %v5726 = vld [vmem:[%s5361 + $0x13a] sm:$0xff]
        %v5727 = vld [vmem:[%s5361 + $0x142] sm:$0xff]
        %v5728 = vld [vmem:[%s5361 + $0x152] sm:$0xff]
        %v5729 = vld [vmem:[%s5361 + $0x15a] sm:$0xff]
        %v5730 = vld [vmem:[%s5361 + $0x16a] sm:$0xff]
        %v5731 = vld [vmem:[%s5361 + $0x172] sm:$0xff]
        %v5732 = vmax.f32 %v5668, %v5700
        %v5733 = vmax.f32 %v5669, %v5701
        %v5734 = vmax.f32 %v5670, %v5702
        %v5735 = vmax.f32 %v5671, %v5703
        %v5736 = vmax.f32 %v5672, %v5704
        %v5737 = vmax.f32 %v5673, %v5705
        %v5738 = vmax.f32 %v5674, %v5706
        %v5739 = vmax.f32 %v5675, %v5707
        %v5740 = vmax.f32 %v5676, %v5708
        %v5741 = vmax.f32 %v5677, %v5709
        %v5742 = vmax.f32 %v5678, %v5710
        %v5743 = vmax.f32 %v5679, %v5711
        %v5744 = vmax.f32 %v5680, %v5712
        %v5745 = vmax.f32 %v5681, %v5713
        %v5746 = vmax.f32 %v5682, %v5714
        %v5747 = vmax.f32 %v5683, %v5715
        %v5748 = vmax.f32 %v5684, %v5716
        %v5749 = vmax.f32 %v5685, %v5717
        %v5750 = vmax.f32 %v5686, %v5718
        %v5751 = vmax.f32 %v5687, %v5719
        %v5752 = vmax.f32 %v5688, %v5720
        %v5753 = vmax.f32 %v5689, %v5721
        %v5754 = vmax.f32 %v5690, %v5722
        %v5755 = vmax.f32 %v5691, %v5723
        %v5756 = vmax.f32 %v5692, %v5724
        %v5757 = vmax.f32 %v5693, %v5725
        %v5758 = vmax.f32 %v5694, %v5726
        %v5759 = vmax.f32 %v5695, %v5727
        %v5760 = vmax.f32 %v5696, %v5728
        %v5761 = vmax.f32 %v5697, %v5729
        %v5762 = vmax.f32 %v5698, %v5730
        %v5763 = vmax.f32 %v5699, %v5731
        %s5764 = scalar_lea.vmem [#allocation2], 48
        %v5765 = vld [vmem:[%s5764] sm:$0xff]
        %v5766 = vld [vmem:[%s5764 + $0x8] sm:$0xff]
        %v5767 = vld [vmem:[%s5764 + $0x18] sm:$0xff]
        %v5768 = vld [vmem:[%s5764 + $0x20] sm:$0xff]
        %v5769 = vld [vmem:[%s5764 + $0x30] sm:$0xff]
        %v5770 = vld [vmem:[%s5764 + $0x38] sm:$0xff]
        %v5771 = vld [vmem:[%s5764 + $0x48] sm:$0xff]
        %v5772 = vld [vmem:[%s5764 + $0x50] sm:$0xff]
        %v5773 = vld [vmem:[%s5764 + $0x60] sm:$0xff]
        %v5774 = vld [vmem:[%s5764 + $0x68] sm:$0xff]
        %v5775 = vld [vmem:[%s5764 + $0x78] sm:$0xff]
        %v5776 = vld [vmem:[%s5764 + $0x80] sm:$0xff]
        %v5777 = vld [vmem:[%s5764 + $0x90] sm:$0xff]
        %v5778 = vld [vmem:[%s5764 + $0x98] sm:$0xff]
        %v5779 = vld [vmem:[%s5764 + $0xa8] sm:$0xff]
        %v5780 = vld [vmem:[%s5764 + $0xb0] sm:$0xff]
        %v5781 = vld [vmem:[%s5764 + $0xc0] sm:$0xff]
        %v5782 = vld [vmem:[%s5764 + $0xc8] sm:$0xff]
        %v5783 = vld [vmem:[%s5764 + $0xd8] sm:$0xff]
        %v5784 = vld [vmem:[%s5764 + $0xe0] sm:$0xff]
        %v5785 = vld [vmem:[%s5764 + $0xf0] sm:$0xff]
        %v5786 = vld [vmem:[%s5764 + $0xf8] sm:$0xff]
        %v5787 = vld [vmem:[%s5764 + $0x108] sm:$0xff]
        %v5788 = vld [vmem:[%s5764 + $0x110] sm:$0xff]
        %v5789 = vld [vmem:[%s5764 + $0x120] sm:$0xff]
        %v5790 = vld [vmem:[%s5764 + $0x128] sm:$0xff]
        %v5791 = vld [vmem:[%s5764 + $0x138] sm:$0xff]
        %v5792 = vld [vmem:[%s5764 + $0x140] sm:$0xff]
        %v5793 = vld [vmem:[%s5764 + $0x150] sm:$0xff]
        %v5794 = vld [vmem:[%s5764 + $0x158] sm:$0xff]
        %v5795 = vld [vmem:[%s5764 + $0x168] sm:$0xff]
        %v5796 = vld [vmem:[%s5764 + $0x170] sm:$0xff]
        %v5797 = vmax.f32 %v5732, %v5765
        %v5798 = vmax.f32 %v5733, %v5766
        %v5799 = vmax.f32 %v5734, %v5767
        %v5800 = vmax.f32 %v5735, %v5768
        %v5801 = vmax.f32 %v5736, %v5769
        %v5802 = vmax.f32 %v5737, %v5770
        %v5803 = vmax.f32 %v5738, %v5771
        %v5804 = vmax.f32 %v5739, %v5772
        %v5805 = vmax.f32 %v5740, %v5773
        %v5806 = vmax.f32 %v5741, %v5774
        %v5807 = vmax.f32 %v5742, %v5775
        %v5808 = vmax.f32 %v5743, %v5776
        %v5809 = vmax.f32 %v5744, %v5777
        %v5810 = vmax.f32 %v5745, %v5778
        %v5811 = vmax.f32 %v5746, %v5779
        %v5812 = vmax.f32 %v5747, %v5780
        %v5813 = vmax.f32 %v5748, %v5781
        %v5814 = vmax.f32 %v5749, %v5782
        %v5815 = vmax.f32 %v5750, %v5783
        %v5816 = vmax.f32 %v5751, %v5784
        %v5817 = vmax.f32 %v5752, %v5785
        %v5818 = vmax.f32 %v5753, %v5786
        %v5819 = vmax.f32 %v5754, %v5787
        %v5820 = vmax.f32 %v5755, %v5788
        %v5821 = vmax.f32 %v5756, %v5789
        %v5822 = vmax.f32 %v5757, %v5790
        %v5823 = vmax.f32 %v5758, %v5791
        %v5824 = vmax.f32 %v5759, %v5792
        %v5825 = vmax.f32 %v5760, %v5793
        %v5826 = vmax.f32 %v5761, %v5794
        %v5827 = vmax.f32 %v5762, %v5795
        %v5828 = vmax.f32 %v5763, %v5796
        %v5829 = vld [vmem:[%s5764 + $0x1] sm:$0xff]
        %v5830 = vld [vmem:[%s5764 + $0x9] sm:$0xff]
        %v5831 = vld [vmem:[%s5764 + $0x19] sm:$0xff]
        %v5832 = vld [vmem:[%s5764 + $0x21] sm:$0xff]
        %v5833 = vld [vmem:[%s5764 + $0x31] sm:$0xff]
        %v5834 = vld [vmem:[%s5764 + $0x39] sm:$0xff]
        %v5835 = vld [vmem:[%s5764 + $0x49] sm:$0xff]
        %v5836 = vld [vmem:[%s5764 + $0x51] sm:$0xff]
        %v5837 = vld [vmem:[%s5764 + $0x61] sm:$0xff]
        %v5838 = vld [vmem:[%s5764 + $0x69] sm:$0xff]
        %v5839 = vld [vmem:[%s5764 + $0x79] sm:$0xff]
        %v5840 = vld [vmem:[%s5764 + $0x81] sm:$0xff]
        %v5841 = vld [vmem:[%s5764 + $0x91] sm:$0xff]
        %v5842 = vld [vmem:[%s5764 + $0x99] sm:$0xff]
        %v5843 = vld [vmem:[%s5764 + $0xa9] sm:$0xff]
        %v5844 = vld [vmem:[%s5764 + $0xb1] sm:$0xff]
        %v5845 = vld [vmem:[%s5764 + $0xc1] sm:$0xff]
        %v5846 = vld [vmem:[%s5764 + $0xc9] sm:$0xff]
        %v5847 = vld [vmem:[%s5764 + $0xd9] sm:$0xff]
        %v5848 = vld [vmem:[%s5764 + $0xe1] sm:$0xff]
        %v5849 = vld [vmem:[%s5764 + $0xf1] sm:$0xff]
        %v5850 = vld [vmem:[%s5764 + $0xf9] sm:$0xff]
        %v5851 = vld [vmem:[%s5764 + $0x109] sm:$0xff]
        %v5852 = vld [vmem:[%s5764 + $0x111] sm:$0xff]
        %v5853 = vld [vmem:[%s5764 + $0x121] sm:$0xff]
        %v5854 = vld [vmem:[%s5764 + $0x129] sm:$0xff]
        %v5855 = vld [vmem:[%s5764 + $0x139] sm:$0xff]
        %v5856 = vld [vmem:[%s5764 + $0x141] sm:$0xff]
        %v5857 = vld [vmem:[%s5764 + $0x151] sm:$0xff]
        %v5858 = vld [vmem:[%s5764 + $0x159] sm:$0xff]
        %v5859 = vld [vmem:[%s5764 + $0x169] sm:$0xff]
        %v5860 = vld [vmem:[%s5764 + $0x171] sm:$0xff]
        %v5861 = vmax.f32 %v5797, %v5829
        %v5862 = vmax.f32 %v5798, %v5830
        %v5863 = vmax.f32 %v5799, %v5831
        %v5864 = vmax.f32 %v5800, %v5832
        %v5865 = vmax.f32 %v5801, %v5833
        %v5866 = vmax.f32 %v5802, %v5834
        %v5867 = vmax.f32 %v5803, %v5835
        %v5868 = vmax.f32 %v5804, %v5836
        %v5869 = vmax.f32 %v5805, %v5837
        %v5870 = vmax.f32 %v5806, %v5838
        %v5871 = vmax.f32 %v5807, %v5839
        %v5872 = vmax.f32 %v5808, %v5840
        %v5873 = vmax.f32 %v5809, %v5841
        %v5874 = vmax.f32 %v5810, %v5842
        %v5875 = vmax.f32 %v5811, %v5843
        %v5876 = vmax.f32 %v5812, %v5844
        %v5877 = vmax.f32 %v5813, %v5845
        %v5878 = vmax.f32 %v5814, %v5846
        %v5879 = vmax.f32 %v5815, %v5847
        %v5880 = vmax.f32 %v5816, %v5848
        %v5881 = vmax.f32 %v5817, %v5849
        %v5882 = vmax.f32 %v5818, %v5850
        %v5883 = vmax.f32 %v5819, %v5851
        %v5884 = vmax.f32 %v5820, %v5852
        %v5885 = vmax.f32 %v5821, %v5853
        %v5886 = vmax.f32 %v5822, %v5854
        %v5887 = vmax.f32 %v5823, %v5855
        %v5888 = vmax.f32 %v5824, %v5856
        %v5889 = vmax.f32 %v5825, %v5857
        %v5890 = vmax.f32 %v5826, %v5858
        %v5891 = vmax.f32 %v5827, %v5859
        %v5892 = vmax.f32 %v5828, %v5860
        %v5893 = vld [vmem:[%s5764 + $0x2] sm:$0xff]
        %v5894 = vld [vmem:[%s5764 + $0xa] sm:$0xff]
        %v5895 = vld [vmem:[%s5764 + $0x1a] sm:$0xff]
        %v5896 = vld [vmem:[%s5764 + $0x22] sm:$0xff]
        %v5897 = vld [vmem:[%s5764 + $0x32] sm:$0xff]
        %v5898 = vld [vmem:[%s5764 + $0x3a] sm:$0xff]
        %v5899 = vld [vmem:[%s5764 + $0x4a] sm:$0xff]
        %v5900 = vld [vmem:[%s5764 + $0x52] sm:$0xff]
        %v5901 = vld [vmem:[%s5764 + $0x62] sm:$0xff]
        %v5902 = vld [vmem:[%s5764 + $0x6a] sm:$0xff]
        %v5903 = vld [vmem:[%s5764 + $0x7a] sm:$0xff]
        %v5904 = vld [vmem:[%s5764 + $0x82] sm:$0xff]
        %v5905 = vld [vmem:[%s5764 + $0x92] sm:$0xff]
        %v5906 = vld [vmem:[%s5764 + $0x9a] sm:$0xff]
        %v5907 = vld [vmem:[%s5764 + $0xaa] sm:$0xff]
        %v5908 = vld [vmem:[%s5764 + $0xb2] sm:$0xff]
        %v5909 = vld [vmem:[%s5764 + $0xc2] sm:$0xff]
        %v5910 = vld [vmem:[%s5764 + $0xca] sm:$0xff]
        %v5911 = vld [vmem:[%s5764 + $0xda] sm:$0xff]
        %v5912 = vld [vmem:[%s5764 + $0xe2] sm:$0xff]
        %v5913 = vld [vmem:[%s5764 + $0xf2] sm:$0xff]
        %v5914 = vld [vmem:[%s5764 + $0xfa] sm:$0xff]
        %v5915 = vld [vmem:[%s5764 + $0x10a] sm:$0xff]
        %v5916 = vld [vmem:[%s5764 + $0x112] sm:$0xff]
        %v5917 = vld [vmem:[%s5764 + $0x122] sm:$0xff]
        %v5918 = vld [vmem:[%s5764 + $0x12a] sm:$0xff]
        %v5919 = vld [vmem:[%s5764 + $0x13a] sm:$0xff]
        %v5920 = vld [vmem:[%s5764 + $0x142] sm:$0xff]
        %v5921 = vld [vmem:[%s5764 + $0x152] sm:$0xff]
        %v5922 = vld [vmem:[%s5764 + $0x15a] sm:$0xff]
        %v5923 = vld [vmem:[%s5764 + $0x16a] sm:$0xff]
        %v5924 = vld [vmem:[%s5764 + $0x172] sm:$0xff]
        %v5925 = vmax.f32 %v5861, %v5893
        %v5926 = vmax.f32 %v5862, %v5894
        %v5927 = vmax.f32 %v5863, %v5895
        %v5928 = vmax.f32 %v5864, %v5896
        %v5929 = vmax.f32 %v5865, %v5897
        %v5930 = vmax.f32 %v5866, %v5898
        %v5931 = vmax.f32 %v5867, %v5899
        %v5932 = vmax.f32 %v5868, %v5900
        %v5933 = vmax.f32 %v5869, %v5901
        %v5934 = vmax.f32 %v5870, %v5902
        %v5935 = vmax.f32 %v5871, %v5903
        %v5936 = vmax.f32 %v5872, %v5904
        %v5937 = vmax.f32 %v5873, %v5905
        %v5938 = vmax.f32 %v5874, %v5906
        %v5939 = vmax.f32 %v5875, %v5907
        %v5940 = vmax.f32 %v5876, %v5908
        %v5941 = vmax.f32 %v5877, %v5909
        %v5942 = vmax.f32 %v5878, %v5910
        %v5943 = vmax.f32 %v5879, %v5911
        %v5944 = vmax.f32 %v5880, %v5912
        %v5945 = vmax.f32 %v5881, %v5913
        %v5946 = vmax.f32 %v5882, %v5914
        %v5947 = vmax.f32 %v5883, %v5915
        %v5948 = vmax.f32 %v5884, %v5916
        %v5949 = vmax.f32 %v5885, %v5917
        %v5950 = vmax.f32 %v5886, %v5918
        %v5951 = vmax.f32 %v5887, %v5919
        %v5952 = vmax.f32 %v5888, %v5920
        %v5953 = vmax.f32 %v5889, %v5921
        %v5954 = vmax.f32 %v5890, %v5922
        %v5955 = vmax.f32 %v5891, %v5923
        %v5956 = vmax.f32 %v5892, %v5924
        %vm5957 = vcmp.gt.f32.partialorder %v5925, 0.1
        %vm5958 = vcmp.gt.f32.partialorder %v5926, 0.1
        %vm5959 = vcmp.gt.f32.partialorder %v5927, 0.1
        %vm5960 = vcmp.gt.f32.partialorder %v5928, 0.1
        %vm5961 = vcmp.gt.f32.partialorder %v5929, 0.1
        %vm5962 = vcmp.gt.f32.partialorder %v5930, 0.1
        %vm5963 = vcmp.gt.f32.partialorder %v5931, 0.1
        %vm5964 = vcmp.gt.f32.partialorder %v5932, 0.1
        %vm5965 = vcmp.gt.f32.partialorder %v5933, 0.1
        %vm5966 = vcmp.gt.f32.partialorder %v5934, 0.1
        %vm5967 = vcmp.gt.f32.partialorder %v5935, 0.1
        %vm5968 = vcmp.gt.f32.partialorder %v5936, 0.1
        %vm5969 = vcmp.gt.f32.partialorder %v5937, 0.1
        %vm5970 = vcmp.gt.f32.partialorder %v5938, 0.1
        %vm5971 = vcmp.gt.f32.partialorder %v5939, 0.1
        %vm5972 = vcmp.gt.f32.partialorder %v5940, 0.1
        %vm5973 = vcmp.gt.f32.partialorder %v5941, 0.1
        %vm5974 = vcmp.gt.f32.partialorder %v5942, 0.1
        %vm5975 = vcmp.gt.f32.partialorder %v5943, 0.1
        %vm5976 = vcmp.gt.f32.partialorder %v5944, 0.1
        %vm5977 = vcmp.gt.f32.partialorder %v5945, 0.1
        %vm5978 = vcmp.gt.f32.partialorder %v5946, 0.1
        %vm5979 = vcmp.gt.f32.partialorder %v5947, 0.1
        %vm5980 = vcmp.gt.f32.partialorder %v5948, 0.1
        %vm5981 = vcmp.gt.f32.partialorder %v5949, 0.1
        %vm5982 = vcmp.gt.f32.partialorder %v5950, 0.1
        %vm5983 = vcmp.gt.f32.partialorder %v5951, 0.1
        %vm5984 = vcmp.gt.f32.partialorder %v5952, 0.1
        %vm5985 = vcmp.gt.f32.partialorder %v5953, 0.1
        %vm5986 = vcmp.gt.f32.partialorder %v5954, 0.1
        %vm5987 = vcmp.gt.f32.partialorder %v5955, 0.1
        %vm5988 = vcmp.gt.f32.partialorder %v5956, 0.1
        %v5989 = vsel %vm5957, 1, 0
        %v5990 = vsel %vm5958, 1, 0
        %v5991 = vsel %vm5959, 1, 0
        %v5992 = vsel %vm5960, 1, 0
        %v5993 = vsel %vm5961, 1, 0
        %v5994 = vsel %vm5962, 1, 0
        %v5995 = vsel %vm5963, 1, 0
        %v5996 = vsel %vm5964, 1, 0
        %v5997 = vsel %vm5965, 1, 0
        %v5998 = vsel %vm5966, 1, 0
        %v5999 = vsel %vm5967, 1, 0
        %v6000 = vsel %vm5968, 1, 0
        %v6001 = vsel %vm5969, 1, 0
        %v6002 = vsel %vm5970, 1, 0
        %v6003 = vsel %vm5971, 1, 0
        %v6004 = vsel %vm5972, 1, 0
        %v6005 = vsel %vm5973, 1, 0
        %v6006 = vsel %vm5974, 1, 0
        %v6007 = vsel %vm5975, 1, 0
        %v6008 = vsel %vm5976, 1, 0
        %v6009 = vsel %vm5977, 1, 0
        %v6010 = vsel %vm5978, 1, 0
        %v6011 = vsel %vm5979, 1, 0
        %v6012 = vsel %vm5980, 1, 0
        %v6013 = vsel %vm5981, 1, 0
        %v6014 = vsel %vm5982, 1, 0
        %v6015 = vsel %vm5983, 1, 0
        %v6016 = vsel %vm5984, 1, 0
        %v6017 = vsel %vm5985, 1, 0
        %v6018 = vsel %vm5986, 1, 0
        %v6019 = vsel %vm5987, 1, 0
        %v6020 = vsel %vm5988, 1, 0
        %v6021 = vcvt.s32.f32 %v5989
        %v6022 = vcvt.s32.f32 %v5990
        %v6023 = vcvt.s32.f32 %v5991
        %v6024 = vcvt.s32.f32 %v5992
        %v6025 = vcvt.s32.f32 %v5993
        %v6026 = vcvt.s32.f32 %v5994
        %v6027 = vcvt.s32.f32 %v5995
        %v6028 = vcvt.s32.f32 %v5996
        %v6029 = vcvt.s32.f32 %v5997
        %v6030 = vcvt.s32.f32 %v5998
        %v6031 = vcvt.s32.f32 %v5999
        %v6032 = vcvt.s32.f32 %v6000
        %v6033 = vcvt.s32.f32 %v6001
        %v6034 = vcvt.s32.f32 %v6002
        %v6035 = vcvt.s32.f32 %v6003
        %v6036 = vcvt.s32.f32 %v6004
        %v6037 = vcvt.s32.f32 %v6005
        %v6038 = vcvt.s32.f32 %v6006
        %v6039 = vcvt.s32.f32 %v6007
        %v6040 = vcvt.s32.f32 %v6008
        %v6041 = vcvt.s32.f32 %v6009
        %v6042 = vcvt.s32.f32 %v6010
        %v6043 = vcvt.s32.f32 %v6011
        %v6044 = vcvt.s32.f32 %v6012
        %v6045 = vcvt.s32.f32 %v6013
        %v6046 = vcvt.s32.f32 %v6014
        %v6047 = vcvt.s32.f32 %v6015
        %v6048 = vcvt.s32.f32 %v6016
        %v6049 = vcvt.s32.f32 %v6017
        %v6050 = vcvt.s32.f32 %v6018
        %v6051 = vcvt.s32.f32 %v6019
        %v6052 = vcvt.s32.f32 %v6020
        %6054 = vset.pattern.permute.xlu0 0
        %6055 = vperm.xlu0 %6054, %v6021
        %v6056 = vpop.permute.xlu0 %6055
        %6058 = vset.pattern.permute.xlu0 0
        %6059 = vperm.xlu0 %6058, %v6022
        %v6060 = vpop.permute.xlu0 %6059
        %6062 = vset.pattern.permute.xlu0 0
        %6063 = vperm.xlu0 %6062, %v6023
        %v6064 = vpop.permute.xlu0 %6063
        %6066 = vset.pattern.permute.xlu0 0
        %6067 = vperm.xlu0 %6066, %v6024
        %v6068 = vpop.permute.xlu0 %6067
        %6070 = vset.pattern.permute.xlu0 0
        %6071 = vperm.xlu0 %6070, %v6025
        %v6072 = vpop.permute.xlu0 %6071
        %6074 = vset.pattern.permute.xlu0 0
        %6075 = vperm.xlu0 %6074, %v6026
        %v6076 = vpop.permute.xlu0 %6075
        %6078 = vset.pattern.permute.xlu0 0
        %6079 = vperm.xlu0 %6078, %v6027
        %v6080 = vpop.permute.xlu0 %6079
        %6082 = vset.pattern.permute.xlu0 0
        %6083 = vperm.xlu0 %6082, %v6028
        %v6084 = vpop.permute.xlu0 %6083
        %6086 = vset.pattern.permute.xlu0 0
        %6087 = vperm.xlu0 %6086, %v6029
        %v6088 = vpop.permute.xlu0 %6087
        %6090 = vset.pattern.permute.xlu0 0
        %6091 = vperm.xlu0 %6090, %v6030
        %v6092 = vpop.permute.xlu0 %6091
        %6094 = vset.pattern.permute.xlu0 0
        %6095 = vperm.xlu0 %6094, %v6031
        %v6096 = vpop.permute.xlu0 %6095
        %6098 = vset.pattern.permute.xlu0 0
        %6099 = vperm.xlu0 %6098, %v6032
        %v6100 = vpop.permute.xlu0 %6099
        %6102 = vset.pattern.permute.xlu0 0
        %6103 = vperm.xlu0 %6102, %v6033
        %v6104 = vpop.permute.xlu0 %6103
        %6106 = vset.pattern.permute.xlu0 0
        %6107 = vperm.xlu0 %6106, %v6034
        %v6108 = vpop.permute.xlu0 %6107
        %6110 = vset.pattern.permute.xlu0 0
        %6111 = vperm.xlu0 %6110, %v6035
        %v6112 = vpop.permute.xlu0 %6111
        %6114 = vset.pattern.permute.xlu0 0
        %6115 = vperm.xlu0 %6114, %v6036
        %v6116 = vpop.permute.xlu0 %6115
        %6118 = vset.pattern.permute.xlu0 0
        %6119 = vperm.xlu0 %6118, %v6037
        %v6120 = vpop.permute.xlu0 %6119
        %6122 = vset.pattern.permute.xlu0 0
        %6123 = vperm.xlu0 %6122, %v6038
        %v6124 = vpop.permute.xlu0 %6123
        %6126 = vset.pattern.permute.xlu0 0
        %6127 = vperm.xlu0 %6126, %v6039
        %v6128 = vpop.permute.xlu0 %6127
        %6130 = vset.pattern.permute.xlu0 0
        %6131 = vperm.xlu0 %6130, %v6040
        %v6132 = vpop.permute.xlu0 %6131
        %6134 = vset.pattern.permute.xlu0 0
        %6135 = vperm.xlu0 %6134, %v6041
        %v6136 = vpop.permute.xlu0 %6135
        %6138 = vset.pattern.permute.xlu0 0
        %6139 = vperm.xlu0 %6138, %v6042
        %v6140 = vpop.permute.xlu0 %6139
        %6142 = vset.pattern.permute.xlu0 0
        %6143 = vperm.xlu0 %6142, %v6043
        %v6144 = vpop.permute.xlu0 %6143
        %6146 = vset.pattern.permute.xlu0 0
        %6147 = vperm.xlu0 %6146, %v6044
        %v6148 = vpop.permute.xlu0 %6147
        %6150 = vset.pattern.permute.xlu0 0
        %6151 = vperm.xlu0 %6150, %v6045
        %v6152 = vpop.permute.xlu0 %6151
        %6154 = vset.pattern.permute.xlu0 0
        %6155 = vperm.xlu0 %6154, %v6046
        %v6156 = vpop.permute.xlu0 %6155
        %6158 = vset.pattern.permute.xlu0 0
        %6159 = vperm.xlu0 %6158, %v6047
        %v6160 = vpop.permute.xlu0 %6159
        %6162 = vset.pattern.permute.xlu0 0
        %6163 = vperm.xlu0 %6162, %v6048
        %v6164 = vpop.permute.xlu0 %6163
        %6166 = vset.pattern.permute.xlu0 0
        %6167 = vperm.xlu0 %6166, %v6049
        %v6168 = vpop.permute.xlu0 %6167
        %6170 = vset.pattern.permute.xlu0 0
        %6171 = vperm.xlu0 %6170, %v6050
        %v6172 = vpop.permute.xlu0 %6171
        %6174 = vset.pattern.permute.xlu0 0
        %6175 = vperm.xlu0 %6174, %v6051
        %v6176 = vpop.permute.xlu0 %6175
        %6178 = vset.pattern.permute.xlu0 0
        %6179 = vperm.xlu0 %6178, %v6052
        %v6180 = vpop.permute.xlu0 %6179
        %v6181 = vrot.slane %v6056, 7
        %v6182 = vrot.slane %v6060, 7
        %v6183 = vsel %vm5160, %v6181, %v6182
        %v6184 = vrot.slane %v6064, 7
        %v6185 = vrot.slane %v6068, 7
        %v6186 = vsel %vm5160, %v6184, %v6185
        %v6187 = vrot.slane %v6072, 7
        %v6188 = vrot.slane %v6076, 7
        %v6189 = vsel %vm5160, %v6187, %v6188
        %v6190 = vrot.slane %v6080, 7
        %v6191 = vrot.slane %v6084, 7
        %v6192 = vsel %vm5160, %v6190, %v6191
        %v6193 = vrot.slane %v6088, 7
        %v6194 = vrot.slane %v6092, 7
        %v6195 = vsel %vm5160, %v6193, %v6194
        %v6196 = vrot.slane %v6096, 7
        %v6197 = vrot.slane %v6100, 7
        %v6198 = vsel %vm5160, %v6196, %v6197
        %v6199 = vrot.slane %v6104, 7
        %v6200 = vrot.slane %v6108, 7
        %v6201 = vsel %vm5160, %v6199, %v6200
        %v6202 = vrot.slane %v6112, 7
        %v6203 = vrot.slane %v6116, 7
        %v6204 = vsel %vm5160, %v6202, %v6203
        %v6205 = vrot.slane %v6120, 7
        %v6206 = vrot.slane %v6124, 7
        %v6207 = vsel %vm5160, %v6205, %v6206
        %v6208 = vrot.slane %v6128, 7
        %v6209 = vrot.slane %v6132, 7
        %v6210 = vsel %vm5160, %v6208, %v6209
        %v6211 = vrot.slane %v6136, 7
        %v6212 = vrot.slane %v6140, 7
        %v6213 = vsel %vm5160, %v6211, %v6212
        %v6214 = vrot.slane %v6144, 7
        %v6215 = vrot.slane %v6148, 7
        %v6216 = vsel %vm5160, %v6214, %v6215
        %v6217 = vrot.slane %v6152, 7
        %v6218 = vrot.slane %v6156, 7
        %v6219 = vsel %vm5160, %v6217, %v6218
        %v6220 = vrot.slane %v6160, 7
        %v6221 = vrot.slane %v6164, 7
        %v6222 = vsel %vm5160, %v6220, %v6221
        %v6223 = vrot.slane %v6168, 7
        %v6224 = vrot.slane %v6172, 7
        %v6225 = vsel %vm5160, %v6223, %v6224
        %v6226 = vrot.slane %v6176, 7
        %v6227 = vrot.slane %v6180, 7
        %v6228 = vsel %vm5160, %v6226, %v6227
        %v6277 = vmul.f32 %v5257, %v6181
        %v6278 = vmul.f32 %v5258, %v6183
        %v6279 = vmul.f32 %v5259, %v6182
        %v6280 = vmul.f32 %v5260, %v6184
        %v6281 = vmul.f32 %v5261, %v6186
        %v6282 = vmul.f32 %v5262, %v6185
        %v6283 = vmul.f32 %v5263, %v6187
        %v6284 = vmul.f32 %v5264, %v6189
        %v6285 = vmul.f32 %v5265, %v6188
        %v6286 = vmul.f32 %v5266, %v6190
        %v6287 = vmul.f32 %v5267, %v6192
        %v6288 = vmul.f32 %v5268, %v6191
        %v6289 = vmul.f32 %v5269, %v6193
        %v6290 = vmul.f32 %v5270, %v6195
        %v6291 = vmul.f32 %v5271, %v6194
        %v6292 = vmul.f32 %v5272, %v6196
        %v6293 = vmul.f32 %v5273, %v6198
        %v6294 = vmul.f32 %v5274, %v6197
        %v6295 = vmul.f32 %v5275, %v6199
        %v6296 = vmul.f32 %v5276, %v6201
        %v6297 = vmul.f32 %v5277, %v6200
        %v6298 = vmul.f32 %v5278, %v6202
        %v6299 = vmul.f32 %v5279, %v6204
        %v6300 = vmul.f32 %v5280, %v6203
        %v6301 = vmul.f32 %v5281, %v6205
        %v6302 = vmul.f32 %v5282, %v6207
        %v6303 = vmul.f32 %v5283, %v6206
        %v6304 = vmul.f32 %v5284, %v6208
        %v6305 = vmul.f32 %v5285, %v6210
        %v6306 = vmul.f32 %v5286, %v6209
        %v6307 = vmul.f32 %v5287, %v6211
        %v6308 = vmul.f32 %v5288, %v6213
        %v6309 = vmul.f32 %v5289, %v6212
        %v6310 = vmul.f32 %v5290, %v6214
        %v6311 = vmul.f32 %v5291, %v6216
        %v6312 = vmul.f32 %v5292, %v6215
        %v6313 = vmul.f32 %v5293, %v6217
        %v6314 = vmul.f32 %v5294, %v6219
        %v6315 = vmul.f32 %v5295, %v6218
        %v6316 = vmul.f32 %v5296, %v6220
        %v6317 = vmul.f32 %v5297, %v6222
        %v6318 = vmul.f32 %v5298, %v6221
        %v6319 = vmul.f32 %v5299, %v6223
        %v6320 = vmul.f32 %v5300, %v6225
        %v6321 = vmul.f32 %v5301, %v6224
        %v6322 = vmul.f32 %v5302, %v6226
        %v6323 = vmul.f32 %v5303, %v6228
        %v6324 = vmul.f32 %v5304, %v6227
        %vm6325 = vcmask 523265
        %6326 = vst.msk [vmem:[%s259 - $0x1] sm:$0xfe] %vm6325, %v6277
        %6327 = vst.msk [vmem:[%s259 + $0x7] sm:$0xff] %vm607, %v6278
        %vm6328 = vcmask 516096
        %6329 = vst.msk [vmem:[%s259 + $0xf] sm:$0x1] %vm6328, %v6279
        %6330 = vst.msk [vmem:[%s259 + $0xf] sm:$0xfe] %vm6325, %v6280
        %6331 = vst.msk [vmem:[%s259 + $0x17] sm:$0xff] %vm607, %v6281
        %6332 = vst.msk [vmem:[%s259 + $0x1f] sm:$0x1] %vm6328, %v6282
        %6333 = vst.msk [vmem:[%s259 + $0x1f] sm:$0xfe] %vm6325, %v6283
        %6334 = vst.msk [vmem:[%s259 + $0x27] sm:$0xff] %vm607, %v6284
        %6335 = vst.msk [vmem:[%s259 + $0x2f] sm:$0x1] %vm6328, %v6285
        %6336 = vst.msk [vmem:[%s259 + $0x2f] sm:$0xfe] %vm6325, %v6286
        %6337 = vst.msk [vmem:[%s259 + $0x37] sm:$0xff] %vm607, %v6287
        %6338 = vst.msk [vmem:[%s259 + $0x3f] sm:$0x1] %vm6328, %v6288
        %6339 = vst.msk [vmem:[%s259 + $0x3f] sm:$0xfe] %vm6325, %v6289
        %6340 = vst.msk [vmem:[%s259 + $0x47] sm:$0xff] %vm607, %v6290
        %6341 = vst.msk [vmem:[%s259 + $0x4f] sm:$0x1] %vm6328, %v6291
        %6342 = vst.msk [vmem:[%s259 + $0x4f] sm:$0xfe] %vm6325, %v6292
        %6343 = vst.msk [vmem:[%s259 + $0x57] sm:$0xff] %vm607, %v6293
        %6344 = vst.msk [vmem:[%s259 + $0x5f] sm:$0x1] %vm6328, %v6294
        %6345 = vst.msk [vmem:[%s259 + $0x5f] sm:$0xfe] %vm6325, %v6295
        %6346 = vst.msk [vmem:[%s259 + $0x67] sm:$0xff] %vm607, %v6296
        %6347 = vst.msk [vmem:[%s259 + $0x6f] sm:$0x1] %vm6328, %v6297
        %6348 = vst.msk [vmem:[%s259 + $0x6f] sm:$0xfe] %vm6325, %v6298
        %6349 = vst.msk [vmem:[%s259 + $0x77] sm:$0xff] %vm607, %v6299
        %6350 = vst.msk [vmem:[%s259 + $0x7f] sm:$0x1] %vm6328, %v6300
        %6351 = vst.msk [vmem:[%s259 + $0x7f] sm:$0xfe] %vm6325, %v6301
        %6352 = vst.msk [vmem:[%s259 + $0x87] sm:$0xff] %vm607, %v6302
        %6353 = vst.msk [vmem:[%s259 + $0x8f] sm:$0x1] %vm6328, %v6303
        %6354 = vst.msk [vmem:[%s259 + $0x8f] sm:$0xfe] %vm6325, %v6304
        %6355 = vst.msk [vmem:[%s259 + $0x97] sm:$0xff] %vm607, %v6305
        %6356 = vst.msk [vmem:[%s259 + $0x9f] sm:$0x1] %vm6328, %v6306
        %6357 = vst.msk [vmem:[%s259 + $0x9f] sm:$0xfe] %vm6325, %v6307
        %6358 = vst.msk [vmem:[%s259 + $0xa7] sm:$0xff] %vm607, %v6308
        %6359 = vst.msk [vmem:[%s259 + $0xaf] sm:$0x1] %vm6328, %v6309
        %6360 = vst.msk [vmem:[%s259 + $0xaf] sm:$0xfe] %vm6325, %v6310
        %6361 = vst.msk [vmem:[%s259 + $0xb7] sm:$0xff] %vm607, %v6311
        %6362 = vst.msk [vmem:[%s259 + $0xbf] sm:$0x1] %vm6328, %v6312
        %6363 = vst.msk [vmem:[%s259 + $0xbf] sm:$0xfe] %vm6325, %v6313
        %6364 = vst.msk [vmem:[%s259 + $0xc7] sm:$0xff] %vm607, %v6314
        %6365 = vst.msk [vmem:[%s259 + $0xcf] sm:$0x1] %vm6328, %v6315
        %6366 = vst.msk [vmem:[%s259 + $0xcf] sm:$0xfe] %vm6325, %v6316
        %6367 = vst.msk [vmem:[%s259 + $0xd7] sm:$0xff] %vm607, %v6317
        %6368 = vst.msk [vmem:[%s259 + $0xdf] sm:$0x1] %vm6328, %v6318
        %6369 = vst.msk [vmem:[%s259 + $0xdf] sm:$0xfe] %vm6325, %v6319
        %6370 = vst.msk [vmem:[%s259 + $0xe7] sm:$0xff] %vm607, %v6320
        %6371 = vst.msk [vmem:[%s259 + $0xef] sm:$0x1] %vm6328, %v6321
        %6372 = vst.msk [vmem:[%s259 + $0xef] sm:$0xfe] %vm6325, %v6322
        %6373 = vst.msk [vmem:[%s259 + $0xf7] sm:$0xff] %vm607, %v6323
        %6374 = vst.msk [vmem:[%s259 + $0xff] sm:$0x1] %vm6328, %v6324
        %s6375 = sand.u32 %s164, 1
        %s6376 = scalar_lea.sflag [#allocation4], %s6375
        %s6377 = sand.u32 %s164, 1
        %s6378 = smul.addr %s6377, 256
        %s6379 = scalar_lea.vmem [#allocation3], %s6378
        // Predicated region
        $region45: #{automata_forward.1} parent=43 // pred_check
          %p6380 = pneg %p174
        $region46: #{automata_forward.1} parent=43 // pred_check_branch
          %6382 = sbr.rel (%p6380) target = $region48
        $region47: #{automata_forward.1} parent=43 // pred_region
          %s6384 = ssub.s32 4096, 4096
          %6385 = vsyncadd %s6376, %s6384
          %s6386 = smul.addr %s20, 32
          %s6387 = smul.addr %s6386, 128
          %s6388 = scalar_lea.hbm %s6, %s6387
          %s6389 = sshll.u32 %s6379, 4
          %s6390 = int_to_ptr.vmem [resolvable:$true] %s6389
          %6395 = dma.vmem_to_hbm [thread:$0]  %s6390, 4096, %s6388, %s6376, 128, 128, 8
        $region48: #{automata_forward.1} parent=43 // pred_fallthru
          _
      $region44: #{automata_forward.1} parent=5 // pred_fallthru
        _
      %p6396 = scmp.le.s32.totalorder 2, %s15
      // Predicated region
      $region49: #{automata_forward.1} parent=5 // pred_check
        %p6397 = pneg %p6396
      $region50: #{automata_forward.1} parent=5 // pred_check_branch
        %6399 = sbr.rel (%p6397) target = $region52
      $region51: #{automata_forward.1} parent=5 // pred_region
        %s6400 = ssub.s32 %s15, 2
        // Predicated region
        $region53: #{automata_forward.1} parent=51 // pred_check
          %p6401 = pneg %p180
        $region54: #{automata_forward.1} parent=51 // pred_check_branch
          %6403 = sbr.rel (%p6401) target = $region56
        $region55: #{automata_forward.1} parent=51 // pred_region
          %s6404 = sand.u32 %s165, 1
          %s6405 = scalar_lea.sflag [#allocation4], %s6404
          %s6406 = sand.u32 %s165, 1
          %s6407 = smul.addr %s6406, 256
          %s6408 = scalar_lea.vmem [#allocation3], %s6407
          %6409 = dma.done %s6405, 4096
        $region56: #{automata_forward.1} parent=51 // pred_fallthru
          _
      $region52: #{automata_forward.1} parent=5 // pred_fallthru
        _
    $region6: #{automata_forward.1} parent=1 // loop_footer
      %s19 = sadd.s32 1, %s15
    $region7: #{automata_forward.1} parent=1 // loop_footer_branch
      %14 = sbr.rel target = $region3
    $region8: #{automata_forward.1} parent=1 // loop_exit
      _
    %6410 = vsyncpa [#allocation4], 1
    %s6411 = scalar_lea.sflag [#allocation4], 1
    %6412 = vsyncpa %s6411, 1

</llo_original>
